<compile_context>
chip_gen: v5e
topology: v5e:2x2
jax: 0.10.0
libtpu: 0.0.40
codegen_flags: <defaults>
</compile_context>

<pallas_src>
import functools

import jax
import jax.numpy as jnp
import numpy as np
from jax import lax
from jax.experimental import pallas as pl
from jax.experimental.pallas import tpu as pltpu


# A @ B^T contraction (both operands spatial-major); same dimension numbers the
# Pallas TPU flash-attention kernel uses, so no explicit transposes are needed.
_NT_DIMS = (((1,), (1,)), ((), ()))


# ----------------------------------------------------------------------------
# Fused kernel: conv1+bn1+relu -> MHSA(+bn2+relu) -> conv3+bn3 + shortcut -> relu
# One grid step per batch chunk (B/num_steps samples); everything stays in VMEM.
# ----------------------------------------------------------------------------
def _fused_block_kernel(x_ref, w1t_ref, wqkvt_ref, pos_ref, w3t_ref, wst_ref,
                        bias_ref, o_ref, *, heads, bc, n):
    f32 = jnp.float32
    bf16 = jnp.bfloat16
    N = n
    C = w1t_ref.shape[1]
    d = C // heads
    Cout = o_ref.shape[1]

    xb = x_ref[...]                                   # (Mr, Cin) bf16, Mr = bc*N
    b1 = bias_ref[0:1, :C]                            # (1, C)    f32
    bqkv = bias_ref[1:2, :3 * C]                      # (1, 3C)   per-head order
    b2 = bias_ref[2:3, :C]                            # (1, C)
    b3sh = bias_ref[3:4, :Cout]                       # (1, Cout) conv3-bn + shortcut-bn bias

    # conv1 (1x1) + folded bn1 + ReLU: one (Mr, Cin)@(Cin, C) matmul for all samples.
    y1t = jnp.maximum(
        jnp.dot(xb, w1t_ref[...], preferred_element_type=f32) + b1, 0.0)      # (Mr, C)
    y1t_b = y1t.astype(bf16)                          # cast once (hoisted)

    # Fused q/k/v projection, per-head contiguous column groups [q_h|k_h|v_h*s2_h].
    qkvt = jnp.dot(y1t_b, wqkvt_ref[...], preferred_element_type=f32) + bqkv   # (Mr, 3C)
    qkvt_b = qkvt.astype(bf16)                        # cast once, hoisted out of head loop

    # Per-(sample, head) attention; conv3 input assembled as one (Mr, C) slab.
    batch_rows = []
    for b in range(bc):                               # static unroll (bc is tiny)
        sb = qkvt_b[b * N:(b + 1) * N, :]             # (N, 3C) aligned sublane slice
        head_cols = []
        for h in range(heads):                        # static unroll
            blk = sb[:, 3 * d * h:3 * d * (h + 1)]    # (N, 3d) one contiguous block per head
            qt = blk[:, :d]                           # (N, d)
            kt = blk[:, d:2 * d]                      # (N, d)
            vt = blk[:, 2 * d:]                       # (N, d)  (bn2 scale pre-folded)
            pos_t = pos_ref[h]                        # (N, d)  bf16 constant

            # energy[i,j] = q_i.k_j + pos_i.q_j  -- both terms are A @ B^T MXU matmuls.
            energy = (lax.dot_general(qt, kt, _NT_DIMS, preferred_element_type=f32)
                      + lax.dot_general(pos_t, qt, _NT_DIMS,
                                        preferred_element_type=f32))          # (N, N)

            m = jnp.max(energy, axis=-1, keepdims=True)
            e = jnp.exp(energy - m)
            att = e * pl.reciprocal(jnp.sum(e, axis=-1, keepdims=True), approx=True)

            head_cols.append(jnp.dot(att.astype(bf16), vt,
                                     preferred_element_type=f32))             # (N, d)
        batch_rows.append(jnp.concatenate(head_cols, axis=1))                 # (N, C)

    o2 = jnp.concatenate(batch_rows, axis=0) if bc > 1 else batch_rows[0]      # (Mr, C)
    o2 = jnp.maximum(o2 + b2, 0.0).astype(bf16)       # folded bn2 bias + ReLU, one cast

    # Fused conv3 (bn3 scale folded), K = C, one matmul for all samples.
    main = jnp.dot(o2, w3t_ref[...], preferred_element_type=f32)               # (Mr, Cout)
    # Shortcut: 1x1 conv + bn, fully folded.
    sc = jnp.dot(xb, wst_ref[...], preferred_element_type=f32)                 # (Mr, Cout)
    o_ref[...] = jnp.maximum(main + sc + b3sh, 0.0).astype(o_ref.dtype)


# ----------------------------------------------------------------------------
# Parameter preparation: fold BN scales into conv/projection weights, arrange
# q/k/v columns per head, pack all small biases into one (4, 128) array.
# ----------------------------------------------------------------------------
def prepare_params(p, heads):
    bf16 = jnp.bfloat16
    C, _ = p["w1"].shape
    d = C // heads
    Cout = p["w3"].shape[0]
    s1, s2, s3, ss = p["s1"], p["s2"], p["s3"], p["ss"]     # (c, 1) each

    w1t = (p["w1"] * s1).T                                   # (Cin, C)  bn1 folded

    # Per-head contiguous column groups [q_h | k_h | v_h * s2_h].
    wvs = p["wv"] * s2                                       # fold bn2 scale (exact)
    bvs = p["bv"] * s2[:, 0]
    cols, bcols = [], []
    for h in range(heads):
        sl = slice(h * d, (h + 1) * d)
        cols += [p["wq"][sl].T, p["wk"][sl].T, wvs[sl].T]
        bcols += [p["bq"][sl], p["bk"][sl], bvs[sl]]
    wqkvt = jnp.concatenate(cols, axis=1)                    # (C, 3C)
    bqkv = jnp.concatenate(bcols, axis=0)                    # (3C,)

    w3t = (p["w3"] * s3).T                                   # (C, Cout) bn3 folded
    wst = (p["ws"] * ss).T                                   # (Cin, Cout) shortcut-bn folded
    b3sh = p["b3"][:, 0] + p["bsc"][:, 0] * ss[:, 0] + p["bs"][:, 0]   # (Cout,)

    pw = ((max(Cout, 3 * C, 128) + 127) // 128) * 128
    pad = lambda v: jnp.pad(v, (0, pw - v.shape[0]))
    biases = jnp.stack([pad(p["b1"][:, 0]), pad(bqkv),
                        pad(p["b2"][:, 0]), pad(b3sh)], axis=0).astype(jnp.float32)

    return dict(
        w1t=w1t.astype(bf16),
        wqkvt=wqkvt.astype(bf16),
        pos_t=jnp.transpose(p["pos"], (0, 2, 1)).astype(bf16),   # (heads, N, d)
        w3t=w3t.astype(bf16),
        wst=wst.astype(bf16),
        biases=biases,                                           # (4, pw)
    )


# ----------------------------------------------------------------------------
# Full forward
# ----------------------------------------------------------------------------
def bottleneck_transformer(x, p, heads, num_steps=None):
    B, Cin, W, H = x.shape
    N = W * H
    C = p["w1"].shape[0]
    Cout = p["w3"].shape[0]
    if num_steps is None:
        # Two parallel grid steps keep both v7x TensorCores busy; on v5e/v6e the
        # extra step only re-reads resident weight blocks (negligible).
        num_steps = 2 if B % 2 == 0 else 1
    assert B % num_steps == 0
    bc = B // num_steps
    mr = bc * N

    kp = prepare_params(p, heads)
    x2d = jnp.transpose(x.reshape(B, Cin, N), (0, 2, 1)).reshape(B * N, Cin)
    x2d = x2d.astype(jnp.bfloat16)

    kernel = functools.partial(_fused_block_kernel, heads=heads, bc=bc, n=N)
    const2 = lambda i: (0, 0)

    out = pl.pallas_call(
        kernel,
        out_shape=jax.ShapeDtypeStruct((B * N, Cout), jnp.bfloat16),
        grid=(num_steps,),
        in_specs=[
            pl.BlockSpec((mr, Cin), lambda i: (i, 0)),
            pl.BlockSpec(kp["w1t"].shape, const2),
            pl.BlockSpec(kp["wqkvt"].shape, const2),
            pl.BlockSpec(kp["pos_t"].shape, lambda i: (0, 0, 0)),
            pl.BlockSpec(kp["w3t"].shape, const2),
            pl.BlockSpec(kp["wst"].shape, const2),
            pl.BlockSpec(kp["biases"].shape, const2),
        ],
        out_specs=pl.BlockSpec((mr, Cout), lambda i: (i, 0)),
        compiler_params=pltpu.CompilerParams(dimension_semantics=("parallel",)),
    )(x2d, kp["w1t"], kp["wqkvt"], kp["pos_t"], kp["w3t"], kp["wst"], kp["biases"])

    # (B*N, 4C) -> (B, 4C, W, H).  Kept bf16; downstream block consumes it.
    return jnp.transpose(out.reshape(B, W, H, Cout), (0, 3, 1, 2))


# ----------------------------------------------------------------------------
# Deterministic synthetic params (eval-mode BN as scale/bias) + f32 reference
# ----------------------------------------------------------------------------
def init_params(key, in_planes, planes, heads, W, H):
    C = planes
    d = C // heads
    N = W * H
    Cout = 4 * C
    ks = iter(jax.random.split(key, 64))

    def nrm(shape, scale):
        return scale * jax.random.normal(next(ks), shape, jnp.float32)

    def bn(c):
        gamma = 1.0 + 0.1 * jax.random.normal(next(ks), (c,), jnp.float32)
        beta = 0.1 * jax.random.normal(next(ks), (c,), jnp.float32)
        mean = 0.1 * jax.random.normal(next(ks), (c,), jnp.float32)
        var = 1.0 + 0.1 * jnp.abs(jax.random.normal(next(ks), (c,), jnp.float32))
        scale = gamma / jnp.sqrt(var + 1e-5)
        bias = beta - mean * scale
        return scale.reshape(-1, 1), bias.reshape(-1, 1)

    p = {}
    p["w1"] = nrm((C, in_planes), 0.25)
    p["s1"], p["b1"] = bn(C)
    p["wq"] = nrm((C, C), 0.12); p["bq"] = nrm((C,), 0.05)
    p["wk"] = nrm((C, C), 0.12); p["bk"] = nrm((C,), 0.05)
    p["wv"] = nrm((C, C), 0.12); p["bv"] = nrm((C,), 0.05)
    rel_h = nrm((1, heads, d, 1, H), 0.1)
    rel_w = nrm((1, heads, d, W, 1), 0.1)
    p["pos"] = (rel_h + rel_w).reshape(heads, d, N)
    p["s2"], p["b2"] = bn(C)
    p["w3"] = nrm((Cout, C), 0.15)
    p["s3"], p["b3"] = bn(Cout)
    p["ws"] = nrm((Cout, in_planes), 0.25)
    p["bsc"] = nrm((Cout,), 0.05).reshape(-1, 1)
    p["ss"], p["bs"] = bn(Cout)
    return p


def reference(x, p, heads):
    B, Cin, W, H = x.shape
    N = W * H
    C = p["w1"].shape[0]
    d = C // heads
    xf = x.reshape(B, Cin, N)
    y = jnp.einsum("oc,bcn->bon", p["w1"], xf)
    y = jnp.maximum(y * p["s1"][None] + p["b1"][None], 0.0)
    q = (jnp.einsum("oc,bcn->bon", p["wq"], y) + p["bq"][None, :, None]).reshape(B, heads, d, N)
    k = (jnp.einsum("oc,bcn->bon", p["wk"], y) + p["bk"][None, :, None]).reshape(B, heads, d, N)
    v = (jnp.einsum("oc,bcn->bon", p["wv"], y) + p["bv"][None, :, None]).reshape(B, heads, d, N)
    cc = jnp.einsum("bhdi,bhdj->bhij", q, k)
    cp = jnp.einsum("hdi,bhdj->bhij", p["pos"], q)
    att = jax.nn.softmax(cc + cp, axis=-1)
    o = jnp.einsum("bhdj,bhij->bhdi", v, att).reshape(B, C, N)
    o = jnp.maximum(o * p["s2"][None] + p["b2"][None], 0.0)
    main = jnp.einsum("oc,bcn->bon", p["w3"], o) * p["s3"][None] + p["b3"][None]
    sc = jnp.einsum("oc,bcn->bon", p["ws"], xf) + p["bsc"][None]
    sc = sc * p["ss"][None] + p["bs"][None]
    return jnp.maximum(main + sc, 0.0).reshape(B, 4 * C, W, H)


if __name__ == "__main__":
    B, in_planes, planes, heads = 4, 16, 32, 4
    W = H = 8  # resolution (8, 8) -> N = 64

    key = jax.random.PRNGKey(0)
    kx, kparam = jax.random.split(key)
    x = jax.random.normal(kx, (B, in_planes, W, H), jnp.float32)
    params = init_params(kparam, in_planes, planes, heads, W, H)

    out = jax.block_until_ready(bottleneck_transformer(x, params, heads))
    ref = reference(x, params, heads)

    # bf16 MXU operands + bf16 output vs pure-f32 reference -> 4e-2 tolerance.
    np.testing.assert_allclose(np.asarray(out, np.float32), np.asarray(ref),
                               rtol=4e-2, atol=4e-2)
    assert out.shape == (B, 4 * planes, W, H)
    print("KERNEL_OK")
</pallas_src>

<mosaic_0001>
module attributes {stable_mosaic.version = 11 : i64} {
  func.func @_fused_block_kernel(%arg0: i32, %arg1: memref<128x16xbf16, #tpu.memory_space<vmem>>, %arg2: memref<16x32xbf16, #tpu.memory_space<vmem>>, %arg3: memref<32x96xbf16, #tpu.memory_space<vmem>>, %arg4: memref<4x64x8xbf16, #tpu.memory_space<vmem>>, %arg5: memref<32x128xbf16, #tpu.memory_space<vmem>>, %arg6: memref<16x128xbf16, #tpu.memory_space<vmem>>, %arg7: memref<4x128xf32, #tpu.memory_space<vmem>>, %arg8: memref<128x128xbf16, #tpu.memory_space<vmem>>) attributes {dimension_semantics = [#tpu.dimension_semantics<parallel>], iteration_bounds = array<i64: 2>, scalar_prefetch = 0 : i64, scratch_operands = 0 : i64, tpu.core_type = #tpu.core_type<tc>, window_params = [{transform_indices = @transform_0, window_bounds = array<i64: 128, 16>}, {pipeline_mode = #tpu.pipeline_mode<synchronous>, transform_indices = @transform_1, window_bounds = array<i64: 16, 32>}, {pipeline_mode = #tpu.pipeline_mode<synchronous>, transform_indices = @transform_2, window_bounds = array<i64: 32, 96>}, {pipeline_mode = #tpu.pipeline_mode<synchronous>, transform_indices = @transform_3, window_bounds = array<i64: 4, 64, 8>}, {pipeline_mode = #tpu.pipeline_mode<synchronous>, transform_indices = @transform_4, window_bounds = array<i64: 32, 128>}, {pipeline_mode = #tpu.pipeline_mode<synchronous>, transform_indices = @transform_5, window_bounds = array<i64: 16, 128>}, {pipeline_mode = #tpu.pipeline_mode<synchronous>, transform_indices = @transform_6, window_bounds = array<i64: 4, 128>}, {transform_indices = @transform_7, window_bounds = array<i64: 128, 128>}]} {
    %c0 = arith.constant 0 : index
    %c0_0 = arith.constant 0 : index
    %0 = vector.load %arg1[%c0, %c0_0] : memref<128x16xbf16, #tpu.memory_space<vmem>>, vector<128x16xbf16>
    %c0_1 = arith.constant 0 : index
    %c0_2 = arith.constant 0 : index
    %1 = vector.load %arg7[%c0_1, %c0_2] : memref<4x128xf32, #tpu.memory_space<vmem>>, vector<1x32xf32>
    %c1 = arith.constant 1 : index
    %c0_3 = arith.constant 0 : index
    %2 = vector.load %arg7[%c1, %c0_3] : memref<4x128xf32, #tpu.memory_space<vmem>>, vector<1x96xf32>
    %c2 = arith.constant 2 : index
    %c0_4 = arith.constant 0 : index
    %3 = vector.load %arg7[%c2, %c0_4] : memref<4x128xf32, #tpu.memory_space<vmem>>, vector<1x32xf32>
    %c3 = arith.constant 3 : index
    %c0_5 = arith.constant 0 : index
    %4 = vector.load %arg7[%c3, %c0_5] : memref<4x128xf32, #tpu.memory_space<vmem>>, vector<1x128xf32>
    %c0_6 = arith.constant 0 : index
    %c0_7 = arith.constant 0 : index
    %5 = vector.load %arg2[%c0_6, %c0_7] : memref<16x32xbf16, #tpu.memory_space<vmem>>, vector<16x32xbf16>
    %cst = arith.constant dense<0.000000e+00> : vector<128x32xf32>
    %6 = tpu.matmul %0, %5, %cst {dimension_numbers = #tpu.dot_dimension_numbers<[1], [0], [0], [1], [0, 0, 1, 1], [], []>} : vector<128x16xbf16>, vector<16x32xbf16>, vector<128x32xf32> -> vector<128x32xf32>
    %7 = vector.broadcast %1 : vector<1x32xf32> to vector<128x32xf32>
    %8 = arith.addf %6, %7 : vector<128x32xf32>
    %cst_8 = arith.constant 0.000000e+00 : f32
    %9 = vector.broadcast %cst_8 : f32 to vector<128x32xf32>
    %10 = arith.maximumf %8, %9 : vector<128x32xf32>
    %11 = arith.truncf %10 : vector<128x32xf32> to vector<128x32xbf16>
    %c0_9 = arith.constant 0 : index
    %c0_10 = arith.constant 0 : index
    %12 = vector.load %arg3[%c0_9, %c0_10] : memref<32x96xbf16, #tpu.memory_space<vmem>>, vector<32x96xbf16>
    %cst_11 = arith.constant dense<0.000000e+00> : vector<128x96xf32>
    %13 = tpu.matmul %11, %12, %cst_11 {dimension_numbers = #tpu.dot_dimension_numbers<[1], [0], [0], [1], [0, 0, 1, 1], [], []>} : vector<128x32xbf16>, vector<32x96xbf16>, vector<128x96xf32> -> vector<128x96xf32>
    %14 = vector.broadcast %2 : vector<1x96xf32> to vector<128x96xf32>
    %15 = arith.addf %13, %14 : vector<128x96xf32>
    %16 = arith.truncf %15 : vector<128x96xf32> to vector<128x96xbf16>
    %17 = vector.extract_strided_slice %16 {offsets = [0, 0], sizes = [64, 96], strides = [1, 1]} : vector<128x96xbf16> to vector<64x96xbf16>
    %18 = vector.extract_strided_slice %17 {offsets = [0, 0], sizes = [64, 24], strides = [1, 1]} : vector<64x96xbf16> to vector<64x24xbf16>
    %19 = vector.extract_strided_slice %18 {offsets = [0, 0], sizes = [64, 8], strides = [1, 1]} : vector<64x24xbf16> to vector<64x8xbf16>
    %20 = vector.extract_strided_slice %18 {offsets = [0, 8], sizes = [64, 8], strides = [1, 1]} : vector<64x24xbf16> to vector<64x8xbf16>
    %21 = vector.extract_strided_slice %18 {offsets = [0, 16], sizes = [64, 8], strides = [1, 1]} : vector<64x24xbf16> to vector<64x8xbf16>
    %c0_12 = arith.constant 0 : index
    %c0_13 = arith.constant 0 : index
    %c0_14 = arith.constant 0 : index
    %22 = vector.load %arg4[%c0_12, %c0_13, %c0_14] : memref<4x64x8xbf16, #tpu.memory_space<vmem>>, vector<1x64x8xbf16>
    %23 = vector.shape_cast %22 : vector<1x64x8xbf16> to vector<64x8xbf16>
    %cst_15 = arith.constant dense<0.000000e+00> : vector<64x64xf32>
    %24 = tpu.matmul %19, %20, %cst_15 {dimension_numbers = #tpu.dot_dimension_numbers<[1], [1], [0], [0], [0, 0, 1, 0], [], []>} : vector<64x8xbf16>, vector<64x8xbf16>, vector<64x64xf32> -> vector<64x64xf32>
    %cst_16 = arith.constant dense<0.000000e+00> : vector<64x64xf32>
    %25 = tpu.matmul %23, %19, %cst_16 {dimension_numbers = #tpu.dot_dimension_numbers<[1], [1], [0], [0], [0, 0, 1, 0], [], []>} : vector<64x8xbf16>, vector<64x8xbf16>, vector<64x64xf32> -> vector<64x64xf32>
    %26 = arith.addf %24, %25 : vector<64x64xf32>
    %cst_17 = arith.constant dense<0xFF800000> : vector<64xf32>
    %27 = vector.multi_reduction <maximumf>, %26, %cst_17 [1] : vector<64x64xf32> to vector<64xf32>
    %28 = vector.shape_cast %27 : vector<64xf32> to vector<64x1xf32>
    %29 = vector.broadcast %28 : vector<64x1xf32> to vector<64x64xf32>
    %30 = arith.subf %26, %29 : vector<64x64xf32>
    %31 = math.exp %30 : vector<64x64xf32>
    %cst_18 = arith.constant dense<0.000000e+00> : vector<64xf32>
    %32 = vector.multi_reduction <add>, %31, %cst_18 [1] : vector<64x64xf32> to vector<64xf32>
    %33 = vector.shape_cast %32 : vector<64xf32> to vector<64x1xf32>
    %34 = tpu.reciprocal %33 {approx = true} : vector<64x1xf32> -> vector<64x1xf32>
    %35 = vector.broadcast %34 : vector<64x1xf32> to vector<64x64xf32>
    %36 = arith.mulf %31, %35 : vector<64x64xf32>
    %37 = arith.truncf %36 : vector<64x64xf32> to vector<64x64xbf16>
    %cst_19 = arith.constant dense<0.000000e+00> : vector<64x8xf32>
    %38 = tpu.matmul %37, %21, %cst_19 {dimension_numbers = #tpu.dot_dimension_numbers<[1], [0], [0], [1], [0, 0, 1, 1], [], []>} : vector<64x64xbf16>, vector<64x8xbf16>, vector<64x8xf32> -> vector<64x8xf32>
    %39 = vector.extract_strided_slice %17 {offsets = [0, 24], sizes = [64, 24], strides = [1, 1]} : vector<64x96xbf16> to vector<64x24xbf16>
    %40 = vector.extract_strided_slice %39 {offsets = [0, 0], sizes = [64, 8], strides = [1, 1]} : vector<64x24xbf16> to vector<64x8xbf16>
    %41 = vector.extract_strided_slice %39 {offsets = [0, 8], sizes = [64, 8], strides = [1, 1]} : vector<64x24xbf16> to vector<64x8xbf16>
    %42 = vector.extract_strided_slice %39 {offsets = [0, 16], sizes = [64, 8], strides = [1, 1]} : vector<64x24xbf16> to vector<64x8xbf16>
    %c1_20 = arith.constant 1 : index
    %c0_21 = arith.constant 0 : index
    %c0_22 = arith.constant 0 : index
    %43 = vector.load %arg4[%c1_20, %c0_21, %c0_22] : memref<4x64x8xbf16, #tpu.memory_space<vmem>>, vector<1x64x8xbf16>
    %44 = vector.shape_cast %43 : vector<1x64x8xbf16> to vector<64x8xbf16>
    %cst_23 = arith.constant dense<0.000000e+00> : vector<64x64xf32>
    %45 = tpu.matmul %40, %41, %cst_23 {dimension_numbers = #tpu.dot_dimension_numbers<[1], [1], [0], [0], [0, 0, 1, 0], [], []>} : vector<64x8xbf16>, vector<64x8xbf16>, vector<64x64xf32> -> vector<64x64xf32>
    %cst_24 = arith.constant dense<0.000000e+00> : vector<64x64xf32>
    %46 = tpu.matmul %44, %40, %cst_24 {dimension_numbers = #tpu.dot_dimension_numbers<[1], [1], [0], [0], [0, 0, 1, 0], [], []>} : vector<64x8xbf16>, vector<64x8xbf16>, vector<64x64xf32> -> vector<64x64xf32>
    %47 = arith.addf %45, %46 : vector<64x64xf32>
    %cst_25 = arith.constant dense<0xFF800000> : vector<64xf32>
    %48 = vector.multi_reduction <maximumf>, %47, %cst_25 [1] : vector<64x64xf32> to vector<64xf32>
    %49 = vector.shape_cast %48 : vector<64xf32> to vector<64x1xf32>
    %50 = vector.broadcast %49 : vector<64x1xf32> to vector<64x64xf32>
    %51 = arith.subf %47, %50 : vector<64x64xf32>
    %52 = math.exp %51 : vector<64x64xf32>
    %cst_26 = arith.constant dense<0.000000e+00> : vector<64xf32>
    %53 = vector.multi_reduction <add>, %52, %cst_26 [1] : vector<64x64xf32> to vector<64xf32>
    %54 = vector.shape_cast %53 : vector<64xf32> to vector<64x1xf32>
    %55 = tpu.reciprocal %54 {approx = true} : vector<64x1xf32> -> vector<64x1xf32>
    %56 = vector.broadcast %55 : vector<64x1xf32> to vector<64x64xf32>
    %57 = arith.mulf %52, %56 : vector<64x64xf32>
    %58 = arith.truncf %57 : vector<64x64xf32> to vector<64x64xbf16>
    %cst_27 = arith.constant dense<0.000000e+00> : vector<64x8xf32>
    %59 = tpu.matmul %58, %42, %cst_27 {dimension_numbers = #tpu.dot_dimension_numbers<[1], [0], [0], [1], [0, 0, 1, 1], [], []>} : vector<64x64xbf16>, vector<64x8xbf16>, vector<64x8xf32> -> vector<64x8xf32>
    %60 = vector.extract_strided_slice %17 {offsets = [0, 48], sizes = [64, 24], strides = [1, 1]} : vector<64x96xbf16> to vector<64x24xbf16>
    %61 = vector.extract_strided_slice %60 {offsets = [0, 0], sizes = [64, 8], strides = [1, 1]} : vector<64x24xbf16> to vector<64x8xbf16>
    %62 = vector.extract_strided_slice %60 {offsets = [0, 8], sizes = [64, 8], strides = [1, 1]} : vector<64x24xbf16> to vector<64x8xbf16>
    %63 = vector.extract_strided_slice %60 {offsets = [0, 16], sizes = [64, 8], strides = [1, 1]} : vector<64x24xbf16> to vector<64x8xbf16>
    %c2_28 = arith.constant 2 : index
    %c0_29 = arith.constant 0 : index
    %c0_30 = arith.constant 0 : index
    %64 = vector.load %arg4[%c2_28, %c0_29, %c0_30] : memref<4x64x8xbf16, #tpu.memory_space<vmem>>, vector<1x64x8xbf16>
    %65 = vector.shape_cast %64 : vector<1x64x8xbf16> to vector<64x8xbf16>
    %cst_31 = arith.constant dense<0.000000e+00> : vector<64x64xf32>
    %66 = tpu.matmul %61, %62, %cst_31 {dimension_numbers = #tpu.dot_dimension_numbers<[1], [1], [0], [0], [0, 0, 1, 0], [], []>} : vector<64x8xbf16>, vector<64x8xbf16>, vector<64x64xf32> -> vector<64x64xf32>
    %cst_32 = arith.constant dense<0.000000e+00> : vector<64x64xf32>
    %67 = tpu.matmul %65, %61, %cst_32 {dimension_numbers = #tpu.dot_dimension_numbers<[1], [1], [0], [0], [0, 0, 1, 0], [], []>} : vector<64x8xbf16>, vector<64x8xbf16>, vector<64x64xf32> -> vector<64x64xf32>
    %68 = arith.addf %66, %67 : vector<64x64xf32>
    %cst_33 = arith.constant dense<0xFF800000> : vector<64xf32>
    %69 = vector.multi_reduction <maximumf>, %68, %cst_33 [1] : vector<64x64xf32> to vector<64xf32>
    %70 = vector.shape_cast %69 : vector<64xf32> to vector<64x1xf32>
    %71 = vector.broadcast %70 : vector<64x1xf32> to vector<64x64xf32>
    %72 = arith.subf %68, %71 : vector<64x64xf32>
    %73 = math.exp %72 : vector<64x64xf32>
    %cst_34 = arith.constant dense<0.000000e+00> : vector<64xf32>
    %74 = vector.multi_reduction <add>, %73, %cst_34 [1] : vector<64x64xf32> to vector<64xf32>
    %75 = vector.shape_cast %74 : vector<64xf32> to vector<64x1xf32>
    %76 = tpu.reciprocal %75 {approx = true} : vector<64x1xf32> -> vector<64x1xf32>
    %77 = vector.broadcast %76 : vector<64x1xf32> to vector<64x64xf32>
    %78 = arith.mulf %73, %77 : vector<64x64xf32>
    %79 = arith.truncf %78 : vector<64x64xf32> to vector<64x64xbf16>
    %cst_35 = arith.constant dense<0.000000e+00> : vector<64x8xf32>
    %80 = tpu.matmul %79, %63, %cst_35 {dimension_numbers = #tpu.dot_dimension_numbers<[1], [0], [0], [1], [0, 0, 1, 1], [], []>} : vector<64x64xbf16>, vector<64x8xbf16>, vector<64x8xf32> -> vector<64x8xf32>
    %81 = vector.extract_strided_slice %17 {offsets = [0, 72], sizes = [64, 24], strides = [1, 1]} : vector<64x96xbf16> to vector<64x24xbf16>
    %82 = vector.extract_strided_slice %81 {offsets = [0, 0], sizes = [64, 8], strides = [1, 1]} : vector<64x24xbf16> to vector<64x8xbf16>
    %83 = vector.extract_strided_slice %81 {offsets = [0, 8], sizes = [64, 8], strides = [1, 1]} : vector<64x24xbf16> to vector<64x8xbf16>
    %84 = vector.extract_strided_slice %81 {offsets = [0, 16], sizes = [64, 8], strides = [1, 1]} : vector<64x24xbf16> to vector<64x8xbf16>
    %c3_36 = arith.constant 3 : index
    %c0_37 = arith.constant 0 : index
    %c0_38 = arith.constant 0 : index
    %85 = vector.load %arg4[%c3_36, %c0_37, %c0_38] : memref<4x64x8xbf16, #tpu.memory_space<vmem>>, vector<1x64x8xbf16>
    %86 = vector.shape_cast %85 : vector<1x64x8xbf16> to vector<64x8xbf16>
    %cst_39 = arith.constant dense<0.000000e+00> : vector<64x64xf32>
    %87 = tpu.matmul %82, %83, %cst_39 {dimension_numbers = #tpu.dot_dimension_numbers<[1], [1], [0], [0], [0, 0, 1, 0], [], []>} : vector<64x8xbf16>, vector<64x8xbf16>, vector<64x64xf32> -> vector<64x64xf32>
    %cst_40 = arith.constant dense<0.000000e+00> : vector<64x64xf32>
    %88 = tpu.matmul %86, %82, %cst_40 {dimension_numbers = #tpu.dot_dimension_numbers<[1], [1], [0], [0], [0, 0, 1, 0], [], []>} : vector<64x8xbf16>, vector<64x8xbf16>, vector<64x64xf32> -> vector<64x64xf32>
    %89 = arith.addf %87, %88 : vector<64x64xf32>
    %cst_41 = arith.constant dense<0xFF800000> : vector<64xf32>
    %90 = vector.multi_reduction <maximumf>, %89, %cst_41 [1] : vector<64x64xf32> to vector<64xf32>
    %91 = vector.shape_cast %90 : vector<64xf32> to vector<64x1xf32>
    %92 = vector.broadcast %91 : vector<64x1xf32> to vector<64x64xf32>
    %93 = arith.subf %89, %92 : vector<64x64xf32>
    %94 = math.exp %93 : vector<64x64xf32>
    %cst_42 = arith.constant dense<0.000000e+00> : vector<64xf32>
    %95 = vector.multi_reduction <add>, %94, %cst_42 [1] : vector<64x64xf32> to vector<64xf32>
    %96 = vector.shape_cast %95 : vector<64xf32> to vector<64x1xf32>
    %97 = tpu.reciprocal %96 {approx = true} : vector<64x1xf32> -> vector<64x1xf32>
    %98 = vector.broadcast %97 : vector<64x1xf32> to vector<64x64xf32>
    %99 = arith.mulf %94, %98 : vector<64x64xf32>
    %100 = arith.truncf %99 : vector<64x64xf32> to vector<64x64xbf16>
    %cst_43 = arith.constant dense<0.000000e+00> : vector<64x8xf32>
    %101 = tpu.matmul %100, %84, %cst_43 {dimension_numbers = #tpu.dot_dimension_numbers<[1], [0], [0], [1], [0, 0, 1, 1], [], []>} : vector<64x64xbf16>, vector<64x8xbf16>, vector<64x8xf32> -> vector<64x8xf32>
    %102 = tpu.concatenate %38, %59, %80, %101 in 1 : vector<64x8xf32>, vector<64x8xf32>, vector<64x8xf32>, vector<64x8xf32> -> vector<64x32xf32>
    %103 = vector.extract_strided_slice %16 {offsets = [64, 0], sizes = [64, 96], strides = [1, 1]} : vector<128x96xbf16> to vector<64x96xbf16>
    %104 = vector.extract_strided_slice %103 {offsets = [0, 0], sizes = [64, 24], strides = [1, 1]} : vector<64x96xbf16> to vector<64x24xbf16>
    %105 = vector.extract_strided_slice %104 {offsets = [0, 0], sizes = [64, 8], strides = [1, 1]} : vector<64x24xbf16> to vector<64x8xbf16>
    %106 = vector.extract_strided_slice %104 {offsets = [0, 8], sizes = [64, 8], strides = [1, 1]} : vector<64x24xbf16> to vector<64x8xbf16>
    %107 = vector.extract_strided_slice %104 {offsets = [0, 16], sizes = [64, 8], strides = [1, 1]} : vector<64x24xbf16> to vector<64x8xbf16>
    %c0_44 = arith.constant 0 : index
    %c0_45 = arith.constant 0 : index
    %c0_46 = arith.constant 0 : index
    %108 = vector.load %arg4[%c0_44, %c0_45, %c0_46] : memref<4x64x8xbf16, #tpu.memory_space<vmem>>, vector<1x64x8xbf16>
    %109 = vector.shape_cast %108 : vector<1x64x8xbf16> to vector<64x8xbf16>
    %cst_47 = arith.constant dense<0.000000e+00> : vector<64x64xf32>
    %110 = tpu.matmul %105, %106, %cst_47 {dimension_numbers = #tpu.dot_dimension_numbers<[1], [1], [0], [0], [0, 0, 1, 0], [], []>} : vector<64x8xbf16>, vector<64x8xbf16>, vector<64x64xf32> -> vector<64x64xf32>
    %cst_48 = arith.constant dense<0.000000e+00> : vector<64x64xf32>
    %111 = tpu.matmul %109, %105, %cst_48 {dimension_numbers = #tpu.dot_dimension_numbers<[1], [1], [0], [0], [0, 0, 1, 0], [], []>} : vector<64x8xbf16>, vector<64x8xbf16>, vector<64x64xf32> -> vector<64x64xf32>
    %112 = arith.addf %110, %111 : vector<64x64xf32>
    %cst_49 = arith.constant dense<0xFF800000> : vector<64xf32>
    %113 = vector.multi_reduction <maximumf>, %112, %cst_49 [1] : vector<64x64xf32> to vector<64xf32>
    %114 = vector.shape_cast %113 : vector<64xf32> to vector<64x1xf32>
    %115 = vector.broadcast %114 : vector<64x1xf32> to vector<64x64xf32>
    %116 = arith.subf %112, %115 : vector<64x64xf32>
    %117 = math.exp %116 : vector<64x64xf32>
    %cst_50 = arith.constant dense<0.000000e+00> : vector<64xf32>
    %118 = vector.multi_reduction <add>, %117, %cst_50 [1] : vector<64x64xf32> to vector<64xf32>
    %119 = vector.shape_cast %118 : vector<64xf32> to vector<64x1xf32>
    %120 = tpu.reciprocal %119 {approx = true} : vector<64x1xf32> -> vector<64x1xf32>
    %121 = vector.broadcast %120 : vector<64x1xf32> to vector<64x64xf32>
    %122 = arith.mulf %117, %121 : vector<64x64xf32>
    %123 = arith.truncf %122 : vector<64x64xf32> to vector<64x64xbf16>
    %cst_51 = arith.constant dense<0.000000e+00> : vector<64x8xf32>
    %124 = tpu.matmul %123, %107, %cst_51 {dimension_numbers = #tpu.dot_dimension_numbers<[1], [0], [0], [1], [0, 0, 1, 1], [], []>} : vector<64x64xbf16>, vector<64x8xbf16>, vector<64x8xf32> -> vector<64x8xf32>
    %125 = vector.extract_strided_slice %103 {offsets = [0, 24], sizes = [64, 24], strides = [1, 1]} : vector<64x96xbf16> to vector<64x24xbf16>
    %126 = vector.extract_strided_slice %125 {offsets = [0, 0], sizes = [64, 8], strides = [1, 1]} : vector<64x24xbf16> to vector<64x8xbf16>
    %127 = vector.extract_strided_slice %125 {offsets = [0, 8], sizes = [64, 8], strides = [1, 1]} : vector<64x24xbf16> to vector<64x8xbf16>
    %128 = vector.extract_strided_slice %125 {offsets = [0, 16], sizes = [64, 8], strides = [1, 1]} : vector<64x24xbf16> to vector<64x8xbf16>
    %c1_52 = arith.constant 1 : index
    %c0_53 = arith.constant 0 : index
    %c0_54 = arith.constant 0 : index
    %129 = vector.load %arg4[%c1_52, %c0_53, %c0_54] : memref<4x64x8xbf16, #tpu.memory_space<vmem>>, vector<1x64x8xbf16>
    %130 = vector.shape_cast %129 : vector<1x64x8xbf16> to vector<64x8xbf16>
    %cst_55 = arith.constant dense<0.000000e+00> : vector<64x64xf32>
    %131 = tpu.matmul %126, %127, %cst_55 {dimension_numbers = #tpu.dot_dimension_numbers<[1], [1], [0], [0], [0, 0, 1, 0], [], []>} : vector<64x8xbf16>, vector<64x8xbf16>, vector<64x64xf32> -> vector<64x64xf32>
    %cst_56 = arith.constant dense<0.000000e+00> : vector<64x64xf32>
    %132 = tpu.matmul %130, %126, %cst_56 {dimension_numbers = #tpu.dot_dimension_numbers<[1], [1], [0], [0], [0, 0, 1, 0], [], []>} : vector<64x8xbf16>, vector<64x8xbf16>, vector<64x64xf32> -> vector<64x64xf32>
    %133 = arith.addf %131, %132 : vector<64x64xf32>
    %cst_57 = arith.constant dense<0xFF800000> : vector<64xf32>
    %134 = vector.multi_reduction <maximumf>, %133, %cst_57 [1] : vector<64x64xf32> to vector<64xf32>
    %135 = vector.shape_cast %134 : vector<64xf32> to vector<64x1xf32>
    %136 = vector.broadcast %135 : vector<64x1xf32> to vector<64x64xf32>
    %137 = arith.subf %133, %136 : vector<64x64xf32>
    %138 = math.exp %137 : vector<64x64xf32>
    %cst_58 = arith.constant dense<0.000000e+00> : vector<64xf32>
    %139 = vector.multi_reduction <add>, %138, %cst_58 [1] : vector<64x64xf32> to vector<64xf32>
    %140 = vector.shape_cast %139 : vector<64xf32> to vector<64x1xf32>
    %141 = tpu.reciprocal %140 {approx = true} : vector<64x1xf32> -> vector<64x1xf32>
    %142 = vector.broadcast %141 : vector<64x1xf32> to vector<64x64xf32>
    %143 = arith.mulf %138, %142 : vector<64x64xf32>
    %144 = arith.truncf %143 : vector<64x64xf32> to vector<64x64xbf16>
    %cst_59 = arith.constant dense<0.000000e+00> : vector<64x8xf32>
    %145 = tpu.matmul %144, %128, %cst_59 {dimension_numbers = #tpu.dot_dimension_numbers<[1], [0], [0], [1], [0, 0, 1, 1], [], []>} : vector<64x64xbf16>, vector<64x8xbf16>, vector<64x8xf32> -> vector<64x8xf32>
    %146 = vector.extract_strided_slice %103 {offsets = [0, 48], sizes = [64, 24], strides = [1, 1]} : vector<64x96xbf16> to vector<64x24xbf16>
    %147 = vector.extract_strided_slice %146 {offsets = [0, 0], sizes = [64, 8], strides = [1, 1]} : vector<64x24xbf16> to vector<64x8xbf16>
    %148 = vector.extract_strided_slice %146 {offsets = [0, 8], sizes = [64, 8], strides = [1, 1]} : vector<64x24xbf16> to vector<64x8xbf16>
    %149 = vector.extract_strided_slice %146 {offsets = [0, 16], sizes = [64, 8], strides = [1, 1]} : vector<64x24xbf16> to vector<64x8xbf16>
    %c2_60 = arith.constant 2 : index
    %c0_61 = arith.constant 0 : index
    %c0_62 = arith.constant 0 : index
    %150 = vector.load %arg4[%c2_60, %c0_61, %c0_62] : memref<4x64x8xbf16, #tpu.memory_space<vmem>>, vector<1x64x8xbf16>
    %151 = vector.shape_cast %150 : vector<1x64x8xbf16> to vector<64x8xbf16>
    %cst_63 = arith.constant dense<0.000000e+00> : vector<64x64xf32>
    %152 = tpu.matmul %147, %148, %cst_63 {dimension_numbers = #tpu.dot_dimension_numbers<[1], [1], [0], [0], [0, 0, 1, 0], [], []>} : vector<64x8xbf16>, vector<64x8xbf16>, vector<64x64xf32> -> vector<64x64xf32>
    %cst_64 = arith.constant dense<0.000000e+00> : vector<64x64xf32>
    %153 = tpu.matmul %151, %147, %cst_64 {dimension_numbers = #tpu.dot_dimension_numbers<[1], [1], [0], [0], [0, 0, 1, 0], [], []>} : vector<64x8xbf16>, vector<64x8xbf16>, vector<64x64xf32> -> vector<64x64xf32>
    %154 = arith.addf %152, %153 : vector<64x64xf32>
    %cst_65 = arith.constant dense<0xFF800000> : vector<64xf32>
    %155 = vector.multi_reduction <maximumf>, %154, %cst_65 [1] : vector<64x64xf32> to vector<64xf32>
    %156 = vector.shape_cast %155 : vector<64xf32> to vector<64x1xf32>
    %157 = vector.broadcast %156 : vector<64x1xf32> to vector<64x64xf32>
    %158 = arith.subf %154, %157 : vector<64x64xf32>
    %159 = math.exp %158 : vector<64x64xf32>
    %cst_66 = arith.constant dense<0.000000e+00> : vector<64xf32>
    %160 = vector.multi_reduction <add>, %159, %cst_66 [1] : vector<64x64xf32> to vector<64xf32>
    %161 = vector.shape_cast %160 : vector<64xf32> to vector<64x1xf32>
    %162 = tpu.reciprocal %161 {approx = true} : vector<64x1xf32> -> vector<64x1xf32>
    %163 = vector.broadcast %162 : vector<64x1xf32> to vector<64x64xf32>
    %164 = arith.mulf %159, %163 : vector<64x64xf32>
    %165 = arith.truncf %164 : vector<64x64xf32> to vector<64x64xbf16>
    %cst_67 = arith.constant dense<0.000000e+00> : vector<64x8xf32>
    %166 = tpu.matmul %165, %149, %cst_67 {dimension_numbers = #tpu.dot_dimension_numbers<[1], [0], [0], [1], [0, 0, 1, 1], [], []>} : vector<64x64xbf16>, vector<64x8xbf16>, vector<64x8xf32> -> vector<64x8xf32>
    %167 = vector.extract_strided_slice %103 {offsets = [0, 72], sizes = [64, 24], strides = [1, 1]} : vector<64x96xbf16> to vector<64x24xbf16>
    %168 = vector.extract_strided_slice %167 {offsets = [0, 0], sizes = [64, 8], strides = [1, 1]} : vector<64x24xbf16> to vector<64x8xbf16>
    %169 = vector.extract_strided_slice %167 {offsets = [0, 8], sizes = [64, 8], strides = [1, 1]} : vector<64x24xbf16> to vector<64x8xbf16>
    %170 = vector.extract_strided_slice %167 {offsets = [0, 16], sizes = [64, 8], strides = [1, 1]} : vector<64x24xbf16> to vector<64x8xbf16>
    %c3_68 = arith.constant 3 : index
    %c0_69 = arith.constant 0 : index
    %c0_70 = arith.constant 0 : index
    %171 = vector.load %arg4[%c3_68, %c0_69, %c0_70] : memref<4x64x8xbf16, #tpu.memory_space<vmem>>, vector<1x64x8xbf16>
    %172 = vector.shape_cast %171 : vector<1x64x8xbf16> to vector<64x8xbf16>
    %cst_71 = arith.constant dense<0.000000e+00> : vector<64x64xf32>
    %173 = tpu.matmul %168, %169, %cst_71 {dimension_numbers = #tpu.dot_dimension_numbers<[1], [1], [0], [0], [0, 0, 1, 0], [], []>} : vector<64x8xbf16>, vector<64x8xbf16>, vector<64x64xf32> -> vector<64x64xf32>
    %cst_72 = arith.constant dense<0.000000e+00> : vector<64x64xf32>
    %174 = tpu.matmul %172, %168, %cst_72 {dimension_numbers = #tpu.dot_dimension_numbers<[1], [1], [0], [0], [0, 0, 1, 0], [], []>} : vector<64x8xbf16>, vector<64x8xbf16>, vector<64x64xf32> -> vector<64x64xf32>
    %175 = arith.addf %173, %174 : vector<64x64xf32>
    %cst_73 = arith.constant dense<0xFF800000> : vector<64xf32>
    %176 = vector.multi_reduction <maximumf>, %175, %cst_73 [1] : vector<64x64xf32> to vector<64xf32>
    %177 = vector.shape_cast %176 : vector<64xf32> to vector<64x1xf32>
    %178 = vector.broadcast %177 : vector<64x1xf32> to vector<64x64xf32>
    %179 = arith.subf %175, %178 : vector<64x64xf32>
    %180 = math.exp %179 : vector<64x64xf32>
    %cst_74 = arith.constant dense<0.000000e+00> : vector<64xf32>
    %181 = vector.multi_reduction <add>, %180, %cst_74 [1] : vector<64x64xf32> to vector<64xf32>
    %182 = vector.shape_cast %181 : vector<64xf32> to vector<64x1xf32>
    %183 = tpu.reciprocal %182 {approx = true} : vector<64x1xf32> -> vector<64x1xf32>
    %184 = vector.broadcast %183 : vector<64x1xf32> to vector<64x64xf32>
    %185 = arith.mulf %180, %184 : vector<64x64xf32>
    %186 = arith.truncf %185 : vector<64x64xf32> to vector<64x64xbf16>
    %cst_75 = arith.constant dense<0.000000e+00> : vector<64x8xf32>
    %187 = tpu.matmul %186, %170, %cst_75 {dimension_numbers = #tpu.dot_dimension_numbers<[1], [0], [0], [1], [0, 0, 1, 1], [], []>} : vector<64x64xbf16>, vector<64x8xbf16>, vector<64x8xf32> -> vector<64x8xf32>
    %188 = tpu.concatenate %124, %145, %166, %187 in 1 : vector<64x8xf32>, vector<64x8xf32>, vector<64x8xf32>, vector<64x8xf32> -> vector<64x32xf32>
    %189 = tpu.concatenate %102, %188 in 0 : vector<64x32xf32>, vector<64x32xf32> -> vector<128x32xf32>
    %190 = vector.broadcast %3 : vector<1x32xf32> to vector<128x32xf32>
    %191 = arith.addf %189, %190 : vector<128x32xf32>
    %cst_76 = arith.constant 0.000000e+00 : f32
    %192 = vector.broadcast %cst_76 : f32 to vector<128x32xf32>
    %193 = arith.maximumf %191, %192 : vector<128x32xf32>
    %194 = arith.truncf %193 : vector<128x32xf32> to vector<128x32xbf16>
    %c0_77 = arith.constant 0 : index
    %c0_78 = arith.constant 0 : index
    %195 = vector.load %arg5[%c0_77, %c0_78] : memref<32x128xbf16, #tpu.memory_space<vmem>>, vector<32x128xbf16>
    %cst_79 = arith.constant dense<0.000000e+00> : vector<128x128xf32>
    %196 = tpu.matmul %194, %195, %cst_79 {dimension_numbers = #tpu.dot_dimension_numbers<[1], [0], [0], [1], [0, 0, 1, 1], [], []>} : vector<128x32xbf16>, vector<32x128xbf16>, vector<128x128xf32> -> vector<128x128xf32>
    %c0_80 = arith.constant 0 : index
    %c0_81 = arith.constant 0 : index
    %197 = vector.load %arg6[%c0_80, %c0_81] : memref<16x128xbf16, #tpu.memory_space<vmem>>, vector<16x128xbf16>
    %cst_82 = arith.constant dense<0.000000e+00> : vector<128x128xf32>
    %198 = tpu.matmul %0, %197, %cst_82 {dimension_numbers = #tpu.dot_dimension_numbers<[1], [0], [0], [1], [0, 0, 1, 1], [], []>} : vector<128x16xbf16>, vector<16x128xbf16>, vector<128x128xf32> -> vector<128x128xf32>
    %199 = arith.addf %196, %198 : vector<128x128xf32>
    %200 = vector.broadcast %4 : vector<1x128xf32> to vector<128x128xf32>
    %201 = arith.addf %199, %200 : vector<128x128xf32>
    %cst_83 = arith.constant 0.000000e+00 : f32
    %202 = vector.broadcast %cst_83 : f32 to vector<128x128xf32>
    %203 = arith.maximumf %201, %202 : vector<128x128xf32>
    %204 = arith.truncf %203 : vector<128x128xf32> to vector<128x128xbf16>
    %c0_84 = arith.constant 0 : index
    %c0_85 = arith.constant 0 : index
    %205 = vector.load %arg8[%c0_84, %c0_85] : memref<128x128xbf16, #tpu.memory_space<vmem>>, vector<128x128xbf16>
    tpu.vector_store %arg8[%c0_84, %c0_85], %204 {strides = array<i32>} : memref<128x128xbf16, #tpu.memory_space<vmem>>, vector<128x128xbf16>,
    return
  }
  func.func @transform_0(%arg0: i32) -> (i32, i32) {
    %c0_i32 = arith.constant 0 : i32
    %c0_i32_0 = arith.constant 0 : i32
    return %arg0, %c0_i32 : i32, i32
  }
  func.func @transform_1(%arg0: i32) -> (i32, i32) {
    %c0_i32 = arith.constant 0 : i32
    %c0_i32_0 = arith.constant 0 : i32
    %c0_i32_1 = arith.constant 0 : i32
    return %c0_i32, %c0_i32_0 : i32, i32
  }
  func.func @transform_2(%arg0: i32) -> (i32, i32) {
    %c0_i32 = arith.constant 0 : i32
    %c0_i32_0 = arith.constant 0 : i32
    %c0_i32_1 = arith.constant 0 : i32
    return %c0_i32, %c0_i32_0 : i32, i32
  }
  func.func @transform_3(%arg0: i32) -> (i32, i32, i32) {
    %c0_i32 = arith.constant 0 : i32
    %c0_i32_0 = arith.constant 0 : i32
    %c0_i32_1 = arith.constant 0 : i32
    %c0_i32_2 = arith.constant 0 : i32
    return %c0_i32, %c0_i32_0, %c0_i32_1 : i32, i32, i32
  }
  func.func @transform_4(%arg0: i32) -> (i32, i32) {
    %c0_i32 = arith.constant 0 : i32
    %c0_i32_0 = arith.constant 0 : i32
    %c0_i32_1 = arith.constant 0 : i32
    return %c0_i32, %c0_i32_0 : i32, i32
  }
  func.func @transform_5(%arg0: i32) -> (i32, i32) {
    %c0_i32 = arith.constant 0 : i32
    %c0_i32_0 = arith.constant 0 : i32
    %c0_i32_1 = arith.constant 0 : i32
    return %c0_i32, %c0_i32_0 : i32, i32
  }
  func.func @transform_6(%arg0: i32) -> (i32, i32) {
    %c0_i32 = arith.constant 0 : i32
    %c0_i32_0 = arith.constant 0 : i32
    %c0_i32_1 = arith.constant 0 : i32
    return %c0_i32, %c0_i32_0 : i32, i32
  }
  func.func @transform_7(%arg0: i32) -> (i32, i32) {
    %c0_i32 = arith.constant 0 : i32
    %c0_i32_0 = arith.constant 0 : i32
    return %arg0, %c0_i32 : i32, i32
  }
}

</mosaic_0001>

<llo_original>
// kernel: tpu_custom_call.1
$region0: #{tpu_custom_call.1}
  #allocation0 [shape = 'u32[]', space=smem, size = 0x4, offset = 0x4, fixed_abs, tag = 'smem constant byte address 0x4 - core index']
  #allocation1 [shape = 'u32[72,128]{1,0:T(1,128)}', space=vmem, size = 0x9000, scoped, tag = 'internal scratch']
  %s0 = inlined_call_operand.vmem [shape: bf16[256,16], index: 0, kind: input, shape index: {}]
  %s1 = inlined_call_operand.vmem [shape: bf16[16,32], index: 1, kind: input, shape index: {}]
  %s2 = inlined_call_operand.vmem [shape: bf16[32,96], index: 2, kind: input, shape index: {}]
  %s3 = inlined_call_operand.vmem [shape: bf16[4,64,8], index: 3, kind: input, shape index: {}]
  %s4 = inlined_call_operand.vmem [shape: bf16[32,128], index: 4, kind: input, shape index: {}]
  %s5 = inlined_call_operand.vmem [shape: bf16[16,128], index: 5, kind: input, shape index: {}]
  %s6 = inlined_call_operand.vmem [shape: f32[4,128], index: 6, kind: input, shape index: {}]
  %s7 = inlined_call_operand.hbm [shape: bf16[256,128], index: 7, kind: output, shape index: {}]
  %s8 = sld [smem:[#allocation0]]
  $region61: #{tpu_custom_call.1} parent=0
    _
  %s10 = ssub.s32 1, %s8
  %s11 = scalar_select 0, %s10, %s8
  $region1: #{tpu_custom_call.1} parent=0
    #allocation2 [shape = 'u8[65536]{0}', space=vmem, size = 0x10000, scoped, tag = 'output window, operand 0']
    #allocation3 [shape = 's32[2]{0}', space=sflag, size = 0x8, scoped, tag = 'scoped memory for tpu_custom_call.1']
    %12 = vsyncpa [#allocation3], 0
    %s13 = scalar_lea.sflag [#allocation3], 1
    %14 = vsyncpa %s13, 0
    loop: start=0, step=1, limit=4
    $region2: #{tpu_custom_call.1} parent=1 // loop_pre_header
      _
    $region3: #{tpu_custom_call.1} parent=1 // loop_header
      %s16 = sphi 0, %s20
      %p17 = scmp.ge.s32.totalorder %s16, 4
      %s26 = sphi 0, %s28
      %s29 = sphi 0, %s26
      %s30 = sphi 0, %s29
      %s46 = sphi 0, %s30
      %s50 = sphi 0, %s50
      %s52 = sphi 0, %s50
      %s53 = sphi 0, %s52
      %s67 = sphi 0, %s53
      %s71 = sphi 0, %s71
      %s73 = sphi 0, %s71
      %s74 = sphi 0, %s73
      %s88 = sphi 0, %s74
      %s92 = sphi 0, %s92
      %s94 = sphi 0, %s92
      %s95 = sphi 0, %s94
      %s109 = sphi 0, %s95
      %s113 = sphi 0, %s113
      %s115 = sphi 0, %s113
      %s116 = sphi 0, %s115
      %s130 = sphi 0, %s116
      %s134 = sphi 0, %s134
      %s136 = sphi 0, %s134
      %s137 = sphi 0, %s136
      %s151 = sphi 0, %s137
      %s155 = sphi 0, %s155
      %s157 = sphi 0, %s155
      %s158 = sphi 0, %s157
      %s172 = sphi 0, %s158
      %s178 = sphi 0, %s180
      %s181 = sphi 0, %s178
      %s182 = sphi 0, %s181
      %s198 = sphi 0, %s182
    $region4: #{tpu_custom_call.1} parent=1 // loop_header_branch
      %19 = sbr.rel (%p17) target = $region8
    $region5: #{tpu_custom_call.1} parent=1 // loop_body
      %s21 = ssub.s32 %s16, 1
      %s22 = ssub.s32 %s16, 2
      %s23 = sadd.s32 %s16, 1
      %s24 = ssub.s32 %s16, %s23
      %p25 = scmp.eq.s32.totalorder %s24, 0
      %s27 = sadd.s32 %s26, 1
      %s28 = scalar_select %p25, %s26, %s27
      %p31 = pneg %p25
      %p32 = scmp.eq.s32.totalorder %s16, 1
      %p33 = por %p31, %p32
      %p34 = scmp.ne.s32.totalorder %s26, %s29
      %p35 = scmp.eq.s32.totalorder %s16, 0
      %p36 = por %p34, %p35
      %p37 = scmp.ne.s32.totalorder %s26, %s29
      %p38 = scmp.eq.s32.totalorder %s21, 1
      %p39 = por %p37, %p38
      %p40 = scmp.ne.s32.totalorder %s29, %s30
      %p41 = scmp.eq.s32.totalorder %s21, 0
      %p42 = por %p40, %p41
      %p43 = scmp.ne.s32.totalorder %s29, %s30
      %p44 = scmp.eq.s32.totalorder %s22, 1
      %p45 = por %p43, %p44
      %p47 = scmp.ne.s32.totalorder %s30, %s46
      %p48 = scmp.eq.s32.totalorder %s22, 0
      %p49 = por %p47, %p48
      %s51 = sadd.s32 %s50, 1
      %p54 = scmp.eq.s32.totalorder %s16, 1
      %p55 = scmp.ne.s32.totalorder %s50, %s52
      %p56 = scmp.eq.s32.totalorder %s16, 0
      %p57 = por %p55, %p56
      %p58 = scmp.ne.s32.totalorder %s50, %s52
      %p59 = scmp.eq.s32.totalorder %s21, 1
      %p60 = por %p58, %p59
      %p61 = scmp.ne.s32.totalorder %s52, %s53
      %p62 = scmp.eq.s32.totalorder %s21, 0
      %p63 = por %p61, %p62
      %p64 = scmp.ne.s32.totalorder %s52, %s53
      %p65 = scmp.eq.s32.totalorder %s22, 1
      %p66 = por %p64, %p65
      %p68 = scmp.ne.s32.totalorder %s53, %s67
      %p69 = scmp.eq.s32.totalorder %s22, 0
      %p70 = por %p68, %p69
      %s72 = sadd.s32 %s71, 1
      %p75 = scmp.eq.s32.totalorder %s16, 1
      %p76 = scmp.ne.s32.totalorder %s71, %s73
      %p77 = scmp.eq.s32.totalorder %s16, 0
      %p78 = por %p76, %p77
      %p79 = scmp.ne.s32.totalorder %s71, %s73
      %p80 = scmp.eq.s32.totalorder %s21, 1
      %p81 = por %p79, %p80
      %p82 = scmp.ne.s32.totalorder %s73, %s74
      %p83 = scmp.eq.s32.totalorder %s21, 0
      %p84 = por %p82, %p83
      %p85 = scmp.ne.s32.totalorder %s73, %s74
      %p86 = scmp.eq.s32.totalorder %s22, 1
      %p87 = por %p85, %p86
      %p89 = scmp.ne.s32.totalorder %s74, %s88
      %p90 = scmp.eq.s32.totalorder %s22, 0
      %p91 = por %p89, %p90
      %s93 = sadd.s32 %s92, 1
      %p96 = scmp.eq.s32.totalorder %s16, 1
      %p97 = scmp.ne.s32.totalorder %s92, %s94
      %p98 = scmp.eq.s32.totalorder %s16, 0
      %p99 = por %p97, %p98
      %p100 = scmp.ne.s32.totalorder %s92, %s94
      %p101 = scmp.eq.s32.totalorder %s21, 1
      %p102 = por %p100, %p101
      %p103 = scmp.ne.s32.totalorder %s94, %s95
      %p104 = scmp.eq.s32.totalorder %s21, 0
      %p105 = por %p103, %p104
      %p106 = scmp.ne.s32.totalorder %s94, %s95
      %p107 = scmp.eq.s32.totalorder %s22, 1
      %p108 = por %p106, %p107
      %p110 = scmp.ne.s32.totalorder %s95, %s109
      %p111 = scmp.eq.s32.totalorder %s22, 0
      %p112 = por %p110, %p111
      %s114 = sadd.s32 %s113, 1
      %p117 = scmp.eq.s32.totalorder %s16, 1
      %p118 = scmp.ne.s32.totalorder %s113, %s115
      %p119 = scmp.eq.s32.totalorder %s16, 0
      %p120 = por %p118, %p119
      %p121 = scmp.ne.s32.totalorder %s113, %s115
      %p122 = scmp.eq.s32.totalorder %s21, 1
      %p123 = por %p121, %p122
      %p124 = scmp.ne.s32.totalorder %s115, %s116
      %p125 = scmp.eq.s32.totalorder %s21, 0
      %p126 = por %p124, %p125
      %p127 = scmp.ne.s32.totalorder %s115, %s116
      %p128 = scmp.eq.s32.totalorder %s22, 1
      %p129 = por %p127, %p128
      %p131 = scmp.ne.s32.totalorder %s116, %s130
      %p132 = scmp.eq.s32.totalorder %s22, 0
      %p133 = por %p131, %p132
      %s135 = sadd.s32 %s134, 1
      %p138 = scmp.eq.s32.totalorder %s16, 1
      %p139 = scmp.ne.s32.totalorder %s134, %s136
      %p140 = scmp.eq.s32.totalorder %s16, 0
      %p141 = por %p139, %p140
      %p142 = scmp.ne.s32.totalorder %s134, %s136
      %p143 = scmp.eq.s32.totalorder %s21, 1
      %p144 = por %p142, %p143
      %p145 = scmp.ne.s32.totalorder %s136, %s137
      %p146 = scmp.eq.s32.totalorder %s21, 0
      %p147 = por %p145, %p146
      %p148 = scmp.ne.s32.totalorder %s136, %s137
      %p149 = scmp.eq.s32.totalorder %s22, 1
      %p150 = por %p148, %p149
      %p152 = scmp.ne.s32.totalorder %s137, %s151
      %p153 = scmp.eq.s32.totalorder %s22, 0
      %p154 = por %p152, %p153
      %s156 = sadd.s32 %s155, 1
      %p159 = scmp.eq.s32.totalorder %s16, 1
      %p160 = scmp.ne.s32.totalorder %s155, %s157
      %p161 = scmp.eq.s32.totalorder %s16, 0
      %p162 = por %p160, %p161
      %p163 = scmp.ne.s32.totalorder %s155, %s157
      %p164 = scmp.eq.s32.totalorder %s21, 1
      %p165 = por %p163, %p164
      %p166 = scmp.ne.s32.totalorder %s157, %s158
      %p167 = scmp.eq.s32.totalorder %s21, 0
      %p168 = por %p166, %p167
      %p169 = scmp.ne.s32.totalorder %s157, %s158
      %p170 = scmp.eq.s32.totalorder %s22, 1
      %p171 = por %p169, %p170
      %p173 = scmp.ne.s32.totalorder %s158, %s172
      %p174 = scmp.eq.s32.totalorder %s22, 0
      %p175 = por %p173, %p174
      %s176 = ssub.s32 %s16, %s23
      %p177 = scmp.eq.s32.totalorder %s176, 0
      %s179 = sadd.s32 %s178, 1
      %s180 = scalar_select %p177, %s178, %s179
      %p183 = pneg %p177
      %p184 = scmp.eq.s32.totalorder %s16, 1
      %p185 = por %p183, %p184
      %p186 = scmp.ne.s32.totalorder %s178, %s181
      %p187 = scmp.eq.s32.totalorder %s16, 0
      %p188 = por %p186, %p187
      %p189 = scmp.ne.s32.totalorder %s178, %s181
      %p190 = scmp.eq.s32.totalorder %s21, 1
      %p191 = por %p189, %p190
      %p192 = scmp.ne.s32.totalorder %s181, %s182
      %p193 = scmp.eq.s32.totalorder %s21, 0
      %p194 = por %p192, %p193
      %p195 = scmp.ne.s32.totalorder %s181, %s182
      %p196 = scmp.eq.s32.totalorder %s22, 1
      %p197 = por %p195, %p196
      %p199 = scmp.ne.s32.totalorder %s182, %s198
      %p200 = scmp.eq.s32.totalorder %s22, 0
      %p201 = por %p199, %p200
      %p202 = scmp.le.s32.totalorder 1, %s16
      %p203 = scmp.lt.s32.totalorder %s16, 3
      %p204 = pnand %p202, %p203
      %p205 = pneg %p204
      // Predicated region
      $region9: #{tpu_custom_call.1} parent=5 // pred_check
        _
      $region10: #{tpu_custom_call.1} parent=5 // pred_check_branch
        %207 = sbr.rel (%p204) target = $region12
      $region11: #{tpu_custom_call.1} parent=5 // pred_region
        %s208 = ssub.s32 %s16, 1
        // Predicated region
        $region13: #{tpu_custom_call.1} parent=11 // pred_check
          %p209 = pneg %p63
        $region14: #{tpu_custom_call.1} parent=11 // pred_check_branch
          %211 = sbr.rel (%p209) target = $region16
        $region15: #{tpu_custom_call.1} parent=11 // pred_region
          _
        $region16: #{tpu_custom_call.1} parent=11 // pred_fallthru
          _
        // Predicated region
        $region17: #{tpu_custom_call.1} parent=11 // pred_check
          %p212 = pneg %p84
        $region18: #{tpu_custom_call.1} parent=11 // pred_check_branch
          %214 = sbr.rel (%p212) target = $region20
        $region19: #{tpu_custom_call.1} parent=11 // pred_region
          _
        $region20: #{tpu_custom_call.1} parent=11 // pred_fallthru
          _
        // Predicated region
        $region21: #{tpu_custom_call.1} parent=11 // pred_check
          %p215 = pneg %p105
        $region22: #{tpu_custom_call.1} parent=11 // pred_check_branch
          %217 = sbr.rel (%p215) target = $region24
        $region23: #{tpu_custom_call.1} parent=11 // pred_region
          _
        $region24: #{tpu_custom_call.1} parent=11 // pred_fallthru
          _
        // Predicated region
        $region25: #{tpu_custom_call.1} parent=11 // pred_check
          %p218 = pneg %p126
        $region26: #{tpu_custom_call.1} parent=11 // pred_check_branch
          %220 = sbr.rel (%p218) target = $region28
        $region27: #{tpu_custom_call.1} parent=11 // pred_region
          _
        $region28: #{tpu_custom_call.1} parent=11 // pred_fallthru
          _
        // Predicated region
        $region29: #{tpu_custom_call.1} parent=11 // pred_check
          %p221 = pneg %p147
        $region30: #{tpu_custom_call.1} parent=11 // pred_check_branch
          %223 = sbr.rel (%p221) target = $region32
        $region31: #{tpu_custom_call.1} parent=11 // pred_region
          _
        $region32: #{tpu_custom_call.1} parent=11 // pred_fallthru
          _
        // Predicated region
        $region33: #{tpu_custom_call.1} parent=11 // pred_check
          %p224 = pneg %p168
        $region34: #{tpu_custom_call.1} parent=11 // pred_check_branch
          %226 = sbr.rel (%p224) target = $region36
        $region35: #{tpu_custom_call.1} parent=11 // pred_region
          _
        $region36: #{tpu_custom_call.1} parent=11 // pred_fallthru
          _
      $region12: #{tpu_custom_call.1} parent=5 // pred_fallthru
        _
      %p227 = scmp.lt.s32.totalorder %s16, 2
      // Predicated region
      $region37: #{tpu_custom_call.1} parent=5 // pred_check
        %p228 = pneg %p227
      $region38: #{tpu_custom_call.1} parent=5 // pred_check_branch
        %230 = sbr.rel (%p228) target = $region40
      $region39: #{tpu_custom_call.1} parent=5 // pred_region
        // Predicated region
        $region41: #{tpu_custom_call.1} parent=39 // pred_check
          %p231 = pneg %p36
        $region42: #{tpu_custom_call.1} parent=39 // pred_check_branch
          %233 = sbr.rel (%p231) target = $region44
        $region43: #{tpu_custom_call.1} parent=39 // pred_region
          %s234 = smul.u32 16, %s16
          %p235 = scmp.lt.s32.totalorder %s234, 31
          %s236 = scalar_select %p235, %s234, 31
          %s237 = smul.addr %s236, 4
          %s238 = scalar_lea.vmem %s0, %s237
          %s239 = smul.u32 16, %s16
        $region44: #{tpu_custom_call.1} parent=39 // pred_fallthru
          _
      $region40: #{tpu_custom_call.1} parent=5 // pred_fallthru
        _
      %p240 = scmp.le.s32.totalorder 1, %s16
      %p241 = scmp.lt.s32.totalorder %s16, 3
      %p242 = pnand %p240, %p241
      %p243 = pneg %p242
      // Predicated region
      $region45: #{tpu_custom_call.1} parent=5 // pred_check
        _
      $region46: #{tpu_custom_call.1} parent=5 // pred_check_branch
        %245 = sbr.rel (%p242) target = $region48
      $region47: #{tpu_custom_call.1} parent=5 // pred_region
        %s246 = ssub.s32 %s16, 1
        %s247 = smul.u32 16, %s21
        %p248 = scmp.lt.s32.totalorder %s247, 31
        %s249 = scalar_select %p248, %s247, 31
        %s250 = smul.addr %s249, 4
        %s251 = scalar_lea.vmem %s0, %s250
        %p252 = pneg %p42
        %p253 = pneg %p39
        %p254 = pneg %p63
        %p255 = pneg %p60
        %p256 = pneg %p84
        %p257 = pneg %p81
        %p258 = pneg %p105
        %p259 = pneg %p102
        %p260 = pneg %p126
        %p261 = pneg %p123
        %p262 = pneg %p147
        %p263 = pneg %p144
        %p264 = pneg %p168
        %p265 = pneg %p165
        %p266 = pneg %p194
        %p267 = pneg %p191
        %s268 = sand.u32 %s181, 1
        %s269 = scalar_lea.sflag [#allocation3], %s268
        %s270 = sand.u32 %s181, 1
        %s271 = smul.addr %s270, 64
        %s272 = scalar_lea.vmem [#allocation2], %s271
        %s273 = smul.u32 16, %s21
        %p274 = scmp.lt.s32.totalorder %s273, 31
        %s275 = scalar_select %p274, %s273, 31
        %s276 = smul.addr %s275, 4
        %s277 = scalar_lea.vmem %s0, %s276
        %s278 = smul.u32 16, %s21
        %s279 = smul.u32 16, %s21
        %v281 = vld [vmem:[%s277] sm:$0xf]
        %v282 = vld [vmem:[%s277 + $0x4] sm:$0xf]
        %v283 = vld [vmem:[%s277 + $0x8] sm:$0xf]
        %v284 = vld [vmem:[%s277 + $0xc] sm:$0xf]
        %v285 = vld [vmem:[%s277 + $0x10] sm:$0xf]
        %v286 = vld [vmem:[%s277 + $0x14] sm:$0xf]
        %v287 = vld [vmem:[%s277 + $0x18] sm:$0xf]
        %v288 = vld [vmem:[%s277 + $0x1c] sm:$0xf]
        %v289 = vld [vmem:[%s277 + $0x20] sm:$0xf]
        %v290 = vld [vmem:[%s277 + $0x24] sm:$0xf]
        %v291 = vld [vmem:[%s277 + $0x28] sm:$0xf]
        %v292 = vld [vmem:[%s277 + $0x2c] sm:$0xf]
        %v293 = vld [vmem:[%s277 + $0x30] sm:$0xf]
        %v294 = vld [vmem:[%s277 + $0x34] sm:$0xf]
        %v295 = vld [vmem:[%s277 + $0x38] sm:$0xf]
        %v296 = vld [vmem:[%s277 + $0x3c] sm:$0xf]
        %v297 = vld [vmem:[%s6] sm:$0x1]
        %v298 = vld [vmem:[%s6 + $0x1] sm:$0x1]
        %v299 = vld [vmem:[%s6 + $0x2] sm:$0x1]
        %v300 = vld [vmem:[%s6 + $0x3] sm:$0x1]
        %v301 = vld [vmem:[%s1] sm:$0xf]
        %v302 = vld [vmem:[%s1 + $0x4] sm:$0xf]
        %v303 = vperm.slane %v297, 0
        %v320 = vunpack.c.l.b16 %v281
        %v321 = vunpack.c.l.b16 %v282
        %v322 = vunpack.c.l.b16 %v283
        %v323 = vunpack.c.l.b16 %v284
        %v324 = vunpack.c.l.b16 %v285
        %v325 = vunpack.c.l.b16 %v286
        %v326 = vunpack.c.l.b16 %v287
        %v327 = vunpack.c.l.b16 %v288
        %v328 = vunpack.c.l.b16 %v289
        %v329 = vunpack.c.l.b16 %v290
        %v330 = vunpack.c.l.b16 %v291
        %v331 = vunpack.c.l.b16 %v292
        %v332 = vunpack.c.l.b16 %v293
        %v333 = vunpack.c.l.b16 %v294
        %v334 = vunpack.c.l.b16 %v295
        %v335 = vunpack.c.l.b16 %v296
        %v336 = vpack.c.b16 %v321, %v320
        %v337 = vpack.c.b16 %v323, %v322
        %v338 = vpack.c.b16 %v325, %v324
        %v339 = vpack.c.b16 %v327, %v326
        %v340 = vpack.c.b16 %v329, %v328
        %v341 = vpack.c.b16 %v331, %v330
        %v342 = vpack.c.b16 %v333, %v332
        %v343 = vpack.c.b16 %v335, %v334
        %v346 = vunpack.c.l.b16 %v301
        %v347 = vunpack.c.l.b16 %v302
        %v348 = vpack.c.b16 %v347, %v346
        %vm350 = vcmask 130048
        %v352 = vsel %vm350, %v336, 0
        %v355 = vsel %vm350, %v337, 0
        %v358 = vsel %vm350, %v338, 0
        %v361 = vsel %vm350, %v339, 0
        %v364 = vsel %vm350, %v340, 0
        %v367 = vsel %vm350, %v341, 0
        %v370 = vsel %vm350, %v342, 0
        %v373 = vsel %vm350, %v343, 0
        %375 = vmatpush.bf16.msra.mxu0 0
        %376 = vmatpush.bf16.msra.mxu0 0
        %377 = vmatpush.bf16.msra.mxu0 0
        %378 = vmatpush.bf16.msra.mxu0 0
        %379 = vmatpush.bf16.msra.mxu0 0
        %380 = vmatpush.bf16.msra.mxu0 0
        %381 = vmatpush.bf16.msra.mxu0 0
        %382 = vmatpush.bf16.msra.mxu0 %v348
        %383 = vmatmul.bf16.gmra.mxu0 %v352
        %v384 = vpop.f32.mrf.mxu0
        %v385 = vadd.f32 %v303, %v384
        %v386 = vpop.f32.mrf.mxu0
        %v387 = vadd.f32 %v303, %v386
        %388 = vmatmul.bf16.gmra.mxu0 %v355
        %v389 = vpop.f32.mrf.mxu0
        %v390 = vadd.f32 %v303, %v389
        %v391 = vpop.f32.mrf.mxu0
        %v392 = vadd.f32 %v303, %v391
        %393 = vmatmul.bf16.gmra.mxu0 %v358
        %v394 = vpop.f32.mrf.mxu0
        %v395 = vadd.f32 %v303, %v394
        %v396 = vpop.f32.mrf.mxu0
        %v397 = vadd.f32 %v303, %v396
        %398 = vmatmul.bf16.gmra.mxu0 %v361
        %v399 = vpop.f32.mrf.mxu0
        %v400 = vadd.f32 %v303, %v399
        %v401 = vpop.f32.mrf.mxu0
        %v402 = vadd.f32 %v303, %v401
        %403 = vmatmul.bf16.gmra.mxu0 %v364
        %v404 = vpop.f32.mrf.mxu0
        %v405 = vadd.f32 %v303, %v404
        %v406 = vpop.f32.mrf.mxu0
        %v407 = vadd.f32 %v303, %v406
        %408 = vmatmul.bf16.gmra.mxu0 %v367
        %v409 = vpop.f32.mrf.mxu0
        %v410 = vadd.f32 %v303, %v409
        %v411 = vpop.f32.mrf.mxu0
        %v412 = vadd.f32 %v303, %v411
        %413 = vmatmul.bf16.gmra.mxu0 %v370
        %v414 = vpop.f32.mrf.mxu0
        %v415 = vadd.f32 %v303, %v414
        %v416 = vpop.f32.mrf.mxu0
        %v417 = vadd.f32 %v303, %v416
        %418 = vmatmul.bf16.gmra.mxu0 %v373
        %v419 = vpop.f32.mrf.mxu0
        %v420 = vadd.f32 %v303, %v419
        %v421 = vpop.f32.mrf.mxu0
        %v422 = vadd.f32 %v303, %v421
        %423 = vdwg.mxu0
        %v424 = vmax.f32 %v385, 0.0
        %v425 = vmax.f32 %v387, 0.0
        %v426 = vmax.f32 %v390, 0.0
        %v427 = vmax.f32 %v392, 0.0
        %v428 = vmax.f32 %v395, 0.0
        %v429 = vmax.f32 %v397, 0.0
        %v430 = vmax.f32 %v400, 0.0
        %v431 = vmax.f32 %v402, 0.0
        %v432 = vmax.f32 %v405, 0.0
        %v433 = vmax.f32 %v407, 0.0
        %v434 = vmax.f32 %v410, 0.0
        %v435 = vmax.f32 %v412, 0.0
        %v436 = vmax.f32 %v415, 0.0
        %v437 = vmax.f32 %v417, 0.0
        %v438 = vmax.f32 %v420, 0.0
        %v439 = vmax.f32 %v422, 0.0
        %v440 = vpack.c.bf16 %v425, %v424
        %v441 = vpack.c.bf16 %v427, %v426
        %v442 = vpack.c.bf16 %v429, %v428
        %v443 = vpack.c.bf16 %v431, %v430
        %v444 = vpack.c.bf16 %v433, %v432
        %v445 = vpack.c.bf16 %v435, %v434
        %v446 = vpack.c.bf16 %v437, %v436
        %v447 = vpack.c.bf16 %v439, %v438
        %v448 = vld [vmem:[%s2] sm:$0xf]
        %v449 = vld [vmem:[%s2 + $0x4] sm:$0xf]
        %v450 = vld [vmem:[%s2 + $0x8] sm:$0xf]
        %v451 = vld [vmem:[%s2 + $0xc] sm:$0xf]
        %v452 = vperm.slane %v298, 0
        %v457 = vunpack.c.l.b16 %v448
        %v458 = vunpack.c.l.b16 %v449
        %v459 = vunpack.c.l.b16 %v450
        %v460 = vunpack.c.l.b16 %v451
        %v461 = vpack.c.b16 %v458, %v457
        %v462 = vpack.c.b16 %v460, %v459
        %vm465 = vcmask 261120
        %v467 = vsel %vm465, %v440, 0
        %v470 = vsel %vm465, %v441, 0
        %v473 = vsel %vm465, %v442, 0
        %v476 = vsel %vm465, %v443, 0
        %v479 = vsel %vm465, %v444, 0
        %v482 = vsel %vm465, %v445, 0
        %v485 = vsel %vm465, %v446, 0
        %v488 = vsel %vm465, %v447, 0
        %490 = vmatpush.bf16.msra.mxu0 0
        %491 = vmatpush.bf16.msra.mxu0 0
        %492 = vmatpush.bf16.msra.mxu0 0
        %493 = vmatpush.bf16.msra.mxu0 0
        %494 = vmatpush.bf16.msra.mxu0 0
        %495 = vmatpush.bf16.msra.mxu0 0
        %496 = vmatpush.bf16.msra.mxu0 %v462
        %497 = vmatpush.bf16.msra.mxu0 %v461
        %498 = vmatmul.bf16.gmra.mxu0 %v467
        %v499 = vpop.f32.mrf.mxu0
        %v500 = vadd.f32 %v452, %v499
        %v501 = vpop.f32.mrf.mxu0
        %v502 = vadd.f32 %v452, %v501
        %503 = vmatmul.bf16.gmra.mxu0 %v470
        %v504 = vpop.f32.mrf.mxu0
        %v505 = vadd.f32 %v452, %v504
        %v506 = vpop.f32.mrf.mxu0
        %v507 = vadd.f32 %v452, %v506
        %508 = vmatmul.bf16.gmra.mxu0 %v473
        %v509 = vpop.f32.mrf.mxu0
        %v510 = vadd.f32 %v452, %v509
        %v511 = vpop.f32.mrf.mxu0
        %v512 = vadd.f32 %v452, %v511
        %513 = vmatmul.bf16.gmra.mxu0 %v476
        %v514 = vpop.f32.mrf.mxu0
        %v515 = vadd.f32 %v452, %v514
        %v516 = vpop.f32.mrf.mxu0
        %v517 = vadd.f32 %v452, %v516
        %518 = vmatmul.bf16.gmra.mxu0 %v479
        %v519 = vpop.f32.mrf.mxu0
        %v520 = vadd.f32 %v452, %v519
        %v521 = vpop.f32.mrf.mxu0
        %v522 = vadd.f32 %v452, %v521
        %523 = vmatmul.bf16.gmra.mxu0 %v482
        %v524 = vpop.f32.mrf.mxu0
        %v525 = vadd.f32 %v452, %v524
        %v526 = vpop.f32.mrf.mxu0
        %v527 = vadd.f32 %v452, %v526
        %528 = vmatmul.bf16.gmra.mxu0 %v485
        %v529 = vpop.f32.mrf.mxu0
        %v530 = vadd.f32 %v452, %v529
        %v531 = vpop.f32.mrf.mxu0
        %v532 = vadd.f32 %v452, %v531
        %533 = vmatmul.bf16.gmra.mxu0 %v488
        %v534 = vpop.f32.mrf.mxu0
        %v535 = vadd.f32 %v452, %v534
        %v536 = vpop.f32.mrf.mxu0
        %v537 = vadd.f32 %v452, %v536
        %538 = vdwg.mxu0
        %v539 = vpack.c.bf16 %v500, %v500
        %v540 = vpack.c.bf16 %v502, %v502
        %v541 = vpack.c.bf16 %v505, %v505
        %v542 = vpack.c.bf16 %v507, %v507
        %v543 = vpack.c.bf16 %v510, %v510
        %v544 = vpack.c.bf16 %v512, %v512
        %v545 = vpack.c.bf16 %v515, %v515
        %v546 = vpack.c.bf16 %v517, %v517
        %v547 = vpack.c.bf16 %v520, %v520
        %v548 = vpack.c.bf16 %v522, %v522
        %v549 = vpack.c.bf16 %v525, %v525
        %v550 = vpack.c.bf16 %v527, %v527
        %v551 = vpack.c.bf16 %v530, %v530
        %v552 = vpack.c.bf16 %v532, %v532
        %v553 = vpack.c.bf16 %v535, %v535
        %v554 = vpack.c.bf16 %v537, %v537
        %v555 = vld [vmem:[%s3] sm:$0xf]
        %v556 = vld [vmem:[%s3 + $0x4] sm:$0xf]
        %v557 = vld [vmem:[%s3 + $0x8] sm:$0xf]
        %v558 = vld [vmem:[%s3 + $0xc] sm:$0xf]
        %v559 = vld [vmem:[%s3 + $0x10] sm:$0xf]
        %v560 = vld [vmem:[%s3 + $0x14] sm:$0xf]
        %v561 = vld [vmem:[%s3 + $0x18] sm:$0xf]
        %v562 = vld [vmem:[%s3 + $0x1c] sm:$0xf]
        %v571 = vunpack.c.l.b16 %v555
        %v572 = vunpack.c.l.b16 %v556
        %v573 = vunpack.c.l.b16 %v557
        %v574 = vunpack.c.l.b16 %v558
        %v575 = vunpack.c.l.b16 %v559
        %v576 = vunpack.c.l.b16 %v560
        %v577 = vunpack.c.l.b16 %v561
        %v578 = vunpack.c.l.b16 %v562
        %v579 = vpack.c.b16 %v572, %v571
        %v580 = vpack.c.b16 %v574, %v573
        %v581 = vpack.c.b16 %v576, %v575
        %v582 = vpack.c.b16 %v578, %v577
        %v591 = vunpack.c.l.b16 %v539
        %v592 = vunpack.c.l.b16 %v540
        %v593 = vunpack.c.l.b16 %v541
        %v594 = vunpack.c.l.b16 %v542
        %v595 = vunpack.c.l.b16 %v543
        %v596 = vunpack.c.l.b16 %v544
        %v597 = vunpack.c.l.b16 %v545
        %v598 = vunpack.c.l.b16 %v546
        %v599 = vpack.c.b16 %v592, %v591
        %v600 = vpack.c.b16 %v594, %v593
        %v601 = vpack.c.b16 %v596, %v595
        %v602 = vpack.c.b16 %v598, %v597
        %vm603 = vcmask 64512
        %v605 = vsel %vm603, %v579, 0
        %v608 = vsel %vm603, %v580, 0
        %v611 = vsel %vm603, %v581, 0
        %v614 = vsel %vm603, %v582, 0
        %v617 = vsel %vm603, %v599, 0
        %v620 = vsel %vm603, %v600, 0
        %v623 = vsel %vm603, %v601, 0
        %v626 = vsel %vm603, %v602, 0
        %628 = vmatpush.bf16.xpose.msra.mxu0 0
        %629 = vmatpush.bf16.xpose.msra.mxu0 0
        %630 = vmatpush.bf16.xpose.msra.mxu0 0
        %631 = vmatpush.bf16.xpose.msra.mxu0 0
        %632 = vmatpush.bf16.xpose.msra.mxu0 %v626
        %633 = vmatpush.bf16.xpose.msra.mxu0 %v623
        %634 = vmatpush.bf16.xpose.msra.mxu0 %v620
        %635 = vmatpush.bf16.xpose.msra.mxu0 %v617
        %636 = vmatmul.bf16.gmra.mxu0 %v605
        %v637 = vpop.f32.mrf.mxu0
        %v638 = vadd.f32 0.0, %v637
        %v639 = vpop.f32.mrf.mxu0
        %v640 = vadd.f32 0.0, %v639
        %641 = vmatmul.bf16.gmra.mxu0 %v608
        %v642 = vpop.f32.mrf.mxu0
        %v643 = vadd.f32 0.0, %v642
        %v644 = vpop.f32.mrf.mxu0
        %v645 = vadd.f32 0.0, %v644
        %646 = vmatmul.bf16.gmra.mxu0 %v611
        %v647 = vpop.f32.mrf.mxu0
        %v648 = vadd.f32 0.0, %v647
        %v649 = vpop.f32.mrf.mxu0
        %v650 = vadd.f32 0.0, %v649
        %651 = vmatmul.bf16.gmra.mxu0 %v614
        %v652 = vpop.f32.mrf.mxu0
        %v653 = vadd.f32 0.0, %v652
        %v654 = vpop.f32.mrf.mxu0
        %v655 = vadd.f32 0.0, %v654
        %656 = vdwg.mxu0
        %657 = vrot.lane.b32.xlu0 %v599, 120
        %v658 = vpop.permute.xlu0 %657
        %659 = vrot.lane.b32.xlu0 %v600, 120
        %v660 = vpop.permute.xlu0 %659
        %661 = vrot.lane.b32.xlu0 %v601, 120
        %v662 = vpop.permute.xlu0 %661
        %663 = vrot.lane.b32.xlu0 %v602, 120
        %v664 = vpop.permute.xlu0 %663
        %v666 = vsel %vm603, %v658, 0
        %v669 = vsel %vm603, %v660, 0
        %v672 = vsel %vm603, %v662, 0
        %v675 = vsel %vm603, %v664, 0
        %677 = vmatpush.bf16.xpose.msra.mxu0 0
        %678 = vmatpush.bf16.xpose.msra.mxu0 0
        %679 = vmatpush.bf16.xpose.msra.mxu0 0
        %680 = vmatpush.bf16.xpose.msra.mxu0 0
        %681 = vmatpush.bf16.xpose.msra.mxu0 %v675
        %682 = vmatpush.bf16.xpose.msra.mxu0 %v672
        %683 = vmatpush.bf16.xpose.msra.mxu0 %v669
        %684 = vmatpush.bf16.xpose.msra.mxu0 %v666
        %685 = vmatmul.bf16.gmra.mxu0 %v617
        %v686 = vpop.f32.mrf.mxu0
        %v687 = vadd.f32 %v638, %v686
        %v688 = vpop.f32.mrf.mxu0
        %v689 = vadd.f32 %v640, %v688
        %690 = vmatmul.bf16.gmra.mxu0 %v620
        %v691 = vpop.f32.mrf.mxu0
        %v692 = vadd.f32 %v643, %v691
        %v693 = vpop.f32.mrf.mxu0
        %v694 = vadd.f32 %v645, %v693
        %695 = vmatmul.bf16.gmra.mxu0 %v623
        %v696 = vpop.f32.mrf.mxu0
        %v697 = vadd.f32 %v648, %v696
        %v698 = vpop.f32.mrf.mxu0
        %v699 = vadd.f32 %v650, %v698
        %700 = vmatmul.bf16.gmra.mxu0 %v626
        %v701 = vpop.f32.mrf.mxu0
        %v702 = vadd.f32 %v653, %v701
        %v703 = vpop.f32.mrf.mxu0
        %v704 = vadd.f32 %v655, %v703
        %705 = vdwg.mxu0
        %vm706 = vcmask 523264
        %v707 = vsel %vm706, %v687, -inf
        %708 = vmax.xlane.f32.xlu0 %v707
        %v709 = vpop.xlane.xlu0 %708
        %v710 = vsel %vm706, %v689, -inf
        %711 = vmax.xlane.f32.xlu0 %v710
        %v712 = vpop.xlane.xlu0 %711
        %v713 = vsel %vm706, %v692, -inf
        %714 = vmax.xlane.f32.xlu0 %v713
        %v715 = vpop.xlane.xlu0 %714
        %v716 = vsel %vm706, %v694, -inf
        %717 = vmax.xlane.f32.xlu0 %v716
        %v718 = vpop.xlane.xlu0 %717
        %v719 = vsel %vm706, %v697, -inf
        %720 = vmax.xlane.f32.xlu0 %v719
        %v721 = vpop.xlane.xlu0 %720
        %v722 = vsel %vm706, %v699, -inf
        %723 = vmax.xlane.f32.xlu0 %v722
        %v724 = vpop.xlane.xlu0 %723
        %v725 = vsel %vm706, %v702, -inf
        %726 = vmax.xlane.f32.xlu0 %v725
        %v727 = vpop.xlane.xlu0 %726
        %v728 = vsel %vm706, %v704, -inf
        %729 = vmax.xlane.f32.xlu0 %v728
        %v730 = vpop.xlane.xlu0 %729
        %v731 = vsub.f32 %v687, %v709
        %v732 = vsub.f32 %v689, %v712
        %v733 = vsub.f32 %v692, %v715
        %v734 = vsub.f32 %v694, %v718
        %v735 = vsub.f32 %v697, %v721
        %v736 = vsub.f32 %v699, %v724
        %v737 = vsub.f32 %v702, %v727
        %v738 = vsub.f32 %v704, %v730
        %v739 = vmul.f32 %v731, 1.442695
        %v740 = vpow.pop %v739
        %v741 = vmul.f32 %v732, 1.442695
        %v742 = vpow.pop %v741
        %v743 = vmul.f32 %v733, 1.442695
        %v744 = vpow.pop %v743
        %v745 = vmul.f32 %v734, 1.442695
        %v746 = vpow.pop %v745
        %v747 = vmul.f32 %v735, 1.442695
        %v748 = vpow.pop %v747
        %v749 = vmul.f32 %v736, 1.442695
        %v750 = vpow.pop %v749
        %v751 = vmul.f32 %v737, 1.442695
        %v752 = vpow.pop %v751
        %v753 = vmul.f32 %v738, 1.442695
        %v754 = vpow.pop %v753
        %v755 = vsel %vm706, %v740, 0.0
        %756 = vadd.xlane.f32.xlu0 %v755
        %v757 = vpop.xlane.xlu0 %756
        %v758 = vsel %vm706, %v742, 0.0
        %759 = vadd.xlane.f32.xlu0 %v758
        %v760 = vpop.xlane.xlu0 %759
        %v761 = vsel %vm706, %v744, 0.0
        %762 = vadd.xlane.f32.xlu0 %v761
        %v763 = vpop.xlane.xlu0 %762
        %v764 = vsel %vm706, %v746, 0.0
        %765 = vadd.xlane.f32.xlu0 %v764
        %v766 = vpop.xlane.xlu0 %765
        %v767 = vsel %vm706, %v748, 0.0
        %768 = vadd.xlane.f32.xlu0 %v767
        %v769 = vpop.xlane.xlu0 %768
        %v770 = vsel %vm706, %v750, 0.0
        %771 = vadd.xlane.f32.xlu0 %v770
        %v772 = vpop.xlane.xlu0 %771
        %v773 = vsel %vm706, %v752, 0.0
        %774 = vadd.xlane.f32.xlu0 %v773
        %v775 = vpop.xlane.xlu0 %774
        %v776 = vsel %vm706, %v754, 0.0
        %777 = vadd.xlane.f32.xlu0 %v776
        %v778 = vpop.xlane.xlu0 %777
        %v779 = vrcp.pop %v757
        %v780 = vrcp.pop %v760
        %v781 = vrcp.pop %v763
        %v782 = vrcp.pop %v766
        %v783 = vrcp.pop %v769
        %v784 = vrcp.pop %v772
        %v785 = vrcp.pop %v775
        %v786 = vrcp.pop %v778
        %v787 = vmul.f32 %v740, %v779
        %v788 = vmul.f32 %v742, %v780
        %v789 = vmul.f32 %v744, %v781
        %v790 = vmul.f32 %v746, %v782
        %v791 = vmul.f32 %v748, %v783
        %v792 = vmul.f32 %v750, %v784
        %v793 = vmul.f32 %v752, %v785
        %v794 = vmul.f32 %v754, %v786
        %v795 = vpack.c.bf16 %v788, %v787
        %v796 = vpack.c.bf16 %v790, %v789
        %v797 = vpack.c.bf16 %v792, %v791
        %v798 = vpack.c.bf16 %v794, %v793
        %799 = vrot.lane.b32.xlu0 %v599, 112
        %v800 = vpop.permute.xlu0 %799
        %801 = vrot.lane.b32.xlu0 %v600, 112
        %v802 = vpop.permute.xlu0 %801
        %803 = vrot.lane.b32.xlu0 %v601, 112
        %v804 = vpop.permute.xlu0 %803
        %805 = vrot.lane.b32.xlu0 %v602, 112
        %v806 = vpop.permute.xlu0 %805
        %v812 = vsel %vm706, %v795, 0
        %v815 = vsel %vm706, %v796, 0
        %v818 = vsel %vm706, %v797, 0
        %v821 = vsel %vm706, %v798, 0
        %823 = vmatpush.bf16.msra.mxu0 0
        %824 = vmatpush.bf16.msra.mxu0 0
        %825 = vmatpush.bf16.msra.mxu0 0
        %826 = vmatpush.bf16.msra.mxu0 0
        %827 = vmatpush.bf16.msra.mxu0 %v806
        %828 = vmatpush.bf16.msra.mxu0 %v804
        %829 = vmatpush.bf16.msra.mxu0 %v802
        %830 = vmatpush.bf16.msra.mxu0 %v800
        %831 = vmatmul.bf16.gmra.mxu0 %v812
        %v832 = vpop.f32.mrf.mxu0
        %v833 = vadd.f32 0.0, %v832
        %v834 = vpop.f32.mrf.mxu0
        %v835 = vadd.f32 0.0, %v834
        %836 = vmatmul.bf16.gmra.mxu0 %v815
        %v837 = vpop.f32.mrf.mxu0
        %v838 = vadd.f32 0.0, %v837
        %v839 = vpop.f32.mrf.mxu0
        %v840 = vadd.f32 0.0, %v839
        %841 = vmatmul.bf16.gmra.mxu0 %v818
        %v842 = vpop.f32.mrf.mxu0
        %v843 = vadd.f32 0.0, %v842
        %v844 = vpop.f32.mrf.mxu0
        %v845 = vadd.f32 0.0, %v844
        %846 = vmatmul.bf16.gmra.mxu0 %v821
        %v847 = vpop.f32.mrf.mxu0
        %v848 = vadd.f32 0.0, %v847
        %v849 = vpop.f32.mrf.mxu0
        %v850 = vadd.f32 0.0, %v849
        %851 = vdwg.mxu0
        %s852 = scalar_lea.vmem %s3, 32
        %v853 = vld [vmem:[%s852] sm:$0xf]
        %v854 = vld [vmem:[%s852 + $0x4] sm:$0xf]
        %v855 = vld [vmem:[%s852 + $0x8] sm:$0xf]
        %v856 = vld [vmem:[%s852 + $0xc] sm:$0xf]
        %v857 = vld [vmem:[%s852 + $0x10] sm:$0xf]
        %v858 = vld [vmem:[%s852 + $0x14] sm:$0xf]
        %v859 = vld [vmem:[%s852 + $0x18] sm:$0xf]
        %v860 = vld [vmem:[%s852 + $0x1c] sm:$0xf]
        %v869 = vunpack.c.l.b16 %v853
        %v870 = vunpack.c.l.b16 %v854
        %v871 = vunpack.c.l.b16 %v855
        %v872 = vunpack.c.l.b16 %v856
        %v873 = vunpack.c.l.b16 %v857
        %v874 = vunpack.c.l.b16 %v858
        %v875 = vunpack.c.l.b16 %v859
        %v876 = vunpack.c.l.b16 %v860
        %v877 = vpack.c.b16 %v870, %v869
        %v878 = vpack.c.b16 %v872, %v871
        %v879 = vpack.c.b16 %v874, %v873
        %v880 = vpack.c.b16 %v876, %v875
        %881 = vrot.lane.b32.xlu0 %v599, 104
        %v882 = vpop.permute.xlu0 %881
        %883 = vrot.lane.b32.xlu0 %v600, 104
        %v884 = vpop.permute.xlu0 %883
        %885 = vrot.lane.b32.xlu0 %v601, 104
        %v886 = vpop.permute.xlu0 %885
        %887 = vrot.lane.b32.xlu0 %v602, 104
        %v888 = vpop.permute.xlu0 %887
        %v890 = vsel %vm603, %v877, 0
        %v893 = vsel %vm603, %v878, 0
        %v896 = vsel %vm603, %v879, 0
        %v899 = vsel %vm603, %v880, 0
        %v902 = vsel %vm603, %v882, 0
        %v905 = vsel %vm603, %v884, 0
        %v908 = vsel %vm603, %v886, 0
        %v911 = vsel %vm603, %v888, 0
        %913 = vmatpush.bf16.xpose.msra.mxu0 0
        %914 = vmatpush.bf16.xpose.msra.mxu0 0
        %915 = vmatpush.bf16.xpose.msra.mxu0 0
        %916 = vmatpush.bf16.xpose.msra.mxu0 0
        %917 = vmatpush.bf16.xpose.msra.mxu0 %v911
        %918 = vmatpush.bf16.xpose.msra.mxu0 %v908
        %919 = vmatpush.bf16.xpose.msra.mxu0 %v905
        %920 = vmatpush.bf16.xpose.msra.mxu0 %v902
        %921 = vmatmul.bf16.gmra.mxu0 %v890
        %v922 = vpop.f32.mrf.mxu0
        %v923 = vadd.f32 0.0, %v922
        %v924 = vpop.f32.mrf.mxu0
        %v925 = vadd.f32 0.0, %v924
        %926 = vmatmul.bf16.gmra.mxu0 %v893
        %v927 = vpop.f32.mrf.mxu0
        %v928 = vadd.f32 0.0, %v927
        %v929 = vpop.f32.mrf.mxu0
        %v930 = vadd.f32 0.0, %v929
        %931 = vmatmul.bf16.gmra.mxu0 %v896
        %v932 = vpop.f32.mrf.mxu0
        %v933 = vadd.f32 0.0, %v932
        %v934 = vpop.f32.mrf.mxu0
        %v935 = vadd.f32 0.0, %v934
        %936 = vmatmul.bf16.gmra.mxu0 %v899
        %v937 = vpop.f32.mrf.mxu0
        %v938 = vadd.f32 0.0, %v937
        %v939 = vpop.f32.mrf.mxu0
        %v940 = vadd.f32 0.0, %v939
        %941 = vdwg.mxu0
        %942 = vrot.lane.b32.xlu0 %v599, 96
        %v943 = vpop.permute.xlu0 %942
        %944 = vrot.lane.b32.xlu0 %v600, 96
        %v945 = vpop.permute.xlu0 %944
        %946 = vrot.lane.b32.xlu0 %v601, 96
        %v947 = vpop.permute.xlu0 %946
        %948 = vrot.lane.b32.xlu0 %v602, 96
        %v949 = vpop.permute.xlu0 %948
        %v951 = vsel %vm603, %v943, 0
        %v954 = vsel %vm603, %v945, 0
        %v957 = vsel %vm603, %v947, 0
        %v960 = vsel %vm603, %v949, 0
        %962 = vmatpush.bf16.xpose.msra.mxu0 0
        %963 = vmatpush.bf16.xpose.msra.mxu0 0
        %964 = vmatpush.bf16.xpose.msra.mxu0 0
        %965 = vmatpush.bf16.xpose.msra.mxu0 0
        %966 = vmatpush.bf16.xpose.msra.mxu0 %v960
        %967 = vmatpush.bf16.xpose.msra.mxu0 %v957
        %968 = vmatpush.bf16.xpose.msra.mxu0 %v954
        %969 = vmatpush.bf16.xpose.msra.mxu0 %v951
        %970 = vmatmul.bf16.gmra.mxu0 %v902
        %v971 = vpop.f32.mrf.mxu0
        %v972 = vadd.f32 %v923, %v971
        %v973 = vpop.f32.mrf.mxu0
        %v974 = vadd.f32 %v925, %v973
        %975 = vmatmul.bf16.gmra.mxu0 %v905
        %v976 = vpop.f32.mrf.mxu0
        %v977 = vadd.f32 %v928, %v976
        %v978 = vpop.f32.mrf.mxu0
        %v979 = vadd.f32 %v930, %v978
        %980 = vmatmul.bf16.gmra.mxu0 %v908
        %v981 = vpop.f32.mrf.mxu0
        %v982 = vadd.f32 %v933, %v981
        %v983 = vpop.f32.mrf.mxu0
        %v984 = vadd.f32 %v935, %v983
        %985 = vmatmul.bf16.gmra.mxu0 %v911
        %v986 = vpop.f32.mrf.mxu0
        %v987 = vadd.f32 %v938, %v986
        %v988 = vpop.f32.mrf.mxu0
        %v989 = vadd.f32 %v940, %v988
        %990 = vdwg.mxu0
        %v991 = vsel %vm706, %v972, -inf
        %992 = vmax.xlane.f32.xlu0 %v991
        %v993 = vpop.xlane.xlu0 %992
        %v994 = vsel %vm706, %v974, -inf
        %995 = vmax.xlane.f32.xlu0 %v994
        %v996 = vpop.xlane.xlu0 %995
        %v997 = vsel %vm706, %v977, -inf
        %998 = vmax.xlane.f32.xlu0 %v997
        %v999 = vpop.xlane.xlu0 %998
        %v1000 = vsel %vm706, %v979, -inf
        %1001 = vmax.xlane.f32.xlu0 %v1000
        %v1002 = vpop.xlane.xlu0 %1001
        %v1003 = vsel %vm706, %v982, -inf
        %1004 = vmax.xlane.f32.xlu0 %v1003
        %v1005 = vpop.xlane.xlu0 %1004
        %v1006 = vsel %vm706, %v984, -inf
        %1007 = vmax.xlane.f32.xlu0 %v1006
        %v1008 = vpop.xlane.xlu0 %1007
        %v1009 = vsel %vm706, %v987, -inf
        %1010 = vmax.xlane.f32.xlu0 %v1009
        %v1011 = vpop.xlane.xlu0 %1010
        %v1012 = vsel %vm706, %v989, -inf
        %1013 = vmax.xlane.f32.xlu0 %v1012
        %v1014 = vpop.xlane.xlu0 %1013
        %v1015 = vsub.f32 %v972, %v993
        %v1016 = vsub.f32 %v974, %v996
        %v1017 = vsub.f32 %v977, %v999
        %v1018 = vsub.f32 %v979, %v1002
        %v1019 = vsub.f32 %v982, %v1005
        %v1020 = vsub.f32 %v984, %v1008
        %v1021 = vsub.f32 %v987, %v1011
        %v1022 = vsub.f32 %v989, %v1014
        %v1023 = vmul.f32 %v1015, 1.442695
        %v1024 = vpow.pop %v1023
        %v1025 = vmul.f32 %v1016, 1.442695
        %v1026 = vpow.pop %v1025
        %v1027 = vmul.f32 %v1017, 1.442695
        %v1028 = vpow.pop %v1027
        %v1029 = vmul.f32 %v1018, 1.442695
        %v1030 = vpow.pop %v1029
        %v1031 = vmul.f32 %v1019, 1.442695
        %v1032 = vpow.pop %v1031
        %v1033 = vmul.f32 %v1020, 1.442695
        %v1034 = vpow.pop %v1033
        %v1035 = vmul.f32 %v1021, 1.442695
        %v1036 = vpow.pop %v1035
        %v1037 = vmul.f32 %v1022, 1.442695
        %v1038 = vpow.pop %v1037
        %v1039 = vsel %vm706, %v1024, 0.0
        %1040 = vadd.xlane.f32.xlu0 %v1039
        %v1041 = vpop.xlane.xlu0 %1040
        %v1042 = vsel %vm706, %v1026, 0.0
        %1043 = vadd.xlane.f32.xlu0 %v1042
        %v1044 = vpop.xlane.xlu0 %1043
        %v1045 = vsel %vm706, %v1028, 0.0
        %1046 = vadd.xlane.f32.xlu0 %v1045
        %v1047 = vpop.xlane.xlu0 %1046
        %v1048 = vsel %vm706, %v1030, 0.0
        %1049 = vadd.xlane.f32.xlu0 %v1048
        %v1050 = vpop.xlane.xlu0 %1049
        %v1051 = vsel %vm706, %v1032, 0.0
        %1052 = vadd.xlane.f32.xlu0 %v1051
        %v1053 = vpop.xlane.xlu0 %1052
        %v1054 = vsel %vm706, %v1034, 0.0
        %1055 = vadd.xlane.f32.xlu0 %v1054
        %v1056 = vpop.xlane.xlu0 %1055
        %v1057 = vsel %vm706, %v1036, 0.0
        %1058 = vadd.xlane.f32.xlu0 %v1057
        %v1059 = vpop.xlane.xlu0 %1058
        %v1060 = vsel %vm706, %v1038, 0.0
        %1061 = vadd.xlane.f32.xlu0 %v1060
        %v1062 = vpop.xlane.xlu0 %1061
        %v1063 = vrcp.pop %v1041
        %v1064 = vrcp.pop %v1044
        %v1065 = vrcp.pop %v1047
        %v1066 = vrcp.pop %v1050
        %v1067 = vrcp.pop %v1053
        %v1068 = vrcp.pop %v1056
        %v1069 = vrcp.pop %v1059
        %v1070 = vrcp.pop %v1062
        %v1071 = vmul.f32 %v1024, %v1063
        %v1072 = vmul.f32 %v1026, %v1064
        %v1073 = vmul.f32 %v1028, %v1065
        %v1074 = vmul.f32 %v1030, %v1066
        %v1075 = vmul.f32 %v1032, %v1067
        %v1076 = vmul.f32 %v1034, %v1068
        %v1077 = vmul.f32 %v1036, %v1069
        %v1078 = vmul.f32 %v1038, %v1070
        %v1079 = vpack.c.bf16 %v1072, %v1071
        %v1080 = vpack.c.bf16 %v1074, %v1073
        %v1081 = vpack.c.bf16 %v1076, %v1075
        %v1082 = vpack.c.bf16 %v1078, %v1077
        %1083 = vrot.lane.b32.xlu0 %v599, 88
        %v1084 = vpop.permute.xlu0 %1083
        %1085 = vrot.lane.b32.xlu0 %v600, 88
        %v1086 = vpop.permute.xlu0 %1085
        %1087 = vrot.lane.b32.xlu0 %v601, 88
        %v1088 = vpop.permute.xlu0 %1087
        %1089 = vrot.lane.b32.xlu0 %v602, 88
        %v1090 = vpop.permute.xlu0 %1089
        %v1096 = vsel %vm706, %v1079, 0
        %v1099 = vsel %vm706, %v1080, 0
        %v1102 = vsel %vm706, %v1081, 0
        %v1105 = vsel %vm706, %v1082, 0
        %1107 = vmatpush.bf16.msra.mxu0 0
        %1108 = vmatpush.bf16.msra.mxu0 0
        %1109 = vmatpush.bf16.msra.mxu0 0
        %1110 = vmatpush.bf16.msra.mxu0 0
        %1111 = vmatpush.bf16.msra.mxu0 %v1090
        %1112 = vmatpush.bf16.msra.mxu0 %v1088
        %1113 = vmatpush.bf16.msra.mxu0 %v1086
        %1114 = vmatpush.bf16.msra.mxu0 %v1084
        %1115 = vmatmul.bf16.gmra.mxu0 %v1096
        %v1116 = vpop.f32.mrf.mxu0
        %v1117 = vadd.f32 0.0, %v1116
        %v1118 = vpop.f32.mrf.mxu0
        %v1119 = vadd.f32 0.0, %v1118
        %1120 = vmatmul.bf16.gmra.mxu0 %v1099
        %v1121 = vpop.f32.mrf.mxu0
        %v1122 = vadd.f32 0.0, %v1121
        %v1123 = vpop.f32.mrf.mxu0
        %v1124 = vadd.f32 0.0, %v1123
        %1125 = vmatmul.bf16.gmra.mxu0 %v1102
        %v1126 = vpop.f32.mrf.mxu0
        %v1127 = vadd.f32 0.0, %v1126
        %v1128 = vpop.f32.mrf.mxu0
        %v1129 = vadd.f32 0.0, %v1128
        %1130 = vmatmul.bf16.gmra.mxu0 %v1105
        %v1131 = vpop.f32.mrf.mxu0
        %v1132 = vadd.f32 0.0, %v1131
        %v1133 = vpop.f32.mrf.mxu0
        %v1134 = vadd.f32 0.0, %v1133
        %1135 = vdwg.mxu0
        %s1136 = scalar_lea.vmem %s3, 64
        %v1137 = vld [vmem:[%s1136] sm:$0xf]
        %v1138 = vld [vmem:[%s1136 + $0x4] sm:$0xf]
        %v1139 = vld [vmem:[%s1136 + $0x8] sm:$0xf]
        %v1140 = vld [vmem:[%s1136 + $0xc] sm:$0xf]
        %v1141 = vld [vmem:[%s1136 + $0x10] sm:$0xf]
        %v1142 = vld [vmem:[%s1136 + $0x14] sm:$0xf]
        %v1143 = vld [vmem:[%s1136 + $0x18] sm:$0xf]
        %v1144 = vld [vmem:[%s1136 + $0x1c] sm:$0xf]
        %v1153 = vunpack.c.l.b16 %v1137
        %v1154 = vunpack.c.l.b16 %v1138
        %v1155 = vunpack.c.l.b16 %v1139
        %v1156 = vunpack.c.l.b16 %v1140
        %v1157 = vunpack.c.l.b16 %v1141
        %v1158 = vunpack.c.l.b16 %v1142
        %v1159 = vunpack.c.l.b16 %v1143
        %v1160 = vunpack.c.l.b16 %v1144
        %v1161 = vpack.c.b16 %v1154, %v1153
        %v1162 = vpack.c.b16 %v1156, %v1155
        %v1163 = vpack.c.b16 %v1158, %v1157
        %v1164 = vpack.c.b16 %v1160, %v1159
        %1165 = vrot.lane.b32.xlu0 %v599, 80
        %v1166 = vpop.permute.xlu0 %1165
        %1167 = vrot.lane.b32.xlu0 %v600, 80
        %v1168 = vpop.permute.xlu0 %1167
        %1169 = vrot.lane.b32.xlu0 %v601, 80
        %v1170 = vpop.permute.xlu0 %1169
        %1171 = vrot.lane.b32.xlu0 %v602, 80
        %v1172 = vpop.permute.xlu0 %1171
        %v1174 = vsel %vm603, %v1161, 0
        %v1177 = vsel %vm603, %v1162, 0
        %v1180 = vsel %vm603, %v1163, 0
        %v1183 = vsel %vm603, %v1164, 0
        %v1186 = vsel %vm603, %v1166, 0
        %v1189 = vsel %vm603, %v1168, 0
        %v1192 = vsel %vm603, %v1170, 0
        %v1195 = vsel %vm603, %v1172, 0
        %1197 = vmatpush.bf16.xpose.msra.mxu0 0
        %1198 = vmatpush.bf16.xpose.msra.mxu0 0
        %1199 = vmatpush.bf16.xpose.msra.mxu0 0
        %1200 = vmatpush.bf16.xpose.msra.mxu0 0
        %1201 = vmatpush.bf16.xpose.msra.mxu0 %v1195
        %1202 = vmatpush.bf16.xpose.msra.mxu0 %v1192
        %1203 = vmatpush.bf16.xpose.msra.mxu0 %v1189
        %1204 = vmatpush.bf16.xpose.msra.mxu0 %v1186
        %1205 = vmatmul.bf16.gmra.mxu0 %v1174
        %v1206 = vpop.f32.mrf.mxu0
        %v1207 = vadd.f32 0.0, %v1206
        %v1208 = vpop.f32.mrf.mxu0
        %v1209 = vadd.f32 0.0, %v1208
        %1210 = vmatmul.bf16.gmra.mxu0 %v1177
        %v1211 = vpop.f32.mrf.mxu0
        %v1212 = vadd.f32 0.0, %v1211
        %v1213 = vpop.f32.mrf.mxu0
        %v1214 = vadd.f32 0.0, %v1213
        %1215 = vmatmul.bf16.gmra.mxu0 %v1180
        %v1216 = vpop.f32.mrf.mxu0
        %v1217 = vadd.f32 0.0, %v1216
        %v1218 = vpop.f32.mrf.mxu0
        %v1219 = vadd.f32 0.0, %v1218
        %1220 = vmatmul.bf16.gmra.mxu0 %v1183
        %v1221 = vpop.f32.mrf.mxu0
        %v1222 = vadd.f32 0.0, %v1221
        %v1223 = vpop.f32.mrf.mxu0
        %v1224 = vadd.f32 0.0, %v1223
        %1225 = vdwg.mxu0
        %1226 = vrot.lane.b32.xlu0 %v599, 72
        %v1227 = vpop.permute.xlu0 %1226
        %1228 = vrot.lane.b32.xlu0 %v600, 72
        %v1229 = vpop.permute.xlu0 %1228
        %1230 = vrot.lane.b32.xlu0 %v601, 72
        %v1231 = vpop.permute.xlu0 %1230
        %1232 = vrot.lane.b32.xlu0 %v602, 72
        %v1233 = vpop.permute.xlu0 %1232
        %v1235 = vsel %vm603, %v1227, 0
        %v1238 = vsel %vm603, %v1229, 0
        %v1241 = vsel %vm603, %v1231, 0
        %v1244 = vsel %vm603, %v1233, 0
        %1246 = vmatpush.bf16.xpose.msra.mxu0 0
        %1247 = vmatpush.bf16.xpose.msra.mxu0 0
        %1248 = vmatpush.bf16.xpose.msra.mxu0 0
        %1249 = vmatpush.bf16.xpose.msra.mxu0 0
        %1250 = vmatpush.bf16.xpose.msra.mxu0 %v1244
        %1251 = vmatpush.bf16.xpose.msra.mxu0 %v1241
        %1252 = vmatpush.bf16.xpose.msra.mxu0 %v1238
        %1253 = vmatpush.bf16.xpose.msra.mxu0 %v1235
        %1254 = vmatmul.bf16.gmra.mxu0 %v1186
        %v1255 = vpop.f32.mrf.mxu0
        %v1256 = vadd.f32 %v1207, %v1255
        %v1257 = vpop.f32.mrf.mxu0
        %v1258 = vadd.f32 %v1209, %v1257
        %1259 = vmatmul.bf16.gmra.mxu0 %v1189
        %v1260 = vpop.f32.mrf.mxu0
        %v1261 = vadd.f32 %v1212, %v1260
        %v1262 = vpop.f32.mrf.mxu0
        %v1263 = vadd.f32 %v1214, %v1262
        %1264 = vmatmul.bf16.gmra.mxu0 %v1192
        %v1265 = vpop.f32.mrf.mxu0
        %v1266 = vadd.f32 %v1217, %v1265
        %v1267 = vpop.f32.mrf.mxu0
        %v1268 = vadd.f32 %v1219, %v1267
        %1269 = vmatmul.bf16.gmra.mxu0 %v1195
        %v1270 = vpop.f32.mrf.mxu0
        %v1271 = vadd.f32 %v1222, %v1270
        %v1272 = vpop.f32.mrf.mxu0
        %v1273 = vadd.f32 %v1224, %v1272
        %1274 = vdwg.mxu0
        %v1275 = vsel %vm706, %v1256, -inf
        %1276 = vmax.xlane.f32.xlu0 %v1275
        %v1277 = vpop.xlane.xlu0 %1276
        %v1278 = vsel %vm706, %v1258, -inf
        %1279 = vmax.xlane.f32.xlu0 %v1278
        %v1280 = vpop.xlane.xlu0 %1279
        %v1281 = vsel %vm706, %v1261, -inf
        %1282 = vmax.xlane.f32.xlu0 %v1281
        %v1283 = vpop.xlane.xlu0 %1282
        %v1284 = vsel %vm706, %v1263, -inf
        %1285 = vmax.xlane.f32.xlu0 %v1284
        %v1286 = vpop.xlane.xlu0 %1285
        %v1287 = vsel %vm706, %v1266, -inf
        %1288 = vmax.xlane.f32.xlu0 %v1287
        %v1289 = vpop.xlane.xlu0 %1288
        %v1290 = vsel %vm706, %v1268, -inf
        %1291 = vmax.xlane.f32.xlu0 %v1290
        %v1292 = vpop.xlane.xlu0 %1291
        %v1293 = vsel %vm706, %v1271, -inf
        %1294 = vmax.xlane.f32.xlu0 %v1293
        %v1295 = vpop.xlane.xlu0 %1294
        %v1296 = vsel %vm706, %v1273, -inf
        %1297 = vmax.xlane.f32.xlu0 %v1296
        %v1298 = vpop.xlane.xlu0 %1297
        %v1299 = vsub.f32 %v1256, %v1277
        %v1300 = vsub.f32 %v1258, %v1280
        %v1301 = vsub.f32 %v1261, %v1283
        %v1302 = vsub.f32 %v1263, %v1286
        %v1303 = vsub.f32 %v1266, %v1289
        %v1304 = vsub.f32 %v1268, %v1292
        %v1305 = vsub.f32 %v1271, %v1295
        %v1306 = vsub.f32 %v1273, %v1298
        %v1307 = vmul.f32 %v1299, 1.442695
        %v1308 = vpow.pop %v1307
        %v1309 = vmul.f32 %v1300, 1.442695
        %v1310 = vpow.pop %v1309
        %v1311 = vmul.f32 %v1301, 1.442695
        %v1312 = vpow.pop %v1311
        %v1313 = vmul.f32 %v1302, 1.442695
        %v1314 = vpow.pop %v1313
        %v1315 = vmul.f32 %v1303, 1.442695
        %v1316 = vpow.pop %v1315
        %v1317 = vmul.f32 %v1304, 1.442695
        %v1318 = vpow.pop %v1317
        %v1319 = vmul.f32 %v1305, 1.442695
        %v1320 = vpow.pop %v1319
        %v1321 = vmul.f32 %v1306, 1.442695
        %v1322 = vpow.pop %v1321
        %v1323 = vsel %vm706, %v1308, 0.0
        %1324 = vadd.xlane.f32.xlu0 %v1323
        %v1325 = vpop.xlane.xlu0 %1324
        %v1326 = vsel %vm706, %v1310, 0.0
        %1327 = vadd.xlane.f32.xlu0 %v1326
        %v1328 = vpop.xlane.xlu0 %1327
        %v1329 = vsel %vm706, %v1312, 0.0
        %1330 = vadd.xlane.f32.xlu0 %v1329
        %v1331 = vpop.xlane.xlu0 %1330
        %v1332 = vsel %vm706, %v1314, 0.0
        %1333 = vadd.xlane.f32.xlu0 %v1332
        %v1334 = vpop.xlane.xlu0 %1333
        %v1335 = vsel %vm706, %v1316, 0.0
        %1336 = vadd.xlane.f32.xlu0 %v1335
        %v1337 = vpop.xlane.xlu0 %1336
        %v1338 = vsel %vm706, %v1318, 0.0
        %1339 = vadd.xlane.f32.xlu0 %v1338
        %v1340 = vpop.xlane.xlu0 %1339
        %v1341 = vsel %vm706, %v1320, 0.0
        %1342 = vadd.xlane.f32.xlu0 %v1341
        %v1343 = vpop.xlane.xlu0 %1342
        %v1344 = vsel %vm706, %v1322, 0.0
        %1345 = vadd.xlane.f32.xlu0 %v1344
        %v1346 = vpop.xlane.xlu0 %1345
        %v1347 = vrcp.pop %v1325
        %v1348 = vrcp.pop %v1328
        %v1349 = vrcp.pop %v1331
        %v1350 = vrcp.pop %v1334
        %v1351 = vrcp.pop %v1337
        %v1352 = vrcp.pop %v1340
        %v1353 = vrcp.pop %v1343
        %v1354 = vrcp.pop %v1346
        %v1355 = vmul.f32 %v1308, %v1347
        %v1356 = vmul.f32 %v1310, %v1348
        %v1357 = vmul.f32 %v1312, %v1349
        %v1358 = vmul.f32 %v1314, %v1350
        %v1359 = vmul.f32 %v1316, %v1351
        %v1360 = vmul.f32 %v1318, %v1352
        %v1361 = vmul.f32 %v1320, %v1353
        %v1362 = vmul.f32 %v1322, %v1354
        %v1363 = vpack.c.bf16 %v1356, %v1355
        %v1364 = vpack.c.bf16 %v1358, %v1357
        %v1365 = vpack.c.bf16 %v1360, %v1359
        %v1366 = vpack.c.bf16 %v1362, %v1361
        %1367 = vrot.lane.b32.xlu0 %v599, 64
        %v1368 = vpop.permute.xlu0 %1367
        %1369 = vrot.lane.b32.xlu0 %v600, 64
        %v1370 = vpop.permute.xlu0 %1369
        %1371 = vrot.lane.b32.xlu0 %v601, 64
        %v1372 = vpop.permute.xlu0 %1371
        %1373 = vrot.lane.b32.xlu0 %v602, 64
        %v1374 = vpop.permute.xlu0 %1373
        %v1380 = vsel %vm706, %v1363, 0
        %v1383 = vsel %vm706, %v1364, 0
        %v1386 = vsel %vm706, %v1365, 0
        %v1389 = vsel %vm706, %v1366, 0
        %1391 = vmatpush.bf16.msra.mxu0 0
        %1392 = vmatpush.bf16.msra.mxu0 0
        %1393 = vmatpush.bf16.msra.mxu0 0
        %1394 = vmatpush.bf16.msra.mxu0 0
        %1395 = vmatpush.bf16.msra.mxu0 %v1374
        %1396 = vmatpush.bf16.msra.mxu0 %v1372
        %1397 = vmatpush.bf16.msra.mxu0 %v1370
        %1398 = vmatpush.bf16.msra.mxu0 %v1368
        %1399 = vmatmul.bf16.gmra.mxu0 %v1380
        %v1400 = vpop.f32.mrf.mxu0
        %v1401 = vadd.f32 0.0, %v1400
        %v1402 = vpop.f32.mrf.mxu0
        %v1403 = vadd.f32 0.0, %v1402
        %1404 = vmatmul.bf16.gmra.mxu0 %v1383
        %v1405 = vpop.f32.mrf.mxu0
        %v1406 = vadd.f32 0.0, %v1405
        %v1407 = vpop.f32.mrf.mxu0
        %v1408 = vadd.f32 0.0, %v1407
        %1409 = vmatmul.bf16.gmra.mxu0 %v1386
        %v1410 = vpop.f32.mrf.mxu0
        %v1411 = vadd.f32 0.0, %v1410
        %v1412 = vpop.f32.mrf.mxu0
        %v1413 = vadd.f32 0.0, %v1412
        %1414 = vmatmul.bf16.gmra.mxu0 %v1389
        %v1415 = vpop.f32.mrf.mxu0
        %v1416 = vadd.f32 0.0, %v1415
        %v1417 = vpop.f32.mrf.mxu0
        %v1418 = vadd.f32 0.0, %v1417
        %1419 = vdwg.mxu0
        %s1420 = scalar_lea.vmem %s3, 96
        %v1421 = vld [vmem:[%s1420] sm:$0xf]
        %v1422 = vld [vmem:[%s1420 + $0x4] sm:$0xf]
        %v1423 = vld [vmem:[%s1420 + $0x8] sm:$0xf]
        %v1424 = vld [vmem:[%s1420 + $0xc] sm:$0xf]
        %v1425 = vld [vmem:[%s1420 + $0x10] sm:$0xf]
        %v1426 = vld [vmem:[%s1420 + $0x14] sm:$0xf]
        %v1427 = vld [vmem:[%s1420 + $0x18] sm:$0xf]
        %v1428 = vld [vmem:[%s1420 + $0x1c] sm:$0xf]
        %v1437 = vunpack.c.l.b16 %v1421
        %v1438 = vunpack.c.l.b16 %v1422
        %v1439 = vunpack.c.l.b16 %v1423
        %v1440 = vunpack.c.l.b16 %v1424
        %v1441 = vunpack.c.l.b16 %v1425
        %v1442 = vunpack.c.l.b16 %v1426
        %v1443 = vunpack.c.l.b16 %v1427
        %v1444 = vunpack.c.l.b16 %v1428
        %v1445 = vpack.c.b16 %v1438, %v1437
        %v1446 = vpack.c.b16 %v1440, %v1439
        %v1447 = vpack.c.b16 %v1442, %v1441
        %v1448 = vpack.c.b16 %v1444, %v1443
        %1449 = vrot.lane.b32.xlu0 %v599, 56
        %v1450 = vpop.permute.xlu0 %1449
        %1451 = vrot.lane.b32.xlu0 %v600, 56
        %v1452 = vpop.permute.xlu0 %1451
        %1453 = vrot.lane.b32.xlu0 %v601, 56
        %v1454 = vpop.permute.xlu0 %1453
        %1455 = vrot.lane.b32.xlu0 %v602, 56
        %v1456 = vpop.permute.xlu0 %1455
        %v1458 = vsel %vm603, %v1445, 0
        %v1461 = vsel %vm603, %v1446, 0
        %v1464 = vsel %vm603, %v1447, 0
        %v1467 = vsel %vm603, %v1448, 0
        %v1470 = vsel %vm603, %v1450, 0
        %v1473 = vsel %vm603, %v1452, 0
        %v1476 = vsel %vm603, %v1454, 0
        %v1479 = vsel %vm603, %v1456, 0
        %1481 = vmatpush.bf16.xpose.msra.mxu0 0
        %1482 = vmatpush.bf16.xpose.msra.mxu0 0
        %1483 = vmatpush.bf16.xpose.msra.mxu0 0
        %1484 = vmatpush.bf16.xpose.msra.mxu0 0
        %1485 = vmatpush.bf16.xpose.msra.mxu0 %v1479
        %1486 = vmatpush.bf16.xpose.msra.mxu0 %v1476
        %1487 = vmatpush.bf16.xpose.msra.mxu0 %v1473
        %1488 = vmatpush.bf16.xpose.msra.mxu0 %v1470
        %1489 = vmatmul.bf16.gmra.mxu0 %v1458
        %v1490 = vpop.f32.mrf.mxu0
        %v1491 = vadd.f32 0.0, %v1490
        %v1492 = vpop.f32.mrf.mxu0
        %v1493 = vadd.f32 0.0, %v1492
        %1494 = vmatmul.bf16.gmra.mxu0 %v1461
        %v1495 = vpop.f32.mrf.mxu0
        %v1496 = vadd.f32 0.0, %v1495
        %v1497 = vpop.f32.mrf.mxu0
        %v1498 = vadd.f32 0.0, %v1497
        %1499 = vmatmul.bf16.gmra.mxu0 %v1464
        %v1500 = vpop.f32.mrf.mxu0
        %v1501 = vadd.f32 0.0, %v1500
        %v1502 = vpop.f32.mrf.mxu0
        %v1503 = vadd.f32 0.0, %v1502
        %1504 = vmatmul.bf16.gmra.mxu0 %v1467
        %v1505 = vpop.f32.mrf.mxu0
        %v1506 = vadd.f32 0.0, %v1505
        %v1507 = vpop.f32.mrf.mxu0
        %v1508 = vadd.f32 0.0, %v1507
        %1509 = vdwg.mxu0
        %1510 = vrot.lane.b32.xlu0 %v599, 48
        %v1511 = vpop.permute.xlu0 %1510
        %1512 = vrot.lane.b32.xlu0 %v600, 48
        %v1513 = vpop.permute.xlu0 %1512
        %1514 = vrot.lane.b32.xlu0 %v601, 48
        %v1515 = vpop.permute.xlu0 %1514
        %1516 = vrot.lane.b32.xlu0 %v602, 48
        %v1517 = vpop.permute.xlu0 %1516
        %v1519 = vsel %vm603, %v1511, 0
        %v1522 = vsel %vm603, %v1513, 0
        %v1525 = vsel %vm603, %v1515, 0
        %v1528 = vsel %vm603, %v1517, 0
        %1530 = vmatpush.bf16.xpose.msra.mxu0 0
        %1531 = vmatpush.bf16.xpose.msra.mxu0 0
        %1532 = vmatpush.bf16.xpose.msra.mxu0 0
        %1533 = vmatpush.bf16.xpose.msra.mxu0 0
        %1534 = vmatpush.bf16.xpose.msra.mxu0 %v1528
        %1535 = vmatpush.bf16.xpose.msra.mxu0 %v1525
        %1536 = vmatpush.bf16.xpose.msra.mxu0 %v1522
        %1537 = vmatpush.bf16.xpose.msra.mxu0 %v1519
        %1538 = vmatmul.bf16.gmra.mxu0 %v1470
        %v1539 = vpop.f32.mrf.mxu0
        %v1540 = vadd.f32 %v1491, %v1539
        %v1541 = vpop.f32.mrf.mxu0
        %v1542 = vadd.f32 %v1493, %v1541
        %1543 = vmatmul.bf16.gmra.mxu0 %v1473
        %v1544 = vpop.f32.mrf.mxu0
        %v1545 = vadd.f32 %v1496, %v1544
        %v1546 = vpop.f32.mrf.mxu0
        %v1547 = vadd.f32 %v1498, %v1546
        %1548 = vmatmul.bf16.gmra.mxu0 %v1476
        %v1549 = vpop.f32.mrf.mxu0
        %v1550 = vadd.f32 %v1501, %v1549
        %v1551 = vpop.f32.mrf.mxu0
        %v1552 = vadd.f32 %v1503, %v1551
        %1553 = vmatmul.bf16.gmra.mxu0 %v1479
        %v1554 = vpop.f32.mrf.mxu0
        %v1555 = vadd.f32 %v1506, %v1554
        %v1556 = vpop.f32.mrf.mxu0
        %v1557 = vadd.f32 %v1508, %v1556
        %1558 = vdwg.mxu0
        %v1559 = vsel %vm706, %v1540, -inf
        %1560 = vmax.xlane.f32.xlu0 %v1559
        %v1561 = vpop.xlane.xlu0 %1560
        %v1562 = vsel %vm706, %v1542, -inf
        %1563 = vmax.xlane.f32.xlu0 %v1562
        %v1564 = vpop.xlane.xlu0 %1563
        %v1565 = vsel %vm706, %v1545, -inf
        %1566 = vmax.xlane.f32.xlu0 %v1565
        %v1567 = vpop.xlane.xlu0 %1566
        %v1568 = vsel %vm706, %v1547, -inf
        %1569 = vmax.xlane.f32.xlu0 %v1568
        %v1570 = vpop.xlane.xlu0 %1569
        %v1571 = vsel %vm706, %v1550, -inf
        %1572 = vmax.xlane.f32.xlu0 %v1571
        %v1573 = vpop.xlane.xlu0 %1572
        %v1574 = vsel %vm706, %v1552, -inf
        %1575 = vmax.xlane.f32.xlu0 %v1574
        %v1576 = vpop.xlane.xlu0 %1575
        %v1577 = vsel %vm706, %v1555, -inf
        %1578 = vmax.xlane.f32.xlu0 %v1577
        %v1579 = vpop.xlane.xlu0 %1578
        %v1580 = vsel %vm706, %v1557, -inf
        %1581 = vmax.xlane.f32.xlu0 %v1580
        %v1582 = vpop.xlane.xlu0 %1581
        %v1583 = vsub.f32 %v1540, %v1561
        %v1584 = vsub.f32 %v1542, %v1564
        %v1585 = vsub.f32 %v1545, %v1567
        %v1586 = vsub.f32 %v1547, %v1570
        %v1587 = vsub.f32 %v1550, %v1573
        %v1588 = vsub.f32 %v1552, %v1576
        %v1589 = vsub.f32 %v1555, %v1579
        %v1590 = vsub.f32 %v1557, %v1582
        %v1591 = vmul.f32 %v1583, 1.442695
        %v1592 = vpow.pop %v1591
        %v1593 = vmul.f32 %v1584, 1.442695
        %v1594 = vpow.pop %v1593
        %v1595 = vmul.f32 %v1585, 1.442695
        %v1596 = vpow.pop %v1595
        %v1597 = vmul.f32 %v1586, 1.442695
        %v1598 = vpow.pop %v1597
        %v1599 = vmul.f32 %v1587, 1.442695
        %v1600 = vpow.pop %v1599
        %v1601 = vmul.f32 %v1588, 1.442695
        %v1602 = vpow.pop %v1601
        %v1603 = vmul.f32 %v1589, 1.442695
        %v1604 = vpow.pop %v1603
        %v1605 = vmul.f32 %v1590, 1.442695
        %v1606 = vpow.pop %v1605
        %v1607 = vsel %vm706, %v1592, 0.0
        %1608 = vadd.xlane.f32.xlu0 %v1607
        %v1609 = vpop.xlane.xlu0 %1608
        %v1610 = vsel %vm706, %v1594, 0.0
        %1611 = vadd.xlane.f32.xlu0 %v1610
        %v1612 = vpop.xlane.xlu0 %1611
        %v1613 = vsel %vm706, %v1596, 0.0
        %1614 = vadd.xlane.f32.xlu0 %v1613
        %v1615 = vpop.xlane.xlu0 %1614
        %v1616 = vsel %vm706, %v1598, 0.0
        %1617 = vadd.xlane.f32.xlu0 %v1616
        %v1618 = vpop.xlane.xlu0 %1617
        %v1619 = vsel %vm706, %v1600, 0.0
        %1620 = vadd.xlane.f32.xlu0 %v1619
        %v1621 = vpop.xlane.xlu0 %1620
        %v1622 = vsel %vm706, %v1602, 0.0
        %1623 = vadd.xlane.f32.xlu0 %v1622
        %v1624 = vpop.xlane.xlu0 %1623
        %v1625 = vsel %vm706, %v1604, 0.0
        %1626 = vadd.xlane.f32.xlu0 %v1625
        %v1627 = vpop.xlane.xlu0 %1626
        %v1628 = vsel %vm706, %v1606, 0.0
        %1629 = vadd.xlane.f32.xlu0 %v1628
        %v1630 = vpop.xlane.xlu0 %1629
        %v1631 = vrcp.pop %v1609
        %v1632 = vrcp.pop %v1612
        %v1633 = vrcp.pop %v1615
        %v1634 = vrcp.pop %v1618
        %v1635 = vrcp.pop %v1621
        %v1636 = vrcp.pop %v1624
        %v1637 = vrcp.pop %v1627
        %v1638 = vrcp.pop %v1630
        %v1639 = vmul.f32 %v1592, %v1631
        %v1640 = vmul.f32 %v1594, %v1632
        %v1641 = vmul.f32 %v1596, %v1633
        %v1642 = vmul.f32 %v1598, %v1634
        %v1643 = vmul.f32 %v1600, %v1635
        %v1644 = vmul.f32 %v1602, %v1636
        %v1645 = vmul.f32 %v1604, %v1637
        %v1646 = vmul.f32 %v1606, %v1638
        %v1647 = vpack.c.bf16 %v1640, %v1639
        %v1648 = vpack.c.bf16 %v1642, %v1641
        %v1649 = vpack.c.bf16 %v1644, %v1643
        %v1650 = vpack.c.bf16 %v1646, %v1645
        %1651 = vrot.lane.b32.xlu0 %v599, 40
        %v1652 = vpop.permute.xlu0 %1651
        %1653 = vrot.lane.b32.xlu0 %v600, 40
        %v1654 = vpop.permute.xlu0 %1653
        %1655 = vrot.lane.b32.xlu0 %v601, 40
        %v1656 = vpop.permute.xlu0 %1655
        %1657 = vrot.lane.b32.xlu0 %v602, 40
        %v1658 = vpop.permute.xlu0 %1657
        %v1664 = vsel %vm706, %v1647, 0
        %v1667 = vsel %vm706, %v1648, 0
        %v1670 = vsel %vm706, %v1649, 0
        %v1673 = vsel %vm706, %v1650, 0
        %1675 = vmatpush.bf16.msra.mxu0 0
        %1676 = vmatpush.bf16.msra.mxu0 0
        %1677 = vmatpush.bf16.msra.mxu0 0
        %1678 = vmatpush.bf16.msra.mxu0 0
        %1679 = vmatpush.bf16.msra.mxu0 %v1658
        %1680 = vmatpush.bf16.msra.mxu0 %v1656
        %1681 = vmatpush.bf16.msra.mxu0 %v1654
        %1682 = vmatpush.bf16.msra.mxu0 %v1652
        %1683 = vmatmul.bf16.gmra.mxu0 %v1664
        %v1684 = vpop.f32.mrf.mxu0
        %v1685 = vadd.f32 0.0, %v1684
        %v1686 = vpop.f32.mrf.mxu0
        %v1687 = vadd.f32 0.0, %v1686
        %1688 = vmatmul.bf16.gmra.mxu0 %v1667
        %v1689 = vpop.f32.mrf.mxu0
        %v1690 = vadd.f32 0.0, %v1689
        %v1691 = vpop.f32.mrf.mxu0
        %v1692 = vadd.f32 0.0, %v1691
        %1693 = vmatmul.bf16.gmra.mxu0 %v1670
        %v1694 = vpop.f32.mrf.mxu0
        %v1695 = vadd.f32 0.0, %v1694
        %v1696 = vpop.f32.mrf.mxu0
        %v1697 = vadd.f32 0.0, %v1696
        %1698 = vmatmul.bf16.gmra.mxu0 %v1673
        %v1699 = vpop.f32.mrf.mxu0
        %v1700 = vadd.f32 0.0, %v1699
        %v1701 = vpop.f32.mrf.mxu0
        %v1702 = vadd.f32 0.0, %v1701
        %1703 = vdwg.mxu0
        %1712 = vrot.lane.b32.xlu0 %v1117, 8
        %v1713 = vpop.permute.xlu0 %1712
        %1714 = vrot.lane.b32.xlu0 %v1119, 8
        %v1715 = vpop.permute.xlu0 %1714
        %1716 = vrot.lane.b32.xlu0 %v1122, 8
        %v1717 = vpop.permute.xlu0 %1716
        %1718 = vrot.lane.b32.xlu0 %v1124, 8
        %v1719 = vpop.permute.xlu0 %1718
        %1720 = vrot.lane.b32.xlu0 %v1127, 8
        %v1721 = vpop.permute.xlu0 %1720
        %1722 = vrot.lane.b32.xlu0 %v1129, 8
        %v1723 = vpop.permute.xlu0 %1722
        %1724 = vrot.lane.b32.xlu0 %v1132, 8
        %v1725 = vpop.permute.xlu0 %1724
        %1726 = vrot.lane.b32.xlu0 %v1134, 8
        %v1727 = vpop.permute.xlu0 %1726
        %1744 = vrot.lane.b32.xlu0 %v1401, 16
        %v1745 = vpop.permute.xlu0 %1744
        %1746 = vrot.lane.b32.xlu0 %v1403, 16
        %v1747 = vpop.permute.xlu0 %1746
        %1748 = vrot.lane.b32.xlu0 %v1406, 16
        %v1749 = vpop.permute.xlu0 %1748
        %1750 = vrot.lane.b32.xlu0 %v1408, 16
        %v1751 = vpop.permute.xlu0 %1750
        %1752 = vrot.lane.b32.xlu0 %v1411, 16
        %v1753 = vpop.permute.xlu0 %1752
        %1754 = vrot.lane.b32.xlu0 %v1413, 16
        %v1755 = vpop.permute.xlu0 %1754
        %1756 = vrot.lane.b32.xlu0 %v1416, 16
        %v1757 = vpop.permute.xlu0 %1756
        %1758 = vrot.lane.b32.xlu0 %v1418, 16
        %v1759 = vpop.permute.xlu0 %1758
        %1776 = vrot.lane.b32.xlu0 %v1685, 24
        %v1777 = vpop.permute.xlu0 %1776
        %1778 = vrot.lane.b32.xlu0 %v1687, 24
        %v1779 = vpop.permute.xlu0 %1778
        %1780 = vrot.lane.b32.xlu0 %v1690, 24
        %v1781 = vpop.permute.xlu0 %1780
        %1782 = vrot.lane.b32.xlu0 %v1692, 24
        %v1783 = vpop.permute.xlu0 %1782
        %1784 = vrot.lane.b32.xlu0 %v1695, 24
        %v1785 = vpop.permute.xlu0 %1784
        %1786 = vrot.lane.b32.xlu0 %v1697, 24
        %v1787 = vpop.permute.xlu0 %1786
        %1788 = vrot.lane.b32.xlu0 %v1700, 24
        %v1789 = vpop.permute.xlu0 %1788
        %1790 = vrot.lane.b32.xlu0 %v1702, 24
        %v1791 = vpop.permute.xlu0 %1790
        %v1800 = vsel %vm603, %v833, %v1713
        %v1801 = vsel %vm603, %v835, %v1715
        %v1802 = vsel %vm603, %v838, %v1717
        %v1803 = vsel %vm603, %v840, %v1719
        %v1804 = vsel %vm603, %v843, %v1721
        %v1805 = vsel %vm603, %v845, %v1723
        %v1806 = vsel %vm603, %v848, %v1725
        %v1807 = vsel %vm603, %v850, %v1727
        %v1808 = vsel %vm350, %v1800, %v1745
        %v1809 = vsel %vm350, %v1801, %v1747
        %v1810 = vsel %vm350, %v1802, %v1749
        %v1811 = vsel %vm350, %v1803, %v1751
        %v1812 = vsel %vm350, %v1804, %v1753
        %v1813 = vsel %vm350, %v1805, %v1755
        %v1814 = vsel %vm350, %v1806, %v1757
        %v1815 = vsel %vm350, %v1807, %v1759
        %vm1816 = vcmask 195584
        %v1817 = vsel %vm1816, %v1808, %v1777
        %v1818 = vsel %vm1816, %v1809, %v1779
        %v1819 = vsel %vm1816, %v1810, %v1781
        %v1820 = vsel %vm1816, %v1811, %v1783
        %v1821 = vsel %vm1816, %v1812, %v1785
        %v1822 = vsel %vm1816, %v1813, %v1787
        %v1823 = vsel %vm1816, %v1814, %v1789
        %v1824 = vsel %vm1816, %v1815, %v1791
        %v1833 = vunpack.c.l.b16 %v547
        %v1834 = vunpack.c.l.b16 %v548
        %v1835 = vunpack.c.l.b16 %v549
        %v1836 = vunpack.c.l.b16 %v550
        %v1837 = vunpack.c.l.b16 %v551
        %v1838 = vunpack.c.l.b16 %v552
        %v1839 = vunpack.c.l.b16 %v553
        %v1840 = vunpack.c.l.b16 %v554
        %v1841 = vpack.c.b16 %v1834, %v1833
        %v1842 = vpack.c.b16 %v1836, %v1835
        %v1843 = vpack.c.b16 %v1838, %v1837
        %v1844 = vpack.c.b16 %v1840, %v1839
        %v1846 = vsel %vm603, %v1841, 0
        %v1849 = vsel %vm603, %v1842, 0
        %v1852 = vsel %vm603, %v1843, 0
        %v1855 = vsel %vm603, %v1844, 0
        %1857 = vmatpush.bf16.xpose.msra.mxu0 0
        %1858 = vmatpush.bf16.xpose.msra.mxu0 0
        %1859 = vmatpush.bf16.xpose.msra.mxu0 0
        %1860 = vmatpush.bf16.xpose.msra.mxu0 0
        %1861 = vmatpush.bf16.xpose.msra.mxu0 %v1855
        %1862 = vmatpush.bf16.xpose.msra.mxu0 %v1852
        %1863 = vmatpush.bf16.xpose.msra.mxu0 %v1849
        %1864 = vmatpush.bf16.xpose.msra.mxu0 %v1846
        %1865 = vmatmul.bf16.gmra.mxu0 %v605
        %v1866 = vpop.f32.mrf.mxu0
        %v1867 = vadd.f32 0.0, %v1866
        %v1868 = vpop.f32.mrf.mxu0
        %v1869 = vadd.f32 0.0, %v1868
        %1870 = vmatmul.bf16.gmra.mxu0 %v608
        %v1871 = vpop.f32.mrf.mxu0
        %v1872 = vadd.f32 0.0, %v1871
        %v1873 = vpop.f32.mrf.mxu0
        %v1874 = vadd.f32 0.0, %v1873
        %1875 = vmatmul.bf16.gmra.mxu0 %v611
        %v1876 = vpop.f32.mrf.mxu0
        %v1877 = vadd.f32 0.0, %v1876
        %v1878 = vpop.f32.mrf.mxu0
        %v1879 = vadd.f32 0.0, %v1878
        %1880 = vmatmul.bf16.gmra.mxu0 %v614
        %v1881 = vpop.f32.mrf.mxu0
        %v1882 = vadd.f32 0.0, %v1881
        %v1883 = vpop.f32.mrf.mxu0
        %v1884 = vadd.f32 0.0, %v1883
        %1885 = vdwg.mxu0
        %1886 = vrot.lane.b32.xlu0 %v1841, 120
        %v1887 = vpop.permute.xlu0 %1886
        %1888 = vrot.lane.b32.xlu0 %v1842, 120
        %v1889 = vpop.permute.xlu0 %1888
        %1890 = vrot.lane.b32.xlu0 %v1843, 120
        %v1891 = vpop.permute.xlu0 %1890
        %1892 = vrot.lane.b32.xlu0 %v1844, 120
        %v1893 = vpop.permute.xlu0 %1892
        %v1895 = vsel %vm603, %v1887, 0
        %v1898 = vsel %vm603, %v1889, 0
        %v1901 = vsel %vm603, %v1891, 0
        %v1904 = vsel %vm603, %v1893, 0
        %1906 = vmatpush.bf16.xpose.msra.mxu0 0
        %1907 = vmatpush.bf16.xpose.msra.mxu0 0
        %1908 = vmatpush.bf16.xpose.msra.mxu0 0
        %1909 = vmatpush.bf16.xpose.msra.mxu0 0
        %1910 = vmatpush.bf16.xpose.msra.mxu0 %v1904
        %1911 = vmatpush.bf16.xpose.msra.mxu0 %v1901
        %1912 = vmatpush.bf16.xpose.msra.mxu0 %v1898
        %1913 = vmatpush.bf16.xpose.msra.mxu0 %v1895
        %1914 = vmatmul.bf16.gmra.mxu0 %v1846
        %v1915 = vpop.f32.mrf.mxu0
        %v1916 = vadd.f32 %v1867, %v1915
        %v1917 = vpop.f32.mrf.mxu0
        %v1918 = vadd.f32 %v1869, %v1917
        %1919 = vmatmul.bf16.gmra.mxu0 %v1849
        %v1920 = vpop.f32.mrf.mxu0
        %v1921 = vadd.f32 %v1872, %v1920
        %v1922 = vpop.f32.mrf.mxu0
        %v1923 = vadd.f32 %v1874, %v1922
        %1924 = vmatmul.bf16.gmra.mxu0 %v1852
        %v1925 = vpop.f32.mrf.mxu0
        %v1926 = vadd.f32 %v1877, %v1925
        %v1927 = vpop.f32.mrf.mxu0
        %v1928 = vadd.f32 %v1879, %v1927
        %1929 = vmatmul.bf16.gmra.mxu0 %v1855
        %v1930 = vpop.f32.mrf.mxu0
        %v1931 = vadd.f32 %v1882, %v1930
        %v1932 = vpop.f32.mrf.mxu0
        %v1933 = vadd.f32 %v1884, %v1932
        %1934 = vdwg.mxu0
        %v1935 = vsel %vm706, %v1916, -inf
        %1936 = vmax.xlane.f32.xlu0 %v1935
        %v1937 = vpop.xlane.xlu0 %1936
        %v1938 = vsel %vm706, %v1918, -inf
        %1939 = vmax.xlane.f32.xlu0 %v1938
        %v1940 = vpop.xlane.xlu0 %1939
        %v1941 = vsel %vm706, %v1921, -inf
        %1942 = vmax.xlane.f32.xlu0 %v1941
        %v1943 = vpop.xlane.xlu0 %1942
        %v1944 = vsel %vm706, %v1923, -inf
        %1945 = vmax.xlane.f32.xlu0 %v1944
        %v1946 = vpop.xlane.xlu0 %1945
        %v1947 = vsel %vm706, %v1926, -inf
        %1948 = vmax.xlane.f32.xlu0 %v1947
        %v1949 = vpop.xlane.xlu0 %1948
        %v1950 = vsel %vm706, %v1928, -inf
        %1951 = vmax.xlane.f32.xlu0 %v1950
        %v1952 = vpop.xlane.xlu0 %1951
        %v1953 = vsel %vm706, %v1931, -inf
        %1954 = vmax.xlane.f32.xlu0 %v1953
        %v1955 = vpop.xlane.xlu0 %1954
        %v1956 = vsel %vm706, %v1933, -inf
        %1957 = vmax.xlane.f32.xlu0 %v1956
        %v1958 = vpop.xlane.xlu0 %1957
        %v1959 = vsub.f32 %v1916, %v1937
        %v1960 = vsub.f32 %v1918, %v1940
        %v1961 = vsub.f32 %v1921, %v1943
        %v1962 = vsub.f32 %v1923, %v1946
        %v1963 = vsub.f32 %v1926, %v1949
        %v1964 = vsub.f32 %v1928, %v1952
        %v1965 = vsub.f32 %v1931, %v1955
        %v1966 = vsub.f32 %v1933, %v1958
        %v1967 = vmul.f32 %v1959, 1.442695
        %v1968 = vpow.pop %v1967
        %v1969 = vmul.f32 %v1960, 1.442695
        %v1970 = vpow.pop %v1969
        %v1971 = vmul.f32 %v1961, 1.442695
        %v1972 = vpow.pop %v1971
        %v1973 = vmul.f32 %v1962, 1.442695
        %v1974 = vpow.pop %v1973
        %v1975 = vmul.f32 %v1963, 1.442695
        %v1976 = vpow.pop %v1975
        %v1977 = vmul.f32 %v1964, 1.442695
        %v1978 = vpow.pop %v1977
        %v1979 = vmul.f32 %v1965, 1.442695
        %v1980 = vpow.pop %v1979
        %v1981 = vmul.f32 %v1966, 1.442695
        %v1982 = vpow.pop %v1981
        %v1983 = vsel %vm706, %v1968, 0.0
        %1984 = vadd.xlane.f32.xlu0 %v1983
        %v1985 = vpop.xlane.xlu0 %1984
        %v1986 = vsel %vm706, %v1970, 0.0
        %1987 = vadd.xlane.f32.xlu0 %v1986
        %v1988 = vpop.xlane.xlu0 %1987
        %v1989 = vsel %vm706, %v1972, 0.0
        %1990 = vadd.xlane.f32.xlu0 %v1989
        %v1991 = vpop.xlane.xlu0 %1990
        %v1992 = vsel %vm706, %v1974, 0.0
        %1993 = vadd.xlane.f32.xlu0 %v1992
        %v1994 = vpop.xlane.xlu0 %1993
        %v1995 = vsel %vm706, %v1976, 0.0
        %1996 = vadd.xlane.f32.xlu0 %v1995
        %v1997 = vpop.xlane.xlu0 %1996
        %v1998 = vsel %vm706, %v1978, 0.0
        %1999 = vadd.xlane.f32.xlu0 %v1998
        %v2000 = vpop.xlane.xlu0 %1999
        %v2001 = vsel %vm706, %v1980, 0.0
        %2002 = vadd.xlane.f32.xlu0 %v2001
        %v2003 = vpop.xlane.xlu0 %2002
        %v2004 = vsel %vm706, %v1982, 0.0
        %2005 = vadd.xlane.f32.xlu0 %v2004
        %v2006 = vpop.xlane.xlu0 %2005
        %v2007 = vrcp.pop %v1985
        %v2008 = vrcp.pop %v1988
        %v2009 = vrcp.pop %v1991
        %v2010 = vrcp.pop %v1994
        %v2011 = vrcp.pop %v1997
        %v2012 = vrcp.pop %v2000
        %v2013 = vrcp.pop %v2003
        %v2014 = vrcp.pop %v2006
        %v2015 = vmul.f32 %v1968, %v2007
        %v2016 = vmul.f32 %v1970, %v2008
        %v2017 = vmul.f32 %v1972, %v2009
        %v2018 = vmul.f32 %v1974, %v2010
        %v2019 = vmul.f32 %v1976, %v2011
        %v2020 = vmul.f32 %v1978, %v2012
        %v2021 = vmul.f32 %v1980, %v2013
        %v2022 = vmul.f32 %v1982, %v2014
        %v2023 = vpack.c.bf16 %v2016, %v2015
        %v2024 = vpack.c.bf16 %v2018, %v2017
        %v2025 = vpack.c.bf16 %v2020, %v2019
        %v2026 = vpack.c.bf16 %v2022, %v2021
        %2027 = vrot.lane.b32.xlu0 %v1841, 112
        %v2028 = vpop.permute.xlu0 %2027
        %2029 = vrot.lane.b32.xlu0 %v1842, 112
        %v2030 = vpop.permute.xlu0 %2029
        %2031 = vrot.lane.b32.xlu0 %v1843, 112
        %v2032 = vpop.permute.xlu0 %2031
        %2033 = vrot.lane.b32.xlu0 %v1844, 112
        %v2034 = vpop.permute.xlu0 %2033
        %v2040 = vsel %vm706, %v2023, 0
        %v2043 = vsel %vm706, %v2024, 0
        %v2046 = vsel %vm706, %v2025, 0
        %v2049 = vsel %vm706, %v2026, 0
        %2051 = vmatpush.bf16.msra.mxu0 0
        %2052 = vmatpush.bf16.msra.mxu0 0
        %2053 = vmatpush.bf16.msra.mxu0 0
        %2054 = vmatpush.bf16.msra.mxu0 0
        %2055 = vmatpush.bf16.msra.mxu0 %v2034
        %2056 = vmatpush.bf16.msra.mxu0 %v2032
        %2057 = vmatpush.bf16.msra.mxu0 %v2030
        %2058 = vmatpush.bf16.msra.mxu0 %v2028
        %2059 = vmatmul.bf16.gmra.mxu0 %v2040
        %v2060 = vpop.f32.mrf.mxu0
        %v2061 = vadd.f32 0.0, %v2060
        %v2062 = vpop.f32.mrf.mxu0
        %v2063 = vadd.f32 0.0, %v2062
        %2064 = vmatmul.bf16.gmra.mxu0 %v2043
        %v2065 = vpop.f32.mrf.mxu0
        %v2066 = vadd.f32 0.0, %v2065
        %v2067 = vpop.f32.mrf.mxu0
        %v2068 = vadd.f32 0.0, %v2067
        %2069 = vmatmul.bf16.gmra.mxu0 %v2046
        %v2070 = vpop.f32.mrf.mxu0
        %v2071 = vadd.f32 0.0, %v2070
        %v2072 = vpop.f32.mrf.mxu0
        %v2073 = vadd.f32 0.0, %v2072
        %2074 = vmatmul.bf16.gmra.mxu0 %v2049
        %v2075 = vpop.f32.mrf.mxu0
        %v2076 = vadd.f32 0.0, %v2075
        %v2077 = vpop.f32.mrf.mxu0
        %v2078 = vadd.f32 0.0, %v2077
        %2079 = vdwg.mxu0
        %2080 = vrot.lane.b32.xlu0 %v1841, 104
        %v2081 = vpop.permute.xlu0 %2080
        %2082 = vrot.lane.b32.xlu0 %v1842, 104
        %v2083 = vpop.permute.xlu0 %2082
        %2084 = vrot.lane.b32.xlu0 %v1843, 104
        %v2085 = vpop.permute.xlu0 %2084
        %2086 = vrot.lane.b32.xlu0 %v1844, 104
        %v2087 = vpop.permute.xlu0 %2086
        %v2089 = vsel %vm603, %v2081, 0
        %v2092 = vsel %vm603, %v2083, 0
        %v2095 = vsel %vm603, %v2085, 0
        %v2098 = vsel %vm603, %v2087, 0
        %2100 = vmatpush.bf16.xpose.msra.mxu0 0
        %2101 = vmatpush.bf16.xpose.msra.mxu0 0
        %2102 = vmatpush.bf16.xpose.msra.mxu0 0
        %2103 = vmatpush.bf16.xpose.msra.mxu0 0
        %2104 = vmatpush.bf16.xpose.msra.mxu0 %v2098
        %2105 = vmatpush.bf16.xpose.msra.mxu0 %v2095
        %2106 = vmatpush.bf16.xpose.msra.mxu0 %v2092
        %2107 = vmatpush.bf16.xpose.msra.mxu0 %v2089
        %2108 = vmatmul.bf16.gmra.mxu0 %v890
        %v2109 = vpop.f32.mrf.mxu0
        %v2110 = vadd.f32 0.0, %v2109
        %v2111 = vpop.f32.mrf.mxu0
        %v2112 = vadd.f32 0.0, %v2111
        %2113 = vmatmul.bf16.gmra.mxu0 %v893
        %v2114 = vpop.f32.mrf.mxu0
        %v2115 = vadd.f32 0.0, %v2114
        %v2116 = vpop.f32.mrf.mxu0
        %v2117 = vadd.f32 0.0, %v2116
        %2118 = vmatmul.bf16.gmra.mxu0 %v896
        %v2119 = vpop.f32.mrf.mxu0
        %v2120 = vadd.f32 0.0, %v2119
        %v2121 = vpop.f32.mrf.mxu0
        %v2122 = vadd.f32 0.0, %v2121
        %2123 = vmatmul.bf16.gmra.mxu0 %v899
        %v2124 = vpop.f32.mrf.mxu0
        %v2125 = vadd.f32 0.0, %v2124
        %v2126 = vpop.f32.mrf.mxu0
        %v2127 = vadd.f32 0.0, %v2126
        %2128 = vdwg.mxu0
        %2129 = vrot.lane.b32.xlu0 %v1841, 96
        %v2130 = vpop.permute.xlu0 %2129
        %2131 = vrot.lane.b32.xlu0 %v1842, 96
        %v2132 = vpop.permute.xlu0 %2131
        %2133 = vrot.lane.b32.xlu0 %v1843, 96
        %v2134 = vpop.permute.xlu0 %2133
        %2135 = vrot.lane.b32.xlu0 %v1844, 96
        %v2136 = vpop.permute.xlu0 %2135
        %v2138 = vsel %vm603, %v2130, 0
        %v2141 = vsel %vm603, %v2132, 0
        %v2144 = vsel %vm603, %v2134, 0
        %v2147 = vsel %vm603, %v2136, 0
        %2149 = vmatpush.bf16.xpose.msra.mxu0 0
        %2150 = vmatpush.bf16.xpose.msra.mxu0 0
        %2151 = vmatpush.bf16.xpose.msra.mxu0 0
        %2152 = vmatpush.bf16.xpose.msra.mxu0 0
        %2153 = vmatpush.bf16.xpose.msra.mxu0 %v2147
        %2154 = vmatpush.bf16.xpose.msra.mxu0 %v2144
        %2155 = vmatpush.bf16.xpose.msra.mxu0 %v2141
        %2156 = vmatpush.bf16.xpose.msra.mxu0 %v2138
        %2157 = vmatmul.bf16.gmra.mxu0 %v2089
        %v2158 = vpop.f32.mrf.mxu0
        %v2159 = vadd.f32 %v2110, %v2158
        %v2160 = vpop.f32.mrf.mxu0
        %v2161 = vadd.f32 %v2112, %v2160
        %2162 = vmatmul.bf16.gmra.mxu0 %v2092
        %v2163 = vpop.f32.mrf.mxu0
        %v2164 = vadd.f32 %v2115, %v2163
        %v2165 = vpop.f32.mrf.mxu0
        %v2166 = vadd.f32 %v2117, %v2165
        %2167 = vmatmul.bf16.gmra.mxu0 %v2095
        %v2168 = vpop.f32.mrf.mxu0
        %v2169 = vadd.f32 %v2120, %v2168
        %v2170 = vpop.f32.mrf.mxu0
        %v2171 = vadd.f32 %v2122, %v2170
        %2172 = vmatmul.bf16.gmra.mxu0 %v2098
        %v2173 = vpop.f32.mrf.mxu0
        %v2174 = vadd.f32 %v2125, %v2173
        %v2175 = vpop.f32.mrf.mxu0
        %v2176 = vadd.f32 %v2127, %v2175
        %2177 = vdwg.mxu0
        %v2178 = vsel %vm706, %v2159, -inf
        %2179 = vmax.xlane.f32.xlu0 %v2178
        %v2180 = vpop.xlane.xlu0 %2179
        %v2181 = vsel %vm706, %v2161, -inf
        %2182 = vmax.xlane.f32.xlu0 %v2181
        %v2183 = vpop.xlane.xlu0 %2182
        %v2184 = vsel %vm706, %v2164, -inf
        %2185 = vmax.xlane.f32.xlu0 %v2184
        %v2186 = vpop.xlane.xlu0 %2185
        %v2187 = vsel %vm706, %v2166, -inf
        %2188 = vmax.xlane.f32.xlu0 %v2187
        %v2189 = vpop.xlane.xlu0 %2188
        %v2190 = vsel %vm706, %v2169, -inf
        %2191 = vmax.xlane.f32.xlu0 %v2190
        %v2192 = vpop.xlane.xlu0 %2191
        %v2193 = vsel %vm706, %v2171, -inf
        %2194 = vmax.xlane.f32.xlu0 %v2193
        %v2195 = vpop.xlane.xlu0 %2194
        %v2196 = vsel %vm706, %v2174, -inf
        %2197 = vmax.xlane.f32.xlu0 %v2196
        %v2198 = vpop.xlane.xlu0 %2197
        %v2199 = vsel %vm706, %v2176, -inf
        %2200 = vmax.xlane.f32.xlu0 %v2199
        %v2201 = vpop.xlane.xlu0 %2200
        %v2202 = vsub.f32 %v2159, %v2180
        %v2203 = vsub.f32 %v2161, %v2183
        %v2204 = vsub.f32 %v2164, %v2186
        %v2205 = vsub.f32 %v2166, %v2189
        %v2206 = vsub.f32 %v2169, %v2192
        %v2207 = vsub.f32 %v2171, %v2195
        %v2208 = vsub.f32 %v2174, %v2198
        %v2209 = vsub.f32 %v2176, %v2201
        %v2210 = vmul.f32 %v2202, 1.442695
        %v2211 = vpow.pop %v2210
        %v2212 = vmul.f32 %v2203, 1.442695
        %v2213 = vpow.pop %v2212
        %v2214 = vmul.f32 %v2204, 1.442695
        %v2215 = vpow.pop %v2214
        %v2216 = vmul.f32 %v2205, 1.442695
        %v2217 = vpow.pop %v2216
        %v2218 = vmul.f32 %v2206, 1.442695
        %v2219 = vpow.pop %v2218
        %v2220 = vmul.f32 %v2207, 1.442695
        %v2221 = vpow.pop %v2220
        %v2222 = vmul.f32 %v2208, 1.442695
        %v2223 = vpow.pop %v2222
        %v2224 = vmul.f32 %v2209, 1.442695
        %v2225 = vpow.pop %v2224
        %v2226 = vsel %vm706, %v2211, 0.0
        %2227 = vadd.xlane.f32.xlu0 %v2226
        %v2228 = vpop.xlane.xlu0 %2227
        %v2229 = vsel %vm706, %v2213, 0.0
        %2230 = vadd.xlane.f32.xlu0 %v2229
        %v2231 = vpop.xlane.xlu0 %2230
        %v2232 = vsel %vm706, %v2215, 0.0
        %2233 = vadd.xlane.f32.xlu0 %v2232
        %v2234 = vpop.xlane.xlu0 %2233
        %v2235 = vsel %vm706, %v2217, 0.0
        %2236 = vadd.xlane.f32.xlu0 %v2235
        %v2237 = vpop.xlane.xlu0 %2236
        %v2238 = vsel %vm706, %v2219, 0.0
        %2239 = vadd.xlane.f32.xlu0 %v2238
        %v2240 = vpop.xlane.xlu0 %2239
        %v2241 = vsel %vm706, %v2221, 0.0
        %2242 = vadd.xlane.f32.xlu0 %v2241
        %v2243 = vpop.xlane.xlu0 %2242
        %v2244 = vsel %vm706, %v2223, 0.0
        %2245 = vadd.xlane.f32.xlu0 %v2244
        %v2246 = vpop.xlane.xlu0 %2245
        %v2247 = vsel %vm706, %v2225, 0.0
        %2248 = vadd.xlane.f32.xlu0 %v2247
        %v2249 = vpop.xlane.xlu0 %2248
        %v2250 = vrcp.pop %v2228
        %v2251 = vrcp.pop %v2231
        %v2252 = vrcp.pop %v2234
        %v2253 = vrcp.pop %v2237
        %v2254 = vrcp.pop %v2240
        %v2255 = vrcp.pop %v2243
        %v2256 = vrcp.pop %v2246
        %v2257 = vrcp.pop %v2249
        %v2258 = vmul.f32 %v2211, %v2250
        %v2259 = vmul.f32 %v2213, %v2251
        %v2260 = vmul.f32 %v2215, %v2252
        %v2261 = vmul.f32 %v2217, %v2253
        %v2262 = vmul.f32 %v2219, %v2254
        %v2263 = vmul.f32 %v2221, %v2255
        %v2264 = vmul.f32 %v2223, %v2256
        %v2265 = vmul.f32 %v2225, %v2257
        %v2266 = vpack.c.bf16 %v2259, %v2258
        %v2267 = vpack.c.bf16 %v2261, %v2260
        %v2268 = vpack.c.bf16 %v2263, %v2262
        %v2269 = vpack.c.bf16 %v2265, %v2264
        %2270 = vrot.lane.b32.xlu0 %v1841, 88
        %v2271 = vpop.permute.xlu0 %2270
        %2272 = vrot.lane.b32.xlu0 %v1842, 88
        %v2273 = vpop.permute.xlu0 %2272
        %2274 = vrot.lane.b32.xlu0 %v1843, 88
        %v2275 = vpop.permute.xlu0 %2274
        %2276 = vrot.lane.b32.xlu0 %v1844, 88
        %v2277 = vpop.permute.xlu0 %2276
        %v2283 = vsel %vm706, %v2266, 0
        %v2286 = vsel %vm706, %v2267, 0
        %v2289 = vsel %vm706, %v2268, 0
        %v2292 = vsel %vm706, %v2269, 0
        %2294 = vmatpush.bf16.msra.mxu0 0
        %2295 = vmatpush.bf16.msra.mxu0 0
        %2296 = vmatpush.bf16.msra.mxu0 0
        %2297 = vmatpush.bf16.msra.mxu0 0
        %2298 = vmatpush.bf16.msra.mxu0 %v2277
        %2299 = vmatpush.bf16.msra.mxu0 %v2275
        %2300 = vmatpush.bf16.msra.mxu0 %v2273
        %2301 = vmatpush.bf16.msra.mxu0 %v2271
        %2302 = vmatmul.bf16.gmra.mxu0 %v2283
        %v2303 = vpop.f32.mrf.mxu0
        %v2304 = vadd.f32 0.0, %v2303
        %v2305 = vpop.f32.mrf.mxu0
        %v2306 = vadd.f32 0.0, %v2305
        %2307 = vmatmul.bf16.gmra.mxu0 %v2286
        %v2308 = vpop.f32.mrf.mxu0
        %v2309 = vadd.f32 0.0, %v2308
        %v2310 = vpop.f32.mrf.mxu0
        %v2311 = vadd.f32 0.0, %v2310
        %2312 = vmatmul.bf16.gmra.mxu0 %v2289
        %v2313 = vpop.f32.mrf.mxu0
        %v2314 = vadd.f32 0.0, %v2313
        %v2315 = vpop.f32.mrf.mxu0
        %v2316 = vadd.f32 0.0, %v2315
        %2317 = vmatmul.bf16.gmra.mxu0 %v2292
        %v2318 = vpop.f32.mrf.mxu0
        %v2319 = vadd.f32 0.0, %v2318
        %v2320 = vpop.f32.mrf.mxu0
        %v2321 = vadd.f32 0.0, %v2320
        %2322 = vdwg.mxu0
        %2323 = vrot.lane.b32.xlu0 %v1841, 80
        %v2324 = vpop.permute.xlu0 %2323
        %2325 = vrot.lane.b32.xlu0 %v1842, 80
        %v2326 = vpop.permute.xlu0 %2325
        %2327 = vrot.lane.b32.xlu0 %v1843, 80
        %v2328 = vpop.permute.xlu0 %2327
        %2329 = vrot.lane.b32.xlu0 %v1844, 80
        %v2330 = vpop.permute.xlu0 %2329
        %v2332 = vsel %vm603, %v2324, 0
        %v2335 = vsel %vm603, %v2326, 0
        %v2338 = vsel %vm603, %v2328, 0
        %v2341 = vsel %vm603, %v2330, 0
        %2343 = vmatpush.bf16.xpose.msra.mxu0 0
        %2344 = vmatpush.bf16.xpose.msra.mxu0 0
        %2345 = vmatpush.bf16.xpose.msra.mxu0 0
        %2346 = vmatpush.bf16.xpose.msra.mxu0 0
        %2347 = vmatpush.bf16.xpose.msra.mxu0 %v2341
        %2348 = vmatpush.bf16.xpose.msra.mxu0 %v2338
        %2349 = vmatpush.bf16.xpose.msra.mxu0 %v2335
        %2350 = vmatpush.bf16.xpose.msra.mxu0 %v2332
        %2351 = vmatmul.bf16.gmra.mxu0 %v1174
        %v2352 = vpop.f32.mrf.mxu0
        %v2353 = vadd.f32 0.0, %v2352
        %v2354 = vpop.f32.mrf.mxu0
        %v2355 = vadd.f32 0.0, %v2354
        %2356 = vmatmul.bf16.gmra.mxu0 %v1177
        %v2357 = vpop.f32.mrf.mxu0
        %v2358 = vadd.f32 0.0, %v2357
        %v2359 = vpop.f32.mrf.mxu0
        %v2360 = vadd.f32 0.0, %v2359
        %2361 = vmatmul.bf16.gmra.mxu0 %v1180
        %v2362 = vpop.f32.mrf.mxu0
        %v2363 = vadd.f32 0.0, %v2362
        %v2364 = vpop.f32.mrf.mxu0
        %v2365 = vadd.f32 0.0, %v2364
        %2366 = vmatmul.bf16.gmra.mxu0 %v1183
        %v2367 = vpop.f32.mrf.mxu0
        %v2368 = vadd.f32 0.0, %v2367
        %v2369 = vpop.f32.mrf.mxu0
        %v2370 = vadd.f32 0.0, %v2369
        %2371 = vdwg.mxu0
        %2372 = vrot.lane.b32.xlu0 %v1841, 72
        %v2373 = vpop.permute.xlu0 %2372
        %2374 = vrot.lane.b32.xlu0 %v1842, 72
        %v2375 = vpop.permute.xlu0 %2374
        %2376 = vrot.lane.b32.xlu0 %v1843, 72
        %v2377 = vpop.permute.xlu0 %2376
        %2378 = vrot.lane.b32.xlu0 %v1844, 72
        %v2379 = vpop.permute.xlu0 %2378
        %v2381 = vsel %vm603, %v2373, 0
        %v2384 = vsel %vm603, %v2375, 0
        %v2387 = vsel %vm603, %v2377, 0
        %v2390 = vsel %vm603, %v2379, 0
        %2392 = vmatpush.bf16.xpose.msra.mxu0 0
        %2393 = vmatpush.bf16.xpose.msra.mxu0 0
        %2394 = vmatpush.bf16.xpose.msra.mxu0 0
        %2395 = vmatpush.bf16.xpose.msra.mxu0 0
        %2396 = vmatpush.bf16.xpose.msra.mxu0 %v2390
        %2397 = vmatpush.bf16.xpose.msra.mxu0 %v2387
        %2398 = vmatpush.bf16.xpose.msra.mxu0 %v2384
        %2399 = vmatpush.bf16.xpose.msra.mxu0 %v2381
        %2400 = vmatmul.bf16.gmra.mxu0 %v2332
        %v2401 = vpop.f32.mrf.mxu0
        %v2402 = vadd.f32 %v2353, %v2401
        %v2403 = vpop.f32.mrf.mxu0
        %v2404 = vadd.f32 %v2355, %v2403
        %2405 = vmatmul.bf16.gmra.mxu0 %v2335
        %v2406 = vpop.f32.mrf.mxu0
        %v2407 = vadd.f32 %v2358, %v2406
        %v2408 = vpop.f32.mrf.mxu0
        %v2409 = vadd.f32 %v2360, %v2408
        %2410 = vmatmul.bf16.gmra.mxu0 %v2338
        %v2411 = vpop.f32.mrf.mxu0
        %v2412 = vadd.f32 %v2363, %v2411
        %v2413 = vpop.f32.mrf.mxu0
        %v2414 = vadd.f32 %v2365, %v2413
        %2415 = vmatmul.bf16.gmra.mxu0 %v2341
        %v2416 = vpop.f32.mrf.mxu0
        %v2417 = vadd.f32 %v2368, %v2416
        %v2418 = vpop.f32.mrf.mxu0
        %v2419 = vadd.f32 %v2370, %v2418
        %2420 = vdwg.mxu0
        %v2421 = vsel %vm706, %v2402, -inf
        %2422 = vmax.xlane.f32.xlu0 %v2421
        %v2423 = vpop.xlane.xlu0 %2422
        %v2424 = vsel %vm706, %v2404, -inf
        %2425 = vmax.xlane.f32.xlu0 %v2424
        %v2426 = vpop.xlane.xlu0 %2425
        %v2427 = vsel %vm706, %v2407, -inf
        %2428 = vmax.xlane.f32.xlu0 %v2427
        %v2429 = vpop.xlane.xlu0 %2428
        %v2430 = vsel %vm706, %v2409, -inf
        %2431 = vmax.xlane.f32.xlu0 %v2430
        %v2432 = vpop.xlane.xlu0 %2431
        %v2433 = vsel %vm706, %v2412, -inf
        %2434 = vmax.xlane.f32.xlu0 %v2433
        %v2435 = vpop.xlane.xlu0 %2434
        %v2436 = vsel %vm706, %v2414, -inf
        %2437 = vmax.xlane.f32.xlu0 %v2436
        %v2438 = vpop.xlane.xlu0 %2437
        %v2439 = vsel %vm706, %v2417, -inf
        %2440 = vmax.xlane.f32.xlu0 %v2439
        %v2441 = vpop.xlane.xlu0 %2440
        %v2442 = vsel %vm706, %v2419, -inf
        %2443 = vmax.xlane.f32.xlu0 %v2442
        %v2444 = vpop.xlane.xlu0 %2443
        %v2445 = vsub.f32 %v2402, %v2423
        %v2446 = vsub.f32 %v2404, %v2426
        %v2447 = vsub.f32 %v2407, %v2429
        %v2448 = vsub.f32 %v2409, %v2432
        %v2449 = vsub.f32 %v2412, %v2435
        %v2450 = vsub.f32 %v2414, %v2438
        %v2451 = vsub.f32 %v2417, %v2441
        %v2452 = vsub.f32 %v2419, %v2444
        %v2453 = vmul.f32 %v2445, 1.442695
        %v2454 = vpow.pop %v2453
        %v2455 = vmul.f32 %v2446, 1.442695
        %v2456 = vpow.pop %v2455
        %v2457 = vmul.f32 %v2447, 1.442695
        %v2458 = vpow.pop %v2457
        %v2459 = vmul.f32 %v2448, 1.442695
        %v2460 = vpow.pop %v2459
        %v2461 = vmul.f32 %v2449, 1.442695
        %v2462 = vpow.pop %v2461
        %v2463 = vmul.f32 %v2450, 1.442695
        %v2464 = vpow.pop %v2463
        %v2465 = vmul.f32 %v2451, 1.442695
        %v2466 = vpow.pop %v2465
        %v2467 = vmul.f32 %v2452, 1.442695
        %v2468 = vpow.pop %v2467
        %v2469 = vsel %vm706, %v2454, 0.0
        %2470 = vadd.xlane.f32.xlu0 %v2469
        %v2471 = vpop.xlane.xlu0 %2470
        %v2472 = vsel %vm706, %v2456, 0.0
        %2473 = vadd.xlane.f32.xlu0 %v2472
        %v2474 = vpop.xlane.xlu0 %2473
        %v2475 = vsel %vm706, %v2458, 0.0
        %2476 = vadd.xlane.f32.xlu0 %v2475
        %v2477 = vpop.xlane.xlu0 %2476
        %v2478 = vsel %vm706, %v2460, 0.0
        %2479 = vadd.xlane.f32.xlu0 %v2478
        %v2480 = vpop.xlane.xlu0 %2479
        %v2481 = vsel %vm706, %v2462, 0.0
        %2482 = vadd.xlane.f32.xlu0 %v2481
        %v2483 = vpop.xlane.xlu0 %2482
        %v2484 = vsel %vm706, %v2464, 0.0
        %2485 = vadd.xlane.f32.xlu0 %v2484
        %v2486 = vpop.xlane.xlu0 %2485
        %v2487 = vsel %vm706, %v2466, 0.0
        %2488 = vadd.xlane.f32.xlu0 %v2487
        %v2489 = vpop.xlane.xlu0 %2488
        %v2490 = vsel %vm706, %v2468, 0.0
        %2491 = vadd.xlane.f32.xlu0 %v2490
        %v2492 = vpop.xlane.xlu0 %2491
        %v2493 = vrcp.pop %v2471
        %v2494 = vrcp.pop %v2474
        %v2495 = vrcp.pop %v2477
        %v2496 = vrcp.pop %v2480
        %v2497 = vrcp.pop %v2483
        %v2498 = vrcp.pop %v2486
        %v2499 = vrcp.pop %v2489
        %v2500 = vrcp.pop %v2492
        %v2501 = vmul.f32 %v2454, %v2493
        %v2502 = vmul.f32 %v2456, %v2494
        %v2503 = vmul.f32 %v2458, %v2495
        %v2504 = vmul.f32 %v2460, %v2496
        %v2505 = vmul.f32 %v2462, %v2497
        %v2506 = vmul.f32 %v2464, %v2498
        %v2507 = vmul.f32 %v2466, %v2499
        %v2508 = vmul.f32 %v2468, %v2500
        %v2509 = vpack.c.bf16 %v2502, %v2501
        %v2510 = vpack.c.bf16 %v2504, %v2503
        %v2511 = vpack.c.bf16 %v2506, %v2505
        %v2512 = vpack.c.bf16 %v2508, %v2507
        %2513 = vrot.lane.b32.xlu0 %v1841, 64
        %v2514 = vpop.permute.xlu0 %2513
        %2515 = vrot.lane.b32.xlu0 %v1842, 64
        %v2516 = vpop.permute.xlu0 %2515
        %2517 = vrot.lane.b32.xlu0 %v1843, 64
        %v2518 = vpop.permute.xlu0 %2517
        %2519 = vrot.lane.b32.xlu0 %v1844, 64
        %v2520 = vpop.permute.xlu0 %2519
        %v2526 = vsel %vm706, %v2509, 0
        %v2529 = vsel %vm706, %v2510, 0
        %v2532 = vsel %vm706, %v2511, 0
        %v2535 = vsel %vm706, %v2512, 0
        %2537 = vmatpush.bf16.msra.mxu0 0
        %2538 = vmatpush.bf16.msra.mxu0 0
        %2539 = vmatpush.bf16.msra.mxu0 0
        %2540 = vmatpush.bf16.msra.mxu0 0
        %2541 = vmatpush.bf16.msra.mxu0 %v2520
        %2542 = vmatpush.bf16.msra.mxu0 %v2518
        %2543 = vmatpush.bf16.msra.mxu0 %v2516
        %2544 = vmatpush.bf16.msra.mxu0 %v2514
        %2545 = vmatmul.bf16.gmra.mxu0 %v2526
        %v2546 = vpop.f32.mrf.mxu0
        %v2547 = vadd.f32 0.0, %v2546
        %v2548 = vpop.f32.mrf.mxu0
        %v2549 = vadd.f32 0.0, %v2548
        %2550 = vmatmul.bf16.gmra.mxu0 %v2529
        %v2551 = vpop.f32.mrf.mxu0
        %v2552 = vadd.f32 0.0, %v2551
        %v2553 = vpop.f32.mrf.mxu0
        %v2554 = vadd.f32 0.0, %v2553
        %2555 = vmatmul.bf16.gmra.mxu0 %v2532
        %v2556 = vpop.f32.mrf.mxu0
        %v2557 = vadd.f32 0.0, %v2556
        %v2558 = vpop.f32.mrf.mxu0
        %v2559 = vadd.f32 0.0, %v2558
        %2560 = vmatmul.bf16.gmra.mxu0 %v2535
        %v2561 = vpop.f32.mrf.mxu0
        %v2562 = vadd.f32 0.0, %v2561
        %v2563 = vpop.f32.mrf.mxu0
        %v2564 = vadd.f32 0.0, %v2563
        %2565 = vdwg.mxu0
        %2566 = vrot.lane.b32.xlu0 %v1841, 56
        %v2567 = vpop.permute.xlu0 %2566
        %2568 = vrot.lane.b32.xlu0 %v1842, 56
        %v2569 = vpop.permute.xlu0 %2568
        %2570 = vrot.lane.b32.xlu0 %v1843, 56
        %v2571 = vpop.permute.xlu0 %2570
        %2572 = vrot.lane.b32.xlu0 %v1844, 56
        %v2573 = vpop.permute.xlu0 %2572
        %v2575 = vsel %vm603, %v2567, 0
        %v2578 = vsel %vm603, %v2569, 0
        %v2581 = vsel %vm603, %v2571, 0
        %v2584 = vsel %vm603, %v2573, 0
        %2586 = vmatpush.bf16.xpose.msra.mxu0 0
        %2587 = vmatpush.bf16.xpose.msra.mxu0 0
        %2588 = vmatpush.bf16.xpose.msra.mxu0 0
        %2589 = vmatpush.bf16.xpose.msra.mxu0 0
        %2590 = vmatpush.bf16.xpose.msra.mxu0 %v2584
        %2591 = vmatpush.bf16.xpose.msra.mxu0 %v2581
        %2592 = vmatpush.bf16.xpose.msra.mxu0 %v2578
        %2593 = vmatpush.bf16.xpose.msra.mxu0 %v2575
        %2594 = vmatmul.bf16.gmra.mxu0 %v1458
        %v2595 = vpop.f32.mrf.mxu0
        %v2596 = vadd.f32 0.0, %v2595
        %v2597 = vpop.f32.mrf.mxu0
        %v2598 = vadd.f32 0.0, %v2597
        %2599 = vmatmul.bf16.gmra.mxu0 %v1461
        %v2600 = vpop.f32.mrf.mxu0
        %v2601 = vadd.f32 0.0, %v2600
        %v2602 = vpop.f32.mrf.mxu0
        %v2603 = vadd.f32 0.0, %v2602
        %2604 = vmatmul.bf16.gmra.mxu0 %v1464
        %v2605 = vpop.f32.mrf.mxu0
        %v2606 = vadd.f32 0.0, %v2605
        %v2607 = vpop.f32.mrf.mxu0
        %v2608 = vadd.f32 0.0, %v2607
        %2609 = vmatmul.bf16.gmra.mxu0 %v1467
        %v2610 = vpop.f32.mrf.mxu0
        %v2611 = vadd.f32 0.0, %v2610
        %v2612 = vpop.f32.mrf.mxu0
        %v2613 = vadd.f32 0.0, %v2612
        %2614 = vdwg.mxu0
        %2615 = vrot.lane.b32.xlu0 %v1841, 48
        %v2616 = vpop.permute.xlu0 %2615
        %2617 = vrot.lane.b32.xlu0 %v1842, 48
        %v2618 = vpop.permute.xlu0 %2617
        %2619 = vrot.lane.b32.xlu0 %v1843, 48
        %v2620 = vpop.permute.xlu0 %2619
        %2621 = vrot.lane.b32.xlu0 %v1844, 48
        %v2622 = vpop.permute.xlu0 %2621
        %v2624 = vsel %vm603, %v2616, 0
        %v2627 = vsel %vm603, %v2618, 0
        %v2630 = vsel %vm603, %v2620, 0
        %v2633 = vsel %vm603, %v2622, 0
        %2635 = vmatpush.bf16.xpose.msra.mxu0 0
        %2636 = vmatpush.bf16.xpose.msra.mxu0 0
        %2637 = vmatpush.bf16.xpose.msra.mxu0 0
        %2638 = vmatpush.bf16.xpose.msra.mxu0 0
        %2639 = vmatpush.bf16.xpose.msra.mxu0 %v2633
        %2640 = vmatpush.bf16.xpose.msra.mxu0 %v2630
        %2641 = vmatpush.bf16.xpose.msra.mxu0 %v2627
        %2642 = vmatpush.bf16.xpose.msra.mxu0 %v2624
        %2643 = vmatmul.bf16.gmra.mxu0 %v2575
        %v2644 = vpop.f32.mrf.mxu0
        %v2645 = vadd.f32 %v2596, %v2644
        %v2646 = vpop.f32.mrf.mxu0
        %v2647 = vadd.f32 %v2598, %v2646
        %2648 = vmatmul.bf16.gmra.mxu0 %v2578
        %v2649 = vpop.f32.mrf.mxu0
        %v2650 = vadd.f32 %v2601, %v2649
        %v2651 = vpop.f32.mrf.mxu0
        %v2652 = vadd.f32 %v2603, %v2651
        %2653 = vmatmul.bf16.gmra.mxu0 %v2581
        %v2654 = vpop.f32.mrf.mxu0
        %v2655 = vadd.f32 %v2606, %v2654
        %v2656 = vpop.f32.mrf.mxu0
        %v2657 = vadd.f32 %v2608, %v2656
        %2658 = vmatmul.bf16.gmra.mxu0 %v2584
        %v2659 = vpop.f32.mrf.mxu0
        %v2660 = vadd.f32 %v2611, %v2659
        %v2661 = vpop.f32.mrf.mxu0
        %v2662 = vadd.f32 %v2613, %v2661
        %2663 = vdwg.mxu0
        %v2664 = vsel %vm706, %v2645, -inf
        %2665 = vmax.xlane.f32.xlu0 %v2664
        %v2666 = vpop.xlane.xlu0 %2665
        %v2667 = vsel %vm706, %v2647, -inf
        %2668 = vmax.xlane.f32.xlu0 %v2667
        %v2669 = vpop.xlane.xlu0 %2668
        %v2670 = vsel %vm706, %v2650, -inf
        %2671 = vmax.xlane.f32.xlu0 %v2670
        %v2672 = vpop.xlane.xlu0 %2671
        %v2673 = vsel %vm706, %v2652, -inf
        %2674 = vmax.xlane.f32.xlu0 %v2673
        %v2675 = vpop.xlane.xlu0 %2674
        %v2676 = vsel %vm706, %v2655, -inf
        %2677 = vmax.xlane.f32.xlu0 %v2676
        %v2678 = vpop.xlane.xlu0 %2677
        %v2679 = vsel %vm706, %v2657, -inf
        %2680 = vmax.xlane.f32.xlu0 %v2679
        %v2681 = vpop.xlane.xlu0 %2680
        %v2682 = vsel %vm706, %v2660, -inf
        %2683 = vmax.xlane.f32.xlu0 %v2682
        %v2684 = vpop.xlane.xlu0 %2683
        %v2685 = vsel %vm706, %v2662, -inf
        %2686 = vmax.xlane.f32.xlu0 %v2685
        %v2687 = vpop.xlane.xlu0 %2686
        %v2688 = vsub.f32 %v2645, %v2666
        %v2689 = vsub.f32 %v2647, %v2669
        %v2690 = vsub.f32 %v2650, %v2672
        %v2691 = vsub.f32 %v2652, %v2675
        %v2692 = vsub.f32 %v2655, %v2678
        %v2693 = vsub.f32 %v2657, %v2681
        %v2694 = vsub.f32 %v2660, %v2684
        %v2695 = vsub.f32 %v2662, %v2687
        %v2696 = vmul.f32 %v2688, 1.442695
        %v2697 = vpow.pop %v2696
        %v2698 = vmul.f32 %v2689, 1.442695
        %v2699 = vpow.pop %v2698
        %v2700 = vmul.f32 %v2690, 1.442695
        %v2701 = vpow.pop %v2700
        %v2702 = vmul.f32 %v2691, 1.442695
        %v2703 = vpow.pop %v2702
        %v2704 = vmul.f32 %v2692, 1.442695
        %v2705 = vpow.pop %v2704
        %v2706 = vmul.f32 %v2693, 1.442695
        %v2707 = vpow.pop %v2706
        %v2708 = vmul.f32 %v2694, 1.442695
        %v2709 = vpow.pop %v2708
        %v2710 = vmul.f32 %v2695, 1.442695
        %v2711 = vpow.pop %v2710
        %v2712 = vsel %vm706, %v2697, 0.0
        %2713 = vadd.xlane.f32.xlu0 %v2712
        %v2714 = vpop.xlane.xlu0 %2713
        %v2715 = vsel %vm706, %v2699, 0.0
        %2716 = vadd.xlane.f32.xlu0 %v2715
        %v2717 = vpop.xlane.xlu0 %2716
        %v2718 = vsel %vm706, %v2701, 0.0
        %2719 = vadd.xlane.f32.xlu0 %v2718
        %v2720 = vpop.xlane.xlu0 %2719
        %v2721 = vsel %vm706, %v2703, 0.0
        %2722 = vadd.xlane.f32.xlu0 %v2721
        %v2723 = vpop.xlane.xlu0 %2722
        %v2724 = vsel %vm706, %v2705, 0.0
        %2725 = vadd.xlane.f32.xlu0 %v2724
        %v2726 = vpop.xlane.xlu0 %2725
        %v2727 = vsel %vm706, %v2707, 0.0
        %2728 = vadd.xlane.f32.xlu0 %v2727
        %v2729 = vpop.xlane.xlu0 %2728
        %v2730 = vsel %vm706, %v2709, 0.0
        %2731 = vadd.xlane.f32.xlu0 %v2730
        %v2732 = vpop.xlane.xlu0 %2731
        %v2733 = vsel %vm706, %v2711, 0.0
        %2734 = vadd.xlane.f32.xlu0 %v2733
        %v2735 = vpop.xlane.xlu0 %2734
        %v2736 = vrcp.pop %v2714
        %v2737 = vrcp.pop %v2717
        %v2738 = vrcp.pop %v2720
        %v2739 = vrcp.pop %v2723
        %v2740 = vrcp.pop %v2726
        %v2741 = vrcp.pop %v2729
        %v2742 = vrcp.pop %v2732
        %v2743 = vrcp.pop %v2735
        %v2744 = vmul.f32 %v2697, %v2736
        %v2745 = vmul.f32 %v2699, %v2737
        %v2746 = vmul.f32 %v2701, %v2738
        %v2747 = vmul.f32 %v2703, %v2739
        %v2748 = vmul.f32 %v2705, %v2740
        %v2749 = vmul.f32 %v2707, %v2741
        %v2750 = vmul.f32 %v2709, %v2742
        %v2751 = vmul.f32 %v2711, %v2743
        %v2752 = vpack.c.bf16 %v2745, %v2744
        %v2753 = vpack.c.bf16 %v2747, %v2746
        %v2754 = vpack.c.bf16 %v2749, %v2748
        %v2755 = vpack.c.bf16 %v2751, %v2750
        %2756 = vrot.lane.b32.xlu0 %v1841, 40
        %v2757 = vpop.permute.xlu0 %2756
        %2758 = vrot.lane.b32.xlu0 %v1842, 40
        %v2759 = vpop.permute.xlu0 %2758
        %2760 = vrot.lane.b32.xlu0 %v1843, 40
        %v2761 = vpop.permute.xlu0 %2760
        %2762 = vrot.lane.b32.xlu0 %v1844, 40
        %v2763 = vpop.permute.xlu0 %2762
        %v2769 = vsel %vm706, %v2752, 0
        %v2772 = vsel %vm706, %v2753, 0
        %v2775 = vsel %vm706, %v2754, 0
        %v2778 = vsel %vm706, %v2755, 0
        %2780 = vmatpush.bf16.msra.mxu0 0
        %2781 = vmatpush.bf16.msra.mxu0 0
        %2782 = vmatpush.bf16.msra.mxu0 0
        %2783 = vmatpush.bf16.msra.mxu0 0
        %2784 = vmatpush.bf16.msra.mxu0 %v2763
        %2785 = vmatpush.bf16.msra.mxu0 %v2761
        %2786 = vmatpush.bf16.msra.mxu0 %v2759
        %2787 = vmatpush.bf16.msra.mxu0 %v2757
        %2788 = vmatmul.bf16.gmra.mxu0 %v2769
        %v2789 = vpop.f32.mrf.mxu0
        %v2790 = vadd.f32 0.0, %v2789
        %v2791 = vpop.f32.mrf.mxu0
        %v2792 = vadd.f32 0.0, %v2791
        %2793 = vmatmul.bf16.gmra.mxu0 %v2772
        %v2794 = vpop.f32.mrf.mxu0
        %v2795 = vadd.f32 0.0, %v2794
        %v2796 = vpop.f32.mrf.mxu0
        %v2797 = vadd.f32 0.0, %v2796
        %2798 = vmatmul.bf16.gmra.mxu0 %v2775
        %v2799 = vpop.f32.mrf.mxu0
        %v2800 = vadd.f32 0.0, %v2799
        %v2801 = vpop.f32.mrf.mxu0
        %v2802 = vadd.f32 0.0, %v2801
        %2803 = vmatmul.bf16.gmra.mxu0 %v2778
        %v2804 = vpop.f32.mrf.mxu0
        %v2805 = vadd.f32 0.0, %v2804
        %v2806 = vpop.f32.mrf.mxu0
        %v2807 = vadd.f32 0.0, %v2806
        %2808 = vdwg.mxu0
        %2817 = vrot.lane.b32.xlu0 %v2304, 8
        %v2818 = vpop.permute.xlu0 %2817
        %2819 = vrot.lane.b32.xlu0 %v2306, 8
        %v2820 = vpop.permute.xlu0 %2819
        %2821 = vrot.lane.b32.xlu0 %v2309, 8
        %v2822 = vpop.permute.xlu0 %2821
        %2823 = vrot.lane.b32.xlu0 %v2311, 8
        %v2824 = vpop.permute.xlu0 %2823
        %2825 = vrot.lane.b32.xlu0 %v2314, 8
        %v2826 = vpop.permute.xlu0 %2825
        %2827 = vrot.lane.b32.xlu0 %v2316, 8
        %v2828 = vpop.permute.xlu0 %2827
        %2829 = vrot.lane.b32.xlu0 %v2319, 8
        %v2830 = vpop.permute.xlu0 %2829
        %2831 = vrot.lane.b32.xlu0 %v2321, 8
        %v2832 = vpop.permute.xlu0 %2831
        %2849 = vrot.lane.b32.xlu0 %v2547, 16
        %v2850 = vpop.permute.xlu0 %2849
        %2851 = vrot.lane.b32.xlu0 %v2549, 16
        %v2852 = vpop.permute.xlu0 %2851
        %2853 = vrot.lane.b32.xlu0 %v2552, 16
        %v2854 = vpop.permute.xlu0 %2853
        %2855 = vrot.lane.b32.xlu0 %v2554, 16
        %v2856 = vpop.permute.xlu0 %2855
        %2857 = vrot.lane.b32.xlu0 %v2557, 16
        %v2858 = vpop.permute.xlu0 %2857
        %2859 = vrot.lane.b32.xlu0 %v2559, 16
        %v2860 = vpop.permute.xlu0 %2859
        %2861 = vrot.lane.b32.xlu0 %v2562, 16
        %v2862 = vpop.permute.xlu0 %2861
        %2863 = vrot.lane.b32.xlu0 %v2564, 16
        %v2864 = vpop.permute.xlu0 %2863
        %2881 = vrot.lane.b32.xlu0 %v2790, 24
        %v2882 = vpop.permute.xlu0 %2881
        %2883 = vrot.lane.b32.xlu0 %v2792, 24
        %v2884 = vpop.permute.xlu0 %2883
        %2885 = vrot.lane.b32.xlu0 %v2795, 24
        %v2886 = vpop.permute.xlu0 %2885
        %2887 = vrot.lane.b32.xlu0 %v2797, 24
        %v2888 = vpop.permute.xlu0 %2887
        %2889 = vrot.lane.b32.xlu0 %v2800, 24
        %v2890 = vpop.permute.xlu0 %2889
        %2891 = vrot.lane.b32.xlu0 %v2802, 24
        %v2892 = vpop.permute.xlu0 %2891
        %2893 = vrot.lane.b32.xlu0 %v2805, 24
        %v2894 = vpop.permute.xlu0 %2893
        %2895 = vrot.lane.b32.xlu0 %v2807, 24
        %v2896 = vpop.permute.xlu0 %2895
        %v2905 = vsel %vm603, %v2061, %v2818
        %v2906 = vsel %vm603, %v2063, %v2820
        %v2907 = vsel %vm603, %v2066, %v2822
        %v2908 = vsel %vm603, %v2068, %v2824
        %v2909 = vsel %vm603, %v2071, %v2826
        %v2910 = vsel %vm603, %v2073, %v2828
        %v2911 = vsel %vm603, %v2076, %v2830
        %v2912 = vsel %vm603, %v2078, %v2832
        %v2913 = vsel %vm350, %v2905, %v2850
        %v2914 = vsel %vm350, %v2906, %v2852
        %v2915 = vsel %vm350, %v2907, %v2854
        %v2916 = vsel %vm350, %v2908, %v2856
        %v2917 = vsel %vm350, %v2909, %v2858
        %v2918 = vsel %vm350, %v2910, %v2860
        %v2919 = vsel %vm350, %v2911, %v2862
        %v2920 = vsel %vm350, %v2912, %v2864
        %v2921 = vsel %vm1816, %v2913, %v2882
        %v2922 = vsel %vm1816, %v2914, %v2884
        %v2923 = vsel %vm1816, %v2915, %v2886
        %v2924 = vsel %vm1816, %v2916, %v2888
        %v2925 = vsel %vm1816, %v2917, %v2890
        %v2926 = vsel %vm1816, %v2918, %v2892
        %v2927 = vsel %vm1816, %v2919, %v2894
        %v2928 = vsel %vm1816, %v2920, %v2896
        %v2929 = vperm.slane %v299, 0
        %v2930 = vadd.f32 %v1817, %v2929
        %v2931 = vadd.f32 %v1818, %v2929
        %v2932 = vadd.f32 %v1819, %v2929
        %v2933 = vadd.f32 %v1820, %v2929
        %v2934 = vadd.f32 %v1821, %v2929
        %v2935 = vadd.f32 %v1822, %v2929
        %v2936 = vadd.f32 %v1823, %v2929
        %v2937 = vadd.f32 %v1824, %v2929
        %v2938 = vadd.f32 %v2921, %v2929
        %v2939 = vadd.f32 %v2922, %v2929
        %v2940 = vadd.f32 %v2923, %v2929
        %v2941 = vadd.f32 %v2924, %v2929
        %v2942 = vadd.f32 %v2925, %v2929
        %v2943 = vadd.f32 %v2926, %v2929
        %v2944 = vadd.f32 %v2927, %v2929
        %v2945 = vadd.f32 %v2928, %v2929
        %v2946 = vmax.f32 %v2930, 0.0
        %v2947 = vmax.f32 %v2931, 0.0
        %v2948 = vmax.f32 %v2932, 0.0
        %v2949 = vmax.f32 %v2933, 0.0
        %v2950 = vmax.f32 %v2934, 0.0
        %v2951 = vmax.f32 %v2935, 0.0
        %v2952 = vmax.f32 %v2936, 0.0
        %v2953 = vmax.f32 %v2937, 0.0
        %v2954 = vmax.f32 %v2938, 0.0
        %v2955 = vmax.f32 %v2939, 0.0
        %v2956 = vmax.f32 %v2940, 0.0
        %v2957 = vmax.f32 %v2941, 0.0
        %v2958 = vmax.f32 %v2942, 0.0
        %v2959 = vmax.f32 %v2943, 0.0
        %v2960 = vmax.f32 %v2944, 0.0
        %v2961 = vmax.f32 %v2945, 0.0
        %v2962 = vpack.c.bf16 %v2947, %v2946
        %v2963 = vpack.c.bf16 %v2949, %v2948
        %v2964 = vpack.c.bf16 %v2951, %v2950
        %v2965 = vpack.c.bf16 %v2953, %v2952
        %v2966 = vpack.c.bf16 %v2955, %v2954
        %v2967 = vpack.c.bf16 %v2957, %v2956
        %v2968 = vpack.c.bf16 %v2959, %v2958
        %v2969 = vpack.c.bf16 %v2961, %v2960
        %v2970 = vld [vmem:[%s4] sm:$0xf]
        %v2971 = vld [vmem:[%s4 + $0x4] sm:$0xf]
        %v2972 = vld [vmem:[%s4 + $0x8] sm:$0xf]
        %v2973 = vld [vmem:[%s4 + $0xc] sm:$0xf]
        %v2974 = vld [vmem:[%s5] sm:$0xf]
        %v2975 = vld [vmem:[%s5 + $0x4] sm:$0xf]
        %v2978 = vunpack.c.l.b16 %v2974
        %v2979 = vunpack.c.l.b16 %v2975
        %v2980 = vpack.c.b16 %v2979, %v2978
        %2982 = vmatpush.bf16.msra.mxu0 0
        %2983 = vmatpush.bf16.msra.mxu0 0
        %2984 = vmatpush.bf16.msra.mxu0 0
        %2985 = vmatpush.bf16.msra.mxu0 0
        %2986 = vmatpush.bf16.msra.mxu0 0
        %2987 = vmatpush.bf16.msra.mxu0 0
        %2988 = vmatpush.bf16.msra.mxu0 0
        %2989 = vmatpush.bf16.msra.mxu0 %v2980
        %2990 = vmatmul.bf16.gmra.mxu0 %v352
        %v2991 = vpop.f32.mrf.mxu0
        %v2992 = vadd.f32 0.0, %v2991
        %v2993 = vpop.f32.mrf.mxu0
        %v2994 = vadd.f32 0.0, %v2993
        %2995 = vmatmul.bf16.gmra.mxu0 %v355
        %v2996 = vpop.f32.mrf.mxu0
        %v2997 = vadd.f32 0.0, %v2996
        %v2998 = vpop.f32.mrf.mxu0
        %v2999 = vadd.f32 0.0, %v2998
        %3000 = vmatmul.bf16.gmra.mxu0 %v358
        %v3001 = vpop.f32.mrf.mxu0
        %v3002 = vadd.f32 0.0, %v3001
        %v3003 = vpop.f32.mrf.mxu0
        %v3004 = vadd.f32 0.0, %v3003
        %3005 = vmatmul.bf16.gmra.mxu0 %v361
        %v3006 = vpop.f32.mrf.mxu0
        %v3007 = vadd.f32 0.0, %v3006
        %v3008 = vpop.f32.mrf.mxu0
        %v3009 = vadd.f32 0.0, %v3008
        %3010 = vmatmul.bf16.gmra.mxu0 %v364
        %v3011 = vpop.f32.mrf.mxu0
        %v3012 = vadd.f32 0.0, %v3011
        %v3013 = vpop.f32.mrf.mxu0
        %v3014 = vadd.f32 0.0, %v3013
        %3015 = vmatmul.bf16.gmra.mxu0 %v367
        %v3016 = vpop.f32.mrf.mxu0
        %v3017 = vadd.f32 0.0, %v3016
        %v3018 = vpop.f32.mrf.mxu0
        %v3019 = vadd.f32 0.0, %v3018
        %3020 = vmatmul.bf16.gmra.mxu0 %v370
        %v3021 = vpop.f32.mrf.mxu0
        %v3022 = vadd.f32 0.0, %v3021
        %v3023 = vpop.f32.mrf.mxu0
        %v3024 = vadd.f32 0.0, %v3023
        %3025 = vmatmul.bf16.gmra.mxu0 %v373
        %v3026 = vpop.f32.mrf.mxu0
        %v3027 = vadd.f32 0.0, %v3026
        %v3028 = vpop.f32.mrf.mxu0
        %v3029 = vadd.f32 0.0, %v3028
        %3030 = vdwg.mxu0
        %v3035 = vunpack.c.l.b16 %v2970
        %v3036 = vunpack.c.l.b16 %v2971
        %v3037 = vunpack.c.l.b16 %v2972
        %v3038 = vunpack.c.l.b16 %v2973
        %v3039 = vpack.c.b16 %v3036, %v3035
        %v3040 = vpack.c.b16 %v3038, %v3037
        %v3044 = vsel %vm465, %v2962, 0
        %v3047 = vsel %vm465, %v2963, 0
        %v3050 = vsel %vm465, %v2964, 0
        %v3053 = vsel %vm465, %v2965, 0
        %v3056 = vsel %vm465, %v2966, 0
        %v3059 = vsel %vm465, %v2967, 0
        %v3062 = vsel %vm465, %v2968, 0
        %v3065 = vsel %vm465, %v2969, 0
        %3067 = vmatpush.bf16.msra.mxu0 0
        %3068 = vmatpush.bf16.msra.mxu0 0
        %3069 = vmatpush.bf16.msra.mxu0 0
        %3070 = vmatpush.bf16.msra.mxu0 0
        %3071 = vmatpush.bf16.msra.mxu0 0
        %3072 = vmatpush.bf16.msra.mxu0 0
        %3073 = vmatpush.bf16.msra.mxu0 %v3040
        %3074 = vmatpush.bf16.msra.mxu0 %v3039
        %3075 = vmatmul.bf16.gmra.mxu0 %v3044
        %v3076 = vpop.f32.mrf.mxu0
        %v3077 = vadd.f32 %v2992, %v3076
        %v3078 = vpop.f32.mrf.mxu0
        %v3079 = vadd.f32 %v2994, %v3078
        %3080 = vmatmul.bf16.gmra.mxu0 %v3047
        %v3081 = vpop.f32.mrf.mxu0
        %v3082 = vadd.f32 %v2997, %v3081
        %v3083 = vpop.f32.mrf.mxu0
        %v3084 = vadd.f32 %v2999, %v3083
        %3085 = vmatmul.bf16.gmra.mxu0 %v3050
        %v3086 = vpop.f32.mrf.mxu0
        %v3087 = vadd.f32 %v3002, %v3086
        %v3088 = vpop.f32.mrf.mxu0
        %v3089 = vadd.f32 %v3004, %v3088
        %3090 = vmatmul.bf16.gmra.mxu0 %v3053
        %v3091 = vpop.f32.mrf.mxu0
        %v3092 = vadd.f32 %v3007, %v3091
        %v3093 = vpop.f32.mrf.mxu0
        %v3094 = vadd.f32 %v3009, %v3093
        %3095 = vmatmul.bf16.gmra.mxu0 %v3056
        %v3096 = vpop.f32.mrf.mxu0
        %v3097 = vadd.f32 %v3012, %v3096
        %v3098 = vpop.f32.mrf.mxu0
        %v3099 = vadd.f32 %v3014, %v3098
        %3100 = vmatmul.bf16.gmra.mxu0 %v3059
        %v3101 = vpop.f32.mrf.mxu0
        %v3102 = vadd.f32 %v3017, %v3101
        %v3103 = vpop.f32.mrf.mxu0
        %v3104 = vadd.f32 %v3019, %v3103
        %3105 = vmatmul.bf16.gmra.mxu0 %v3062
        %v3106 = vpop.f32.mrf.mxu0
        %v3107 = vadd.f32 %v3022, %v3106
        %v3108 = vpop.f32.mrf.mxu0
        %v3109 = vadd.f32 %v3024, %v3108
        %3110 = vmatmul.bf16.gmra.mxu0 %v3065
        %v3111 = vpop.f32.mrf.mxu0
        %v3112 = vadd.f32 %v3027, %v3111
        %v3113 = vpop.f32.mrf.mxu0
        %v3114 = vadd.f32 %v3029, %v3113
        %3115 = vdwg.mxu0
        %v3116 = vperm.slane %v300, 0
        %v3117 = vadd.f32 %v3077, %v3116
        %v3118 = vadd.f32 %v3079, %v3116
        %v3119 = vadd.f32 %v3082, %v3116
        %v3120 = vadd.f32 %v3084, %v3116
        %v3121 = vadd.f32 %v3087, %v3116
        %v3122 = vadd.f32 %v3089, %v3116
        %v3123 = vadd.f32 %v3092, %v3116
        %v3124 = vadd.f32 %v3094, %v3116
        %v3125 = vadd.f32 %v3097, %v3116
        %v3126 = vadd.f32 %v3099, %v3116
        %v3127 = vadd.f32 %v3102, %v3116
        %v3128 = vadd.f32 %v3104, %v3116
        %v3129 = vadd.f32 %v3107, %v3116
        %v3130 = vadd.f32 %v3109, %v3116
        %v3131 = vadd.f32 %v3112, %v3116
        %v3132 = vadd.f32 %v3114, %v3116
        %v3133 = vmax.f32 %v3117, 0.0
        %v3134 = vmax.f32 %v3118, 0.0
        %v3135 = vmax.f32 %v3119, 0.0
        %v3136 = vmax.f32 %v3120, 0.0
        %v3137 = vmax.f32 %v3121, 0.0
        %v3138 = vmax.f32 %v3122, 0.0
        %v3139 = vmax.f32 %v3123, 0.0
        %v3140 = vmax.f32 %v3124, 0.0
        %v3141 = vmax.f32 %v3125, 0.0
        %v3142 = vmax.f32 %v3126, 0.0
        %v3143 = vmax.f32 %v3127, 0.0
        %v3144 = vmax.f32 %v3128, 0.0
        %v3145 = vmax.f32 %v3129, 0.0
        %v3146 = vmax.f32 %v3130, 0.0
        %v3147 = vmax.f32 %v3131, 0.0
        %v3148 = vmax.f32 %v3132, 0.0
        %v3149 = vpack.c.bf16 %v3133, %v3133
        %v3150 = vpack.c.bf16 %v3134, %v3134
        %v3151 = vpack.c.bf16 %v3135, %v3135
        %v3152 = vpack.c.bf16 %v3136, %v3136
        %v3153 = vpack.c.bf16 %v3137, %v3137
        %v3154 = vpack.c.bf16 %v3138, %v3138
        %v3155 = vpack.c.bf16 %v3139, %v3139
        %v3156 = vpack.c.bf16 %v3140, %v3140
        %v3157 = vpack.c.bf16 %v3141, %v3141
        %v3158 = vpack.c.bf16 %v3142, %v3142
        %v3159 = vpack.c.bf16 %v3143, %v3143
        %v3160 = vpack.c.bf16 %v3144, %v3144
        %v3161 = vpack.c.bf16 %v3145, %v3145
        %v3162 = vpack.c.bf16 %v3146, %v3146
        %v3163 = vpack.c.bf16 %v3147, %v3147
        %v3164 = vpack.c.bf16 %v3148, %v3148
        %3165 = vst [vmem:[%s272] sm:$0xf] %v3149
        %3166 = vst [vmem:[%s272 + $0x4] sm:$0xf] %v3150
        %3167 = vst [vmem:[%s272 + $0x8] sm:$0xf] %v3151
        %3168 = vst [vmem:[%s272 + $0xc] sm:$0xf] %v3152
        %3169 = vst [vmem:[%s272 + $0x10] sm:$0xf] %v3153
        %3170 = vst [vmem:[%s272 + $0x14] sm:$0xf] %v3154
        %3171 = vst [vmem:[%s272 + $0x18] sm:$0xf] %v3155
        %3172 = vst [vmem:[%s272 + $0x1c] sm:$0xf] %v3156
        %3173 = vst [vmem:[%s272 + $0x20] sm:$0xf] %v3157
        %3174 = vst [vmem:[%s272 + $0x24] sm:$0xf] %v3158
        %3175 = vst [vmem:[%s272 + $0x28] sm:$0xf] %v3159
        %3176 = vst [vmem:[%s272 + $0x2c] sm:$0xf] %v3160
        %3177 = vst [vmem:[%s272 + $0x30] sm:$0xf] %v3161
        %3178 = vst [vmem:[%s272 + $0x34] sm:$0xf] %v3162
        %3179 = vst [vmem:[%s272 + $0x38] sm:$0xf] %v3163
        %3180 = vst [vmem:[%s272 + $0x3c] sm:$0xf] %v3164
        %s3181 = sand.u32 %s181, 1
        %s3182 = scalar_lea.sflag [#allocation3], %s3181
        %s3183 = sand.u32 %s181, 1
        %s3184 = smul.addr %s3183, 64
        %s3185 = scalar_lea.vmem [#allocation2], %s3184
        // Predicated region
        $region49: #{tpu_custom_call.1} parent=47 // pred_check
          %p3186 = pneg %p191
        $region50: #{tpu_custom_call.1} parent=47 // pred_check_branch
          %3188 = sbr.rel (%p3186) target = $region52
        $region51: #{tpu_custom_call.1} parent=47 // pred_region
          %s3189 = smul.u32 16, %s21
          %3191 = vsyncadd %s3182, 0
          %s3192 = smul.addr %s3189, 4
          %s3193 = scalar_lea.hbm %s7, %s3192
          %s3194 = sshll.u32 %s3185, 4
          %s3195 = int_to_ptr.vmem [resolvable:$true] %s3194
          %s3196 = sshll.u32 %s3193, 4
          %s3197 = int_to_ptr.hbm [resolvable:$true] %s3196
          %3202 = dma.vmem_to_hbm [thread:$0]  %s3195, 1024, %s3197, %s3182, 64, 64, 4
        $region52: #{tpu_custom_call.1} parent=47 // pred_fallthru
          _
      $region48: #{tpu_custom_call.1} parent=5 // pred_fallthru
        _
      %p3203 = scmp.le.s32.totalorder 2, %s16
      // Predicated region
      $region53: #{tpu_custom_call.1} parent=5 // pred_check
        %p3204 = pneg %p3203
      $region54: #{tpu_custom_call.1} parent=5 // pred_check_branch
        %3206 = sbr.rel (%p3204) target = $region56
      $region55: #{tpu_custom_call.1} parent=5 // pred_region
        %s3207 = ssub.s32 %s16, 2
        // Predicated region
        $region57: #{tpu_custom_call.1} parent=55 // pred_check
          %p3208 = pneg %p197
        $region58: #{tpu_custom_call.1} parent=55 // pred_check_branch
          %3210 = sbr.rel (%p3208) target = $region60
        $region59: #{tpu_custom_call.1} parent=55 // pred_region
          %s3211 = sand.u32 %s182, 1
          %s3212 = scalar_lea.sflag [#allocation3], %s3211
          %s3213 = sand.u32 %s182, 1
          %s3214 = smul.addr %s3213, 64
          %s3215 = scalar_lea.vmem [#allocation2], %s3214
          %3217 = dma.done %s3212, 1024
        $region60: #{tpu_custom_call.1} parent=55 // pred_fallthru
          _
      $region56: #{tpu_custom_call.1} parent=5 // pred_fallthru
        _
    $region6: #{tpu_custom_call.1} parent=1 // loop_footer
      %s20 = sadd.s32 1, %s16
    $region7: #{tpu_custom_call.1} parent=1 // loop_footer_branch
      %15 = sbr.rel target = $region3
    $region8: #{tpu_custom_call.1} parent=1 // loop_exit
      _
    %3218 = vsyncpa [#allocation3], 1
    %s3219 = scalar_lea.sflag [#allocation3], 1
    %3220 = vsyncpa %s3219, 1

</llo_original>
